<compile_context>
chip_gen: v7x
topology: tpu7x:2x2x1
jax: 0.10.0
libtpu: 0.0.40
codegen_flags: <defaults>
</compile_context>

<pallas_src>
import numpy as np
import jax
import jax.numpy as jnp
from jax.experimental import pallas as pl
from jax.experimental.pallas import tpu as pltpu  # noqa: F401  (TPU backend)

BN_EPS = 1e-5
LANES = 128
_HI = jax.lax.Precision.HIGHEST


def _rup(n, m=8):
    return ((n + m - 1) // m) * m


# ----------------------------------------------------------------------------
# Static slab layout (pure function of (B, D) so wrapper & repack agree)
# ----------------------------------------------------------------------------
def _layout(B, D):
    lay = {}
    o = 0
    lay["w1"] = o;  o += _rup(D)                       # Linear1 weight [D,128]
    lay["m1"] = o;  o += 3 * LANES                     # deconv1 tap-stacked M
    lay["m2"] = o;  o += 4 * LANES                     # deconv2 tap-stacked M
    lay["m3"] = o;  o += 4 * LANES                     # final  tap-stacked M
    lay["r1"] = o;  lay["r1s"] = _rup(7 * B);   o += 3 * lay["r1s"]
    lay["r2"] = o;  lay["r2s"] = _rup(14 * B);  o += 4 * lay["r2s"]
    lay["r3"] = o;  lay["r3s"] = _rup(28 * B);  o += 4 * lay["r3s"]
    lay["wb_rows"] = _rup(o)
    # f32 constants slab: rows 0..7 = b1 / bn1(3) / bn2(3) / b3, then b2 block,
    # then the two per-channel-average matrices (each 128x128).
    lay["b2blk"] = 8
    lay["bavg1"] = 8 + _rup(4 * B)
    lay["bavg2"] = lay["bavg1"] + LANES
    lay["cst_rows"] = lay["bavg2"] + LANES
    return lay


# ----------------------------------------------------------------------------
# Fused decoder kernel (single grid point, everything resident in VMEM)
# ----------------------------------------------------------------------------
def _make_kernel(B, D, lay):
    H7, H14, H28 = 7 * B, 14 * B, 28 * B

    def kernel(x_ref, cst_ref, w2_ref, wb_ref, o_ref):
        b1 = cst_ref[0:1, :]
        bn1 = (cst_ref[1:2, :], cst_ref[2:3, :], cst_ref[3:4, :])   # bias, gamma, beta
        bn2 = (cst_ref[4:5, :], cst_ref[5:6, :], cst_ref[6:7, :])
        b3 = cst_ref[7:8, 0:28]
        b2_blk = cst_ref[lay["b2blk"]:lay["b2blk"] + 4 * B, :]
        bavg1 = cst_ref[lay["bavg1"]:lay["bavg1"] + LANES, :]
        bavg2 = cst_ref[lay["bavg2"]:lay["bavg2"] + LANES, :]

        # ---- decoder_lin: Linear(D,128)+ReLU, Linear(128,256)+ReLU --------
        xb = x_ref[...].astype(jnp.bfloat16)
        w1 = wb_ref[lay["w1"]:lay["w1"] + D, :]
        h1 = jnp.maximum(
            jnp.dot(xb, w1, preferred_element_type=jnp.float32) + b1, 0.0)
        ys = jnp.dot(h1.astype(jnp.bfloat16), w2_ref[...],
                     preferred_element_type=jnp.float32)             # [B, 4*128]
        # Unflatten folded into the layout: the four 128-lane h-blocks become
        # sublane blocks -> rows ordered (h, b), lanes (c_in, w).
        y_blk = jnp.concatenate(
            [ys[:, h * LANES:(h + 1) * LANES] for h in range(4)], axis=0)
        y_blk = jnp.maximum(y_blk + b2_blk, 0.0).astype(jnp.bfloat16)  # [4B,128]

        def deconv(act_b, r_off, r_stride, k, rows_out, cols_in, m_off):
            # sum_i (R_i @ act) @ M_i  ==  [R_0@act | .. ] @ [M_0; ..]  (1 big dot)
            zs = [jnp.dot(wb_ref[r_off + i * r_stride:
                                 r_off + i * r_stride + rows_out, 0:cols_in],
                          act_b, preferred_element_type=jnp.float32)
                  for i in range(k)]
            z = jnp.concatenate(zs, axis=-1).astype(jnp.bfloat16)    # [rows, k*128]
            m = wb_ref[m_off:m_off + k * LANES, :]                    # [k*128, 128]
            return jnp.dot(z, m, preferred_element_type=jnp.float32)

        def bn_relu(pre, bn, bavg):
            # Training-mode BN over (b,h,w) per channel; the per-channel
            # reduce+broadcast over the (c,w) lane layout is one small f32 dot.
            bias, gamma, beta = bn
            y = pre + bias
            s = jnp.sum(y, axis=0, keepdims=True)
            sq = jnp.sum(y * y, axis=0, keepdims=True)
            red = jnp.dot(jnp.concatenate([s, sq], axis=0), bavg,
                          preferred_element_type=jnp.float32, precision=_HI)
            mean = red[0:1, :]
            var = red[1:2, :] - mean * mean     # single-pass var; OK at O(1) scale
            inv = jax.lax.rsqrt(var + BN_EPS)
            return jnp.maximum((y - mean) * (inv * gamma) + beta, 0.0)

        # ---- upconv1: ConvT(16,16,3,s2,p1)+BN+ReLU   4x4 -> 7x7 ------------
        pre1 = deconv(y_blk, lay["r1"], lay["r1s"], 3, H7, 4 * B, lay["m1"])
        a2 = bn_relu(pre1, bn1, bavg1).astype(jnp.bfloat16)           # [B*7, 128]
        # ---- upconv2: ConvT(16,8,4,s2,p1)+BN+ReLU    7x7 -> 14x14 ----------
        pre2 = deconv(a2, lay["r2"], lay["r2s"], 4, H14, H7, lay["m2"])
        a3 = bn_relu(pre2, bn2, bavg2).astype(jnp.bfloat16)           # [B*14, 128]
        # ---- final_conv: ConvT(8,1,4,s2,p1)          14x14 -> 28x28 --------
        out = deconv(a3, lay["r3"], lay["r3s"], 4, H28, H14, lay["m3"])
        o_ref[...] = out[:, 0:28] + b3                                # [B*28, 28]

    return kernel


# ----------------------------------------------------------------------------
# Offline (one-time) repack of PyTorch-layout weights into 3 packed slabs
# ----------------------------------------------------------------------------
def _make_m_stack(w_ct, win, wout):
    # M_i[(ci*win+w), (co*wout+ow)] = sum_j W[ci,co,i,j] * [ow == 2*w - 1 + j];
    # each tap block zero-padded to a 128x128 tile and stacked along rows.
    w = np.asarray(w_ct, np.float32)                    # [Cin, Cout, kh, kw]
    cin, cout, kh, kw = w.shape
    c = np.zeros((kw, win, wout), np.float32)
    for j in range(kw):
        for wi in range(win):
            ow = 2 * wi - 1 + j
            if 0 <= ow < wout:
                c[j, wi, ow] = 1.0
    m = np.einsum("cdij,jwo->icwdo", w, c).reshape(kh, cin * win, cout * wout)
    out = np.zeros((kh, LANES, LANES), np.float32)
    out[:, :cin * win, :cout * wout] = m
    return out.reshape(kh * LANES, LANES)


def _make_r_stack(B, hin, hout, k, stride_rows, h_major_cols=False):
    # R_i[(b*hout+oh), col] = [oh == 2*h - 1 + i], block-diagonal over batch;
    # col = h*B + b (first deconv, rows ordered (h,b)) or b*hin + h otherwise.
    r = np.zeros((k, stride_rows, LANES), np.float32)
    for i in range(k):
        for h in range(hin):
            oh = 2 * h - 1 + i
            if 0 <= oh < hout:
                for b in range(B):
                    col = h * B + b if h_major_cols else b * hin + h
                    r[i, b * hout + oh, col] = 1.0
    return r.reshape(k * stride_rows, LANES)


def _make_bavg(cout, wout, n):
    # Per-channel mean over the (c,w) lane layout, with 1/N folded in.
    m = np.zeros((LANES, LANES), np.float32)
    for ch in range(cout):
        s = slice(ch * wout, (ch + 1) * wout)
        m[s, s] = 1.0 / n
    return m


def prepare_decoder_params(p, batch):
    B = batch
    D = int(np.asarray(p["lin1_w"]).shape[1])
    lay = _layout(B, D)

    # ---- cst: f32 [cst_rows, 128] (biases, BN params, bavg matrices) -------
    cst = np.zeros((lay["cst_rows"], LANES), np.float32)
    rep = lambda v, w: np.repeat(np.asarray(v, np.float32), w)
    cst[0, :128] = np.asarray(p["lin1_b"], np.float32)
    cst[1, :112] = rep(p["ct1_b"], 7)
    cst[2, :112] = rep(p["bn1_g"], 7)
    cst[3, :112] = rep(p["bn1_b"], 7)
    cst[4, :112] = rep(p["ct2_b"], 14)
    cst[5, :112] = rep(p["bn2_g"], 14)
    cst[6, :112] = rep(p["bn2_b"], 14)
    cst[7, :28] = float(np.asarray(p["ct3_b"]).reshape(-1)[0])
    b2 = np.asarray(p["lin2_b"], np.float32).reshape(16, 4, 4)      # [ci,h,w]
    b2_blk = np.transpose(b2, (1, 0, 2)).reshape(4, 64)             # [h,(ci,w)]
    cst[lay["b2blk"]:lay["b2blk"] + 4 * B, :64] = np.repeat(b2_blk, B, axis=0)
    cst[lay["bavg1"]:lay["bavg1"] + LANES] = _make_bavg(16, 7, B * 7 * 7)
    cst[lay["bavg2"]:lay["bavg2"] + LANES] = _make_bavg(8, 14, B * 14 * 14)

    # ---- w2: bf16 [128, 512]  (Linear2 weight, per-h 64->128-lane padded) --
    w2 = np.asarray(p["lin2_w"], np.float32).reshape(16, 4, 4, 128)  # [ci,h,w,k]
    w2p = np.zeros((128, 4, LANES), np.float32)
    w2p[:, :, :64] = np.transpose(w2, (3, 1, 0, 2)).reshape(128, 4, 64)
    w2p = w2p.reshape(128, 4 * LANES)

    # ---- wb: bf16 [wb_rows, 128]  (Linear1 W, stacked M's, stacked R's) ----
    wb = np.zeros((lay["wb_rows"], LANES), np.float32)
    wb[lay["w1"]:lay["w1"] + D] = np.asarray(p["lin1_w"], np.float32).T
    wb[lay["m1"]:lay["m1"] + 3 * LANES] = _make_m_stack(p["ct1_w"], 4, 7)
    wb[lay["m2"]:lay["m2"] + 4 * LANES] = _make_m_stack(p["ct2_w"], 7, 14)
    wb[lay["m3"]:lay["m3"] + 4 * LANES] = _make_m_stack(p["ct3_w"], 14, 28)
    wb[lay["r1"]:lay["r1"] + 3 * lay["r1s"]] = _make_r_stack(
        B, 4, 7, 3, lay["r1s"], h_major_cols=True)
    wb[lay["r2"]:lay["r2"] + 4 * lay["r2s"]] = _make_r_stack(B, 7, 14, 4, lay["r2s"])
    wb[lay["r3"]:lay["r3"] + 4 * lay["r3s"]] = _make_r_stack(B, 14, 28, 4, lay["r3s"])

    return {"cst": jnp.asarray(cst),
            "w2": jnp.asarray(w2p, jnp.bfloat16),
            "wb": jnp.asarray(wb, jnp.bfloat16)}


# ----------------------------------------------------------------------------
# Single fused pallas_call wrapper (the whole forward pass)
# ----------------------------------------------------------------------------
def decoder_forward(x, pp):
    B, D = x.shape
    lay = _layout(B, D)
    out2d = pl.pallas_call(
        _make_kernel(B, D, lay),
        out_shape=jax.ShapeDtypeStruct((28 * B, 28), jnp.float32),
    )(x, pp["cst"], pp["w2"], pp["wb"])
    return out2d.reshape(B, 1, 28, 28)


# ----------------------------------------------------------------------------
# Pure-JAX reference (directly encodes the PyTorch ConvTranspose2d/BN formulas)
# ----------------------------------------------------------------------------
def _conv_transpose_ref(x, w, b, stride, pad):
    bn_, cin, hin, win = x.shape
    _, cout, kh, kw = w.shape
    hout = (hin - 1) * stride - 2 * pad + kh
    wout = (win - 1) * stride - 2 * pad + kw
    out = jnp.zeros((bn_, cout, hout, wout), jnp.float32)
    for i in range(kh):
        h_lo = max(0, -((i - pad) // stride))
        h_hi = min(hin - 1, (hout - 1 + pad - i) // stride)
        if h_lo > h_hi:
            continue
        for j in range(kw):
            w_lo = max(0, -((j - pad) // stride))
            w_hi = min(win - 1, (wout - 1 + pad - j) // stride)
            if w_lo > w_hi:
                continue
            t = jnp.einsum("bchw,cd->bdhw", x, w[:, :, i, j], precision=_HI)
            oh0 = h_lo * stride - pad + i
            ow0 = w_lo * stride - pad + j
            out = out.at[:, :,
                         oh0:oh0 + (h_hi - h_lo) * stride + 1:stride,
                         ow0:ow0 + (w_hi - w_lo) * stride + 1:stride].add(
                t[:, :, h_lo:h_hi + 1, w_lo:w_hi + 1])
    return out + b.reshape(1, cout, 1, 1)


def _bn_ref(y, gamma, beta):
    mean = jnp.mean(y, axis=(0, 2, 3), keepdims=True)
    var = jnp.mean((y - mean) ** 2, axis=(0, 2, 3), keepdims=True)
    return ((y - mean) / jnp.sqrt(var + BN_EPS) * gamma.reshape(1, -1, 1, 1)
            + beta.reshape(1, -1, 1, 1))


def _reference_forward(x, p):
    relu = lambda v: jnp.maximum(v, 0.0)
    h = relu(jnp.dot(x, p["lin1_w"].T, precision=_HI) + p["lin1_b"])
    h = relu(jnp.dot(h, p["lin2_w"].T, precision=_HI) + p["lin2_b"])
    y = h.reshape(x.shape[0], 16, 4, 4)
    y = relu(_bn_ref(_conv_transpose_ref(y, p["ct1_w"], p["ct1_b"], 2, 1),
                     p["bn1_g"], p["bn1_b"]))
    y = relu(_bn_ref(_conv_transpose_ref(y, p["ct2_w"], p["ct2_b"], 2, 1),
                     p["bn2_g"], p["bn2_b"]))
    return _conv_transpose_ref(y, p["ct3_w"], p["ct3_b"], 2, 1)


# ----------------------------------------------------------------------------
# Deterministic parameters (PyTorch-equivalent shapes)
# ----------------------------------------------------------------------------
def make_params(encoded_space_dim, key):
    ks = jax.random.split(key, 14)
    n = lambda k, shape, s: s * jax.random.normal(k, shape, jnp.float32)
    return {
        "lin1_w": n(ks[0], (128, encoded_space_dim), 0.2),   # Linear(D,128)
        "lin1_b": n(ks[1], (128,), 0.05),
        "lin2_w": n(ks[2], (16 * 4 * 4, 128), 0.08),         # Linear(128,256)
        "lin2_b": n(ks[3], (16 * 4 * 4,), 0.05),
        "ct1_w": n(ks[4], (16, 16, 3, 3), 0.15),             # ConvT(16,16,3)
        "ct1_b": n(ks[5], (16,), 0.05),
        "bn1_g": 1.0 + n(ks[6], (16,), 0.1),
        "bn1_b": n(ks[7], (16,), 0.1),
        "ct2_w": n(ks[8], (16, 8, 4, 4), 0.15),              # ConvT(16,8,4)
        "ct2_b": n(ks[9], (8,), 0.05),
        "bn2_g": 1.0 + n(ks[10], (8,), 0.1),
        "bn2_b": n(ks[11], (8,), 0.1),
        "ct3_w": n(ks[12], (8, 1, 4, 4), 0.2),               # ConvT(8,1,4)
        "ct3_b": n(ks[13], (1,), 0.05),
    }


if __name__ == "__main__":
    ENCODED_SPACE_DIM = 16
    BATCH = 2

    key = jax.random.PRNGKey(0)
    k_x, k_p = jax.random.split(key)
    params = make_params(ENCODED_SPACE_DIM, k_p)
    x = jax.random.normal(k_x, (BATCH, ENCODED_SPACE_DIM), jnp.float32)

    pp = prepare_decoder_params(params, BATCH)   # one-time offline repack
    out = jax.block_until_ready(jax.jit(decoder_forward)(x, pp))

    assert out.shape == (BATCH, 1, 28, 28)
    assert bool(jnp.all(jnp.isfinite(out)))

    # Correctness against a direct (PyTorch-formula) f32 HIGHEST-precision
    # reference; 5e-2 tolerance accounts for the bf16 MXU operands.
    ref = _reference_forward(x, params)
    np.testing.assert_allclose(np.asarray(out), np.asarray(ref),
                               rtol=5e-2, atol=5e-2)

    print("KERNEL_OK")
</pallas_src>

<mosaic_0001>
module attributes {stable_mosaic.version = 11 : i64} {
  func.func @kernel(%arg0: memref<2x16xf32, #tpu.memory_space<vmem>>, %arg1: memref<272x128xf32, #tpu.memory_space<vmem>>, %arg2: memref<128x512xbf16, #tpu.memory_space<vmem>>, %arg3: memref<1824x128xbf16, #tpu.memory_space<vmem>>, %arg4: memref<56x28xf32, #tpu.memory_space<vmem>>) attributes {dimension_semantics = [], scalar_prefetch = 0 : i64, scratch_operands = 0 : i64, tpu.core_type = #tpu.core_type<tc>} {
    %c0 = arith.constant 0 : index
    %c0_0 = arith.constant 0 : index
    %0 = vector.load %arg1[%c0, %c0_0] : memref<272x128xf32, #tpu.memory_space<vmem>>, vector<1x128xf32>
    %c1 = arith.constant 1 : index
    %c0_1 = arith.constant 0 : index
    %1 = vector.load %arg1[%c1, %c0_1] : memref<272x128xf32, #tpu.memory_space<vmem>>, vector<1x128xf32>
    %c2 = arith.constant 2 : index
    %c0_2 = arith.constant 0 : index
    %2 = vector.load %arg1[%c2, %c0_2] : memref<272x128xf32, #tpu.memory_space<vmem>>, vector<1x128xf32>
    %c3 = arith.constant 3 : index
    %c0_3 = arith.constant 0 : index
    %3 = vector.load %arg1[%c3, %c0_3] : memref<272x128xf32, #tpu.memory_space<vmem>>, vector<1x128xf32>
    %c4 = arith.constant 4 : index
    %c0_4 = arith.constant 0 : index
    %4 = vector.load %arg1[%c4, %c0_4] : memref<272x128xf32, #tpu.memory_space<vmem>>, vector<1x128xf32>
    %c5 = arith.constant 5 : index
    %c0_5 = arith.constant 0 : index
    %5 = vector.load %arg1[%c5, %c0_5] : memref<272x128xf32, #tpu.memory_space<vmem>>, vector<1x128xf32>
    %c6 = arith.constant 6 : index
    %c0_6 = arith.constant 0 : index
    %6 = vector.load %arg1[%c6, %c0_6] : memref<272x128xf32, #tpu.memory_space<vmem>>, vector<1x128xf32>
    %c7 = arith.constant 7 : index
    %c0_7 = arith.constant 0 : index
    %7 = vector.load %arg1[%c7, %c0_7] : memref<272x128xf32, #tpu.memory_space<vmem>>, vector<1x28xf32>
    %c8 = arith.constant 8 : index
    %c0_8 = arith.constant 0 : index
    %8 = vector.load %arg1[%c8, %c0_8] : memref<272x128xf32, #tpu.memory_space<vmem>>, vector<8x128xf32>
    %c16 = arith.constant 16 : index
    %c0_9 = arith.constant 0 : index
    %9 = vector.load %arg1[%c16, %c0_9] : memref<272x128xf32, #tpu.memory_space<vmem>>, vector<128x128xf32>
    %c144 = arith.constant 144 : index
    %c0_10 = arith.constant 0 : index
    %10 = vector.load %arg1[%c144, %c0_10] : memref<272x128xf32, #tpu.memory_space<vmem>>, vector<128x128xf32>
    %c0_11 = arith.constant 0 : index
    %c0_12 = arith.constant 0 : index
    %11 = vector.load %arg0[%c0_11, %c0_12] : memref<2x16xf32, #tpu.memory_space<vmem>>, vector<2x16xf32>
    %12 = arith.truncf %11 : vector<2x16xf32> to vector<2x16xbf16>
    %c0_13 = arith.constant 0 : index
    %c0_14 = arith.constant 0 : index
    %13 = vector.load %arg3[%c0_13, %c0_14] : memref<1824x128xbf16, #tpu.memory_space<vmem>>, vector<16x128xbf16>
    %cst = arith.constant dense<0.000000e+00> : vector<2x128xf32>
    %14 = tpu.matmul %12, %13, %cst {dimension_numbers = #tpu.dot_dimension_numbers<[1], [0], [0], [1], [0, 0, 1, 1], [], []>} : vector<2x16xbf16>, vector<16x128xbf16>, vector<2x128xf32> -> vector<2x128xf32>
    %15 = vector.broadcast %0 : vector<1x128xf32> to vector<2x128xf32>
    %16 = arith.addf %14, %15 : vector<2x128xf32>
    %cst_15 = arith.constant 0.000000e+00 : f32
    %17 = vector.broadcast %cst_15 : f32 to vector<2x128xf32>
    %18 = arith.maximumf %16, %17 : vector<2x128xf32>
    %19 = arith.truncf %18 : vector<2x128xf32> to vector<2x128xbf16>
    %c0_16 = arith.constant 0 : index
    %c0_17 = arith.constant 0 : index
    %20 = vector.load %arg2[%c0_16, %c0_17] : memref<128x512xbf16, #tpu.memory_space<vmem>>, vector<128x512xbf16>
    %cst_18 = arith.constant dense<0.000000e+00> : vector<2x512xf32>
    %21 = tpu.matmul %19, %20, %cst_18 {dimension_numbers = #tpu.dot_dimension_numbers<[1], [0], [0], [1], [0, 0, 1, 1], [], []>} : vector<2x128xbf16>, vector<128x512xbf16>, vector<2x512xf32> -> vector<2x512xf32>
    %22 = vector.extract_strided_slice %21 {offsets = [0, 0], sizes = [2, 128], strides = [1, 1]} : vector<2x512xf32> to vector<2x128xf32>
    %23 = vector.extract_strided_slice %21 {offsets = [0, 128], sizes = [2, 128], strides = [1, 1]} : vector<2x512xf32> to vector<2x128xf32>
    %24 = vector.extract_strided_slice %21 {offsets = [0, 256], sizes = [2, 128], strides = [1, 1]} : vector<2x512xf32> to vector<2x128xf32>
    %25 = vector.extract_strided_slice %21 {offsets = [0, 384], sizes = [2, 128], strides = [1, 1]} : vector<2x512xf32> to vector<2x128xf32>
    %26 = tpu.concatenate %22, %23, %24, %25 in 0 : vector<2x128xf32>, vector<2x128xf32>, vector<2x128xf32>, vector<2x128xf32> -> vector<8x128xf32>
    %27 = arith.addf %26, %8 : vector<8x128xf32>
    %cst_19 = arith.constant 0.000000e+00 : f32
    %28 = vector.broadcast %cst_19 : f32 to vector<8x128xf32>
    %29 = arith.maximumf %27, %28 : vector<8x128xf32>
    %30 = arith.truncf %29 : vector<8x128xf32> to vector<8x128xbf16>
    %c1424 = arith.constant 1424 : index
    %c0_20 = arith.constant 0 : index
    %31 = vector.load %arg3[%c1424, %c0_20] : memref<1824x128xbf16, #tpu.memory_space<vmem>>, vector<14x8xbf16>
    %cst_21 = arith.constant dense<0.000000e+00> : vector<14x128xf32>
    %32 = tpu.matmul %31, %30, %cst_21 {dimension_numbers = #tpu.dot_dimension_numbers<[1], [0], [0], [1], [0, 0, 1, 1], [], []>} : vector<14x8xbf16>, vector<8x128xbf16>, vector<14x128xf32> -> vector<14x128xf32>
    %c1440 = arith.constant 1440 : index
    %c0_22 = arith.constant 0 : index
    %33 = vector.load %arg3[%c1440, %c0_22] : memref<1824x128xbf16, #tpu.memory_space<vmem>>, vector<14x8xbf16>
    %cst_23 = arith.constant dense<0.000000e+00> : vector<14x128xf32>
    %34 = tpu.matmul %33, %30, %cst_23 {dimension_numbers = #tpu.dot_dimension_numbers<[1], [0], [0], [1], [0, 0, 1, 1], [], []>} : vector<14x8xbf16>, vector<8x128xbf16>, vector<14x128xf32> -> vector<14x128xf32>
    %c1456 = arith.constant 1456 : index
    %c0_24 = arith.constant 0 : index
    %35 = vector.load %arg3[%c1456, %c0_24] : memref<1824x128xbf16, #tpu.memory_space<vmem>>, vector<14x8xbf16>
    %cst_25 = arith.constant dense<0.000000e+00> : vector<14x128xf32>
    %36 = tpu.matmul %35, %30, %cst_25 {dimension_numbers = #tpu.dot_dimension_numbers<[1], [0], [0], [1], [0, 0, 1, 1], [], []>} : vector<14x8xbf16>, vector<8x128xbf16>, vector<14x128xf32> -> vector<14x128xf32>
    %37 = tpu.concatenate %32, %34, %36 in 1 : vector<14x128xf32>, vector<14x128xf32>, vector<14x128xf32> -> vector<14x384xf32>
    %38 = arith.truncf %37 : vector<14x384xf32> to vector<14x384xbf16>
    %c16_26 = arith.constant 16 : index
    %c0_27 = arith.constant 0 : index
    %39 = vector.load %arg3[%c16_26, %c0_27] : memref<1824x128xbf16, #tpu.memory_space<vmem>>, vector<384x128xbf16>
    %cst_28 = arith.constant dense<0.000000e+00> : vector<14x128xf32>
    %40 = tpu.matmul %38, %39, %cst_28 {dimension_numbers = #tpu.dot_dimension_numbers<[1], [0], [0], [1], [0, 0, 1, 1], [], []>} : vector<14x384xbf16>, vector<384x128xbf16>, vector<14x128xf32> -> vector<14x128xf32>
    %41 = vector.broadcast %1 : vector<1x128xf32> to vector<14x128xf32>
    %42 = arith.addf %40, %41 : vector<14x128xf32>
    %cst_29 = arith.constant dense<0.000000e+00> : vector<128xf32>
    %43 = vector.multi_reduction <add>, %42, %cst_29 [0] : vector<14x128xf32> to vector<128xf32>
    %44 = vector.shape_cast %43 : vector<128xf32> to vector<1x128xf32>
    %45 = arith.mulf %42, %42 : vector<14x128xf32>
    %cst_30 = arith.constant dense<0.000000e+00> : vector<128xf32>
    %46 = vector.multi_reduction <add>, %45, %cst_30 [0] : vector<14x128xf32> to vector<128xf32>
    %47 = vector.shape_cast %46 : vector<128xf32> to vector<1x128xf32>
    %48 = tpu.concatenate %44, %47 in 0 : vector<1x128xf32>, vector<1x128xf32> -> vector<2x128xf32>
    %cst_31 = arith.constant dense<0.000000e+00> : vector<2x128xf32>
    %49 = tpu.matmul %48, %9, %cst_31 {dimension_numbers = #tpu.dot_dimension_numbers<[1], [0], [0], [1], [0, 0, 1, 1], [], []>, precision = #tpu.contract_precision<fp32>} : vector<2x128xf32>, vector<128x128xf32>, vector<2x128xf32> -> vector<2x128xf32>
    %50 = vector.extract_strided_slice %49 {offsets = [0, 0], sizes = [1, 128], strides = [1, 1]} : vector<2x128xf32> to vector<1x128xf32>
    %51 = vector.extract_strided_slice %49 {offsets = [1, 0], sizes = [1, 128], strides = [1, 1]} : vector<2x128xf32> to vector<1x128xf32>
    %52 = arith.mulf %50, %50 : vector<1x128xf32>
    %53 = arith.subf %51, %52 : vector<1x128xf32>
    %cst_32 = arith.constant 9.99999974E-6 : f32
    %54 = vector.broadcast %cst_32 : f32 to vector<1x128xf32>
    %55 = arith.addf %53, %54 : vector<1x128xf32>
    %56 = math.rsqrt %55 : vector<1x128xf32>
    %57 = vector.broadcast %50 : vector<1x128xf32> to vector<14x128xf32>
    %58 = arith.subf %42, %57 : vector<14x128xf32>
    %59 = arith.mulf %56, %2 : vector<1x128xf32>
    %60 = vector.broadcast %59 : vector<1x128xf32> to vector<14x128xf32>
    %61 = arith.mulf %58, %60 : vector<14x128xf32>
    %62 = vector.broadcast %3 : vector<1x128xf32> to vector<14x128xf32>
    %63 = arith.addf %61, %62 : vector<14x128xf32>
    %cst_33 = arith.constant 0.000000e+00 : f32
    %64 = vector.broadcast %cst_33 : f32 to vector<14x128xf32>
    %65 = arith.maximumf %63, %64 : vector<14x128xf32>
    %66 = arith.truncf %65 : vector<14x128xf32> to vector<14x128xbf16>
    %c1472 = arith.constant 1472 : index
    %c0_34 = arith.constant 0 : index
    %67 = vector.load %arg3[%c1472, %c0_34] : memref<1824x128xbf16, #tpu.memory_space<vmem>>, vector<28x14xbf16>
    %cst_35 = arith.constant dense<0.000000e+00> : vector<28x128xf32>
    %68 = tpu.matmul %67, %66, %cst_35 {dimension_numbers = #tpu.dot_dimension_numbers<[1], [0], [0], [1], [0, 0, 1, 1], [], []>} : vector<28x14xbf16>, vector<14x128xbf16>, vector<28x128xf32> -> vector<28x128xf32>
    %c1504 = arith.constant 1504 : index
    %c0_36 = arith.constant 0 : index
    %69 = vector.load %arg3[%c1504, %c0_36] : memref<1824x128xbf16, #tpu.memory_space<vmem>>, vector<28x14xbf16>
    %cst_37 = arith.constant dense<0.000000e+00> : vector<28x128xf32>
    %70 = tpu.matmul %69, %66, %cst_37 {dimension_numbers = #tpu.dot_dimension_numbers<[1], [0], [0], [1], [0, 0, 1, 1], [], []>} : vector<28x14xbf16>, vector<14x128xbf16>, vector<28x128xf32> -> vector<28x128xf32>
    %c1536 = arith.constant 1536 : index
    %c0_38 = arith.constant 0 : index
    %71 = vector.load %arg3[%c1536, %c0_38] : memref<1824x128xbf16, #tpu.memory_space<vmem>>, vector<28x14xbf16>
    %cst_39 = arith.constant dense<0.000000e+00> : vector<28x128xf32>
    %72 = tpu.matmul %71, %66, %cst_39 {dimension_numbers = #tpu.dot_dimension_numbers<[1], [0], [0], [1], [0, 0, 1, 1], [], []>} : vector<28x14xbf16>, vector<14x128xbf16>, vector<28x128xf32> -> vector<28x128xf32>
    %c1568 = arith.constant 1568 : index
    %c0_40 = arith.constant 0 : index
    %73 = vector.load %arg3[%c1568, %c0_40] : memref<1824x128xbf16, #tpu.memory_space<vmem>>, vector<28x14xbf16>
    %cst_41 = arith.constant dense<0.000000e+00> : vector<28x128xf32>
    %74 = tpu.matmul %73, %66, %cst_41 {dimension_numbers = #tpu.dot_dimension_numbers<[1], [0], [0], [1], [0, 0, 1, 1], [], []>} : vector<28x14xbf16>, vector<14x128xbf16>, vector<28x128xf32> -> vector<28x128xf32>
    %75 = tpu.concatenate %68, %70, %72, %74 in 1 : vector<28x128xf32>, vector<28x128xf32>, vector<28x128xf32>, vector<28x128xf32> -> vector<28x512xf32>
    %76 = arith.truncf %75 : vector<28x512xf32> to vector<28x512xbf16>
    %c400 = arith.constant 400 : index
    %c0_42 = arith.constant 0 : index
    %77 = vector.load %arg3[%c400, %c0_42] : memref<1824x128xbf16, #tpu.memory_space<vmem>>, vector<512x128xbf16>
    %cst_43 = arith.constant dense<0.000000e+00> : vector<28x128xf32>
    %78 = tpu.matmul %76, %77, %cst_43 {dimension_numbers = #tpu.dot_dimension_numbers<[1], [0], [0], [1], [0, 0, 1, 1], [], []>} : vector<28x512xbf16>, vector<512x128xbf16>, vector<28x128xf32> -> vector<28x128xf32>
    %79 = vector.broadcast %4 : vector<1x128xf32> to vector<28x128xf32>
    %80 = arith.addf %78, %79 : vector<28x128xf32>
    %cst_44 = arith.constant dense<0.000000e+00> : vector<128xf32>
    %81 = vector.multi_reduction <add>, %80, %cst_44 [0] : vector<28x128xf32> to vector<128xf32>
    %82 = vector.shape_cast %81 : vector<128xf32> to vector<1x128xf32>
    %83 = arith.mulf %80, %80 : vector<28x128xf32>
    %cst_45 = arith.constant dense<0.000000e+00> : vector<128xf32>
    %84 = vector.multi_reduction <add>, %83, %cst_45 [0] : vector<28x128xf32> to vector<128xf32>
    %85 = vector.shape_cast %84 : vector<128xf32> to vector<1x128xf32>
    %86 = tpu.concatenate %82, %85 in 0 : vector<1x128xf32>, vector<1x128xf32> -> vector<2x128xf32>
    %cst_46 = arith.constant dense<0.000000e+00> : vector<2x128xf32>
    %87 = tpu.matmul %86, %10, %cst_46 {dimension_numbers = #tpu.dot_dimension_numbers<[1], [0], [0], [1], [0, 0, 1, 1], [], []>, precision = #tpu.contract_precision<fp32>} : vector<2x128xf32>, vector<128x128xf32>, vector<2x128xf32> -> vector<2x128xf32>
    %88 = vector.extract_strided_slice %87 {offsets = [0, 0], sizes = [1, 128], strides = [1, 1]} : vector<2x128xf32> to vector<1x128xf32>
    %89 = vector.extract_strided_slice %87 {offsets = [1, 0], sizes = [1, 128], strides = [1, 1]} : vector<2x128xf32> to vector<1x128xf32>
    %90 = arith.mulf %88, %88 : vector<1x128xf32>
    %91 = arith.subf %89, %90 : vector<1x128xf32>
    %cst_47 = arith.constant 9.99999974E-6 : f32
    %92 = vector.broadcast %cst_47 : f32 to vector<1x128xf32>
    %93 = arith.addf %91, %92 : vector<1x128xf32>
    %94 = math.rsqrt %93 : vector<1x128xf32>
    %95 = vector.broadcast %88 : vector<1x128xf32> to vector<28x128xf32>
    %96 = arith.subf %80, %95 : vector<28x128xf32>
    %97 = arith.mulf %94, %5 : vector<1x128xf32>
    %98 = vector.broadcast %97 : vector<1x128xf32> to vector<28x128xf32>
    %99 = arith.mulf %96, %98 : vector<28x128xf32>
    %100 = vector.broadcast %6 : vector<1x128xf32> to vector<28x128xf32>
    %101 = arith.addf %99, %100 : vector<28x128xf32>
    %cst_48 = arith.constant 0.000000e+00 : f32
    %102 = vector.broadcast %cst_48 : f32 to vector<28x128xf32>
    %103 = arith.maximumf %101, %102 : vector<28x128xf32>
    %104 = arith.truncf %103 : vector<28x128xf32> to vector<28x128xbf16>
    %c1600 = arith.constant 1600 : index
    %c0_49 = arith.constant 0 : index
    %105 = vector.load %arg3[%c1600, %c0_49] : memref<1824x128xbf16, #tpu.memory_space<vmem>>, vector<56x28xbf16>
    %cst_50 = arith.constant dense<0.000000e+00> : vector<56x128xf32>
    %106 = tpu.matmul %105, %104, %cst_50 {dimension_numbers = #tpu.dot_dimension_numbers<[1], [0], [0], [1], [0, 0, 1, 1], [], []>} : vector<56x28xbf16>, vector<28x128xbf16>, vector<56x128xf32> -> vector<56x128xf32>
    %c1656 = arith.constant 1656 : index
    %c0_51 = arith.constant 0 : index
    %107 = vector.load %arg3[%c1656, %c0_51] : memref<1824x128xbf16, #tpu.memory_space<vmem>>, vector<56x28xbf16>
    %cst_52 = arith.constant dense<0.000000e+00> : vector<56x128xf32>
    %108 = tpu.matmul %107, %104, %cst_52 {dimension_numbers = #tpu.dot_dimension_numbers<[1], [0], [0], [1], [0, 0, 1, 1], [], []>} : vector<56x28xbf16>, vector<28x128xbf16>, vector<56x128xf32> -> vector<56x128xf32>
    %c1712 = arith.constant 1712 : index
    %c0_53 = arith.constant 0 : index
    %109 = vector.load %arg3[%c1712, %c0_53] : memref<1824x128xbf16, #tpu.memory_space<vmem>>, vector<56x28xbf16>
    %cst_54 = arith.constant dense<0.000000e+00> : vector<56x128xf32>
    %110 = tpu.matmul %109, %104, %cst_54 {dimension_numbers = #tpu.dot_dimension_numbers<[1], [0], [0], [1], [0, 0, 1, 1], [], []>} : vector<56x28xbf16>, vector<28x128xbf16>, vector<56x128xf32> -> vector<56x128xf32>
    %c1768 = arith.constant 1768 : index
    %c0_55 = arith.constant 0 : index
    %111 = vector.load %arg3[%c1768, %c0_55] : memref<1824x128xbf16, #tpu.memory_space<vmem>>, vector<56x28xbf16>
    %cst_56 = arith.constant dense<0.000000e+00> : vector<56x128xf32>
    %112 = tpu.matmul %111, %104, %cst_56 {dimension_numbers = #tpu.dot_dimension_numbers<[1], [0], [0], [1], [0, 0, 1, 1], [], []>} : vector<56x28xbf16>, vector<28x128xbf16>, vector<56x128xf32> -> vector<56x128xf32>
    %113 = tpu.concatenate %106, %108, %110, %112 in 1 : vector<56x128xf32>, vector<56x128xf32>, vector<56x128xf32>, vector<56x128xf32> -> vector<56x512xf32>
    %114 = arith.truncf %113 : vector<56x512xf32> to vector<56x512xbf16>
    %c912 = arith.constant 912 : index
    %c0_57 = arith.constant 0 : index
    %115 = vector.load %arg3[%c912, %c0_57] : memref<1824x128xbf16, #tpu.memory_space<vmem>>, vector<512x128xbf16>
    %cst_58 = arith.constant dense<0.000000e+00> : vector<56x128xf32>
    %116 = tpu.matmul %114, %115, %cst_58 {dimension_numbers = #tpu.dot_dimension_numbers<[1], [0], [0], [1], [0, 0, 1, 1], [], []>} : vector<56x512xbf16>, vector<512x128xbf16>, vector<56x128xf32> -> vector<56x128xf32>
    %117 = vector.extract_strided_slice %116 {offsets = [0, 0], sizes = [56, 28], strides = [1, 1]} : vector<56x128xf32> to vector<56x28xf32>
    %118 = vector.broadcast %7 : vector<1x28xf32> to vector<56x28xf32>
    %119 = arith.addf %117, %118 : vector<56x28xf32>
    %c0_59 = arith.constant 0 : index
    %c0_60 = arith.constant 0 : index
    %120 = vector.load %arg4[%c0_59, %c0_60] : memref<56x28xf32, #tpu.memory_space<vmem>>, vector<56x28xf32>
    tpu.vector_store %arg4[%c0_59, %c0_60], %119 {strides = array<i32>} : memref<56x28xf32, #tpu.memory_space<vmem>>, vector<56x28xf32>,
    return
  }
}

</mosaic_0001>

<llo_original>
// kernel: decoder_forward.1
$region0: #{decoder_forward.1}
  #allocation0 [shape = 'u32[]', space=smem, size = 0x4, offset = 0x4, fixed_abs, tag = 'smem constant byte address 0x4 - core index']
  #allocation1 [shape = 'u32[144,128]{1,0:T(1,128)}', space=vmem, size = 0x12000, scoped, tag = 'internal scratch']
  %s0 = inlined_call_operand.hbm [shape: f32[2,16], index: 0, kind: input, shape index: {}]
  %s1 = inlined_call_operand.hbm [shape: f32[272,128], index: 1, kind: input, shape index: {}]
  %s2 = inlined_call_operand.hbm [shape: bf16[128,512], index: 2, kind: input, shape index: {}]
  %s3 = inlined_call_operand.hbm [shape: bf16[1824,128], index: 3, kind: input, shape index: {}]
  %s4 = inlined_call_operand.hbm [shape: f32[56,28], index: 4, kind: output, shape index: {}]
  %s5 = sld [smem:[#allocation0]]
  $region42: #{decoder_forward.1} parent=0
    _
  %s7 = ssub.s32 1, %s5
  %s8 = scalar_select 0, %s7, %s5
  $region1: #{decoder_forward.1} parent=0
    #allocation2 [shape = 'u8[1024]{0}', space=vmem, size = 0x400, scoped, tag = 'input window, operand 0, single buffered']
    #allocation3 [shape = 's32[1]{0}', space=sflag, size = 0x4, scoped, tag = 'scoped memory for decoder_forward.1']
    #allocation4 [shape = 's32[1]{0}', space=sflag, size = 0x4, scoped, tag = 'scoped memory for decoder_forward.1']
    #allocation5 [shape = 'u8[139264]{0}', space=vmem, size = 0x22000, scoped, tag = 'input window, operand 1, single buffered']
    #allocation6 [shape = 's32[1]{0}', space=sflag, size = 0x4, scoped, tag = 'scoped memory for decoder_forward.1']
    #allocation7 [shape = 'u8[131072]{0}', space=vmem, size = 0x20000, scoped, tag = 'input window, operand 2, single buffered']
    #allocation8 [shape = 'u8[466944]{0}', space=vmem, size = 0x72000, scoped, tag = 'input window, operand 3, single buffered']
    #allocation9 [shape = 's32[1]{0}', space=sflag, size = 0x4, scoped, tag = 'scoped memory for decoder_forward.1']
    #allocation10 [shape = 'u8[28672]{0}', space=vmem, size = 0x7000, scoped, tag = 'output window, operand 0, single buffered']
    %9 = vsyncpa [#allocation3], 0
    %10 = vsyncpa [#allocation6], 0
    %11 = vsyncpa [#allocation9], 0
    %12 = vsyncpa [#allocation4], 0
    // Predicated region
    $region2: #{decoder_forward.1} parent=1 // pred_check
      _
    $region3: #{decoder_forward.1} parent=1 // pred_check_branch
      %14 = sbr.rel (0) target = $region5
    $region4: #{decoder_forward.1} parent=1 // pred_region
      %s16 = ssub.s32 32, 32
      %17 = vsyncadd [#allocation3], %s16
      %s19 = sshll.u32 [#allocation2], 4
      %s20 = int_to_ptr.vmem [resolvable:$true] %s19
      %22 = dma.hbm_to_vmem [thread:$0]  %s0, 32, %s20, [#allocation3]
    $region5: #{decoder_forward.1} parent=1 // pred_fallthru
      _
    // Predicated region
    $region6: #{decoder_forward.1} parent=1 // pred_check
      _
    $region7: #{decoder_forward.1} parent=1 // pred_check_branch
      %24 = sbr.rel (0) target = $region9
    $region8: #{decoder_forward.1} parent=1 // pred_region
      %s26 = ssub.s32 4352, 4352
      %27 = vsyncadd [#allocation6], %s26
      %s28 = sshll.u32 [#allocation5], 4
      %s29 = int_to_ptr.vmem [resolvable:$true] %s28
      %34 = dma.hbm_to_vmem [thread:$0]  %s1, 4352, %s29, [#allocation6], 128, 128, 8
    $region9: #{decoder_forward.1} parent=1 // pred_fallthru
      _
    // Predicated region
    $region10: #{decoder_forward.1} parent=1 // pred_check
      _
    $region11: #{decoder_forward.1} parent=1 // pred_check_branch
      %36 = sbr.rel (0) target = $region13
    $region12: #{decoder_forward.1} parent=1 // pred_region
      %s38 = ssub.s32 4096, 4096
      %39 = vsyncadd [#allocation6], %s38
      %s40 = sshll.u32 [#allocation7], 4
      %s41 = int_to_ptr.vmem [resolvable:$true] %s40
      %46 = dma.hbm_to_vmem [thread:$0]  %s2, 4096, %s41, [#allocation6], 256, 256, 16
    $region13: #{decoder_forward.1} parent=1 // pred_fallthru
      _
    // Predicated region
    $region14: #{decoder_forward.1} parent=1 // pred_check
      _
    $region15: #{decoder_forward.1} parent=1 // pred_check_branch
      %48 = sbr.rel (0) target = $region17
    $region16: #{decoder_forward.1} parent=1 // pred_region
      %s50 = ssub.s32 14592, 14592
      %51 = vsyncadd [#allocation9], %s50
      %s52 = sshll.u32 [#allocation8], 4
      %s53 = int_to_ptr.vmem [resolvable:$true] %s52
      %58 = dma.hbm_to_vmem [thread:$0]  %s3, 14592, %s53, [#allocation9], 64, 64, 4
    $region17: #{decoder_forward.1} parent=1 // pred_fallthru
      _
    // Predicated region
    $region18: #{decoder_forward.1} parent=1 // pred_check
      _
    $region19: #{decoder_forward.1} parent=1 // pred_check_branch
      %60 = sbr.rel (0) target = $region21
    $region20: #{decoder_forward.1} parent=1 // pred_region
      %61 = dma.done [#allocation3], 32
    $region21: #{decoder_forward.1} parent=1 // pred_fallthru
      _
    // Predicated region
    $region22: #{decoder_forward.1} parent=1 // pred_check
      _
    $region23: #{decoder_forward.1} parent=1 // pred_check_branch
      %63 = sbr.rel (0) target = $region25
    $region24: #{decoder_forward.1} parent=1 // pred_region
      %64 = dma.done [#allocation6], 4352
    $region25: #{decoder_forward.1} parent=1 // pred_fallthru
      _
    // Predicated region
    $region26: #{decoder_forward.1} parent=1 // pred_check
      _
    $region27: #{decoder_forward.1} parent=1 // pred_check_branch
      %66 = sbr.rel (0) target = $region29
    $region28: #{decoder_forward.1} parent=1 // pred_region
      %67 = dma.done [#allocation6], 4096
    $region29: #{decoder_forward.1} parent=1 // pred_fallthru
      _
    // Predicated region
    $region30: #{decoder_forward.1} parent=1 // pred_check
      _
    $region31: #{decoder_forward.1} parent=1 // pred_check_branch
      %69 = sbr.rel (0) target = $region33
    $region32: #{decoder_forward.1} parent=1 // pred_region
      %70 = dma.done [#allocation9], 14592
    $region33: #{decoder_forward.1} parent=1 // pred_fallthru
      _
    %v72 = vld [vmem:[#allocation5] sm:$0x1]
    %v73 = vld [vmem:[#allocation5 + $0x1] sm:$0x1]
    %v74 = vld [vmem:[#allocation5 + $0x2] sm:$0x1]
    %v75 = vld [vmem:[#allocation5 + $0x3] sm:$0x1]
    %v76 = vld [vmem:[#allocation5 + $0x4] sm:$0x1]
    %v77 = vld [vmem:[#allocation5 + $0x5] sm:$0x1]
    %v78 = vld [vmem:[#allocation5 + $0x6] sm:$0x1]
    %v79 = vld [vmem:[#allocation5 + $0x7] sm:$0x1]
    %v80 = vld [vmem:[#allocation5 + $0x8] sm:$0xff]
    %v81 = vld [vmem:[#allocation5 + $0x10] sm:$0xff]
    %v82 = vld [vmem:[#allocation5 + $0x18] sm:$0xff]
    %v83 = vld [vmem:[#allocation5 + $0x20] sm:$0xff]
    %v84 = vld [vmem:[#allocation5 + $0x28] sm:$0xff]
    %v85 = vld [vmem:[#allocation5 + $0x30] sm:$0xff]
    %v86 = vld [vmem:[#allocation5 + $0x38] sm:$0xff]
    %v87 = vld [vmem:[#allocation5 + $0x40] sm:$0xff]
    %v88 = vld [vmem:[#allocation5 + $0x48] sm:$0xff]
    %v89 = vld [vmem:[#allocation5 + $0x50] sm:$0xff]
    %v90 = vld [vmem:[#allocation5 + $0x58] sm:$0xff]
    %v91 = vld [vmem:[#allocation5 + $0x60] sm:$0xff]
    %v92 = vld [vmem:[#allocation5 + $0x68] sm:$0xff]
    %v93 = vld [vmem:[#allocation5 + $0x70] sm:$0xff]
    %v94 = vld [vmem:[#allocation5 + $0x78] sm:$0xff]
    %v95 = vld [vmem:[#allocation5 + $0x80] sm:$0xff]
    %v96 = vld [vmem:[#allocation5 + $0x88] sm:$0xff]
    %v97 = vld [vmem:[#allocation5 + $0x90] sm:$0xff]
    %v98 = vld [vmem:[#allocation5 + $0x98] sm:$0xff]
    %v99 = vld [vmem:[#allocation5 + $0xa0] sm:$0xff]
    %v100 = vld [vmem:[#allocation5 + $0xa8] sm:$0xff]
    %v101 = vld [vmem:[#allocation5 + $0xb0] sm:$0xff]
    %v102 = vld [vmem:[#allocation5 + $0xb8] sm:$0xff]
    %v103 = vld [vmem:[#allocation5 + $0xc0] sm:$0xff]
    %v104 = vld [vmem:[#allocation5 + $0xc8] sm:$0xff]
    %v105 = vld [vmem:[#allocation5 + $0xd0] sm:$0xff]
    %v106 = vld [vmem:[#allocation5 + $0xd8] sm:$0xff]
    %v107 = vld [vmem:[#allocation5 + $0xe0] sm:$0xff]
    %v108 = vld [vmem:[#allocation5 + $0xe8] sm:$0xff]
    %v109 = vld [vmem:[#allocation5 + $0xf0] sm:$0xff]
    %v110 = vld [vmem:[#allocation5 + $0xf8] sm:$0xff]
    %v111 = vld [vmem:[#allocation5 + $0x100] sm:$0xff]
    %v112 = vld [vmem:[#allocation5 + $0x108] sm:$0xff]
    %v113 = vld [vmem:[#allocation2] sm:$0x3]
    %v114 = vpack.c.bf16 %v113, %v113
    %v115 = vld [vmem:[#allocation8] sm:$0xf]
    %v116 = vld [vmem:[#allocation8 + $0x4] sm:$0xf]
    %v117 = vlaneseq
    %v118 = vshrl.u32 %v117, 7
    %v119 = vsub.s32 0, %v118
    %v120 = vrot.slane %v72, %v119
    %v123 = vunpack.c.l.b16 %v115
    %v124 = vunpack.c.l.b16 %v116
    %v125 = vpack.c.b16 %v124, %v123
    %vm127 = vcmask 130048
    %v129 = vsel %vm127, %v114, 0
    %131 = vmatprep.subr.bf16.mxu0 0
    %132 = vmatpush1.bf16.msra.mxu0 %v125
    %133 = vmatprep.subr.bf16.mxu0 0
    %134 = vmatpush1.bf16.msra.mxu0 0
    %135 = vmatprep.subr.bf16.mxu0 0
    %136 = vmatpush1.bf16.msra.mxu0 0
    %137 = vmatprep.subr.bf16.mxu0 0
    %138 = vmatpush1.bf16.msra.mxu0 0
    %139 = vmatprep.subr.bf16.mxu0 0
    %140 = vmatpush1.bf16.msra.mxu0 0
    %141 = vmatprep.subr.bf16.mxu0 0
    %142 = vmatpush1.bf16.msra.mxu0 0
    %143 = vmatprep.subr.bf16.mxu0 0
    %144 = vmatpush1.bf16.msra.mxu0 0
    %145 = vmatprep.subr.bf16.mxu0 0
    %146 = vmatpush1.bf16.msra.mxu0 0
    %147 = vmatprep.subr.bf16.mxu0 0
    %148 = vmatpush1.bf16.msra.mxu0 0
    %149 = vmatprep.subr.bf16.mxu0 0
    %150 = vmatpush1.bf16.msra.mxu0 0
    %151 = vmatprep.subr.bf16.mxu0 0
    %152 = vmatpush1.bf16.msra.mxu0 0
    %153 = vmatprep.subr.bf16.mxu0 0
    %154 = vmatpush1.bf16.msra.mxu0 0
    %155 = vmatprep.subr.bf16.mxu0 0
    %156 = vmatpush1.bf16.msra.mxu0 0
    %157 = vmatprep.subr.bf16.mxu0 0
    %158 = vmatpush1.bf16.msra.mxu0 0
    %159 = vmatprep.subr.bf16.mxu0 0
    %160 = vmatpush1.bf16.msra.mxu0 0
    %161 = vmatprep.subr.bf16.mxu0 0
    %162 = vmatpush1.bf16.msra.mxu0 0
    %163 = vmatprep.mubr.bf16.mxu0 0
    %164 = vmatmul.mubr.bf16.gmra.mrb[0].mxu0 %v129
    %v165 = vpop.f32.mrb[0].mxu0
    %v166 = vadd.f32 %v120, %v165
    %v167 = vpop.f32.mrb[0].mxu0
    %v168 = vpop.f32.mrb[0].mxu0
    %v169 = vpop.f32.mrb[0].mxu0
    %170 = vdwg.mxu0
    %v171 = vmax.f32 %v166, 0.0
    %v172 = vpack.c.bf16 %v171, %v171
    %v173 = vld [vmem:[#allocation7] sm:$0xff]
    %v174 = vld [vmem:[#allocation7 + $0x8] sm:$0xff]
    %v175 = vld [vmem:[#allocation7 + $0x10] sm:$0xff]
    %v176 = vld [vmem:[#allocation7 + $0x18] sm:$0xff]
    %v177 = vld [vmem:[#allocation7 + $0x20] sm:$0xff]
    %v178 = vld [vmem:[#allocation7 + $0x28] sm:$0xff]
    %v179 = vld [vmem:[#allocation7 + $0x30] sm:$0xff]
    %v180 = vld [vmem:[#allocation7 + $0x38] sm:$0xff]
    %v181 = vld [vmem:[#allocation7 + $0x40] sm:$0xff]
    %v182 = vld [vmem:[#allocation7 + $0x48] sm:$0xff]
    %v183 = vld [vmem:[#allocation7 + $0x50] sm:$0xff]
    %v184 = vld [vmem:[#allocation7 + $0x58] sm:$0xff]
    %v185 = vld [vmem:[#allocation7 + $0x60] sm:$0xff]
    %v186 = vld [vmem:[#allocation7 + $0x68] sm:$0xff]
    %v187 = vld [vmem:[#allocation7 + $0x70] sm:$0xff]
    %v188 = vld [vmem:[#allocation7 + $0x78] sm:$0xff]
    %v189 = vld [vmem:[#allocation7 + $0x80] sm:$0xff]
    %v190 = vld [vmem:[#allocation7 + $0x88] sm:$0xff]
    %v191 = vld [vmem:[#allocation7 + $0x90] sm:$0xff]
    %v192 = vld [vmem:[#allocation7 + $0x98] sm:$0xff]
    %v193 = vld [vmem:[#allocation7 + $0xa0] sm:$0xff]
    %v194 = vld [vmem:[#allocation7 + $0xa8] sm:$0xff]
    %v195 = vld [vmem:[#allocation7 + $0xb0] sm:$0xff]
    %v196 = vld [vmem:[#allocation7 + $0xb8] sm:$0xff]
    %v197 = vld [vmem:[#allocation7 + $0xc0] sm:$0xff]
    %v198 = vld [vmem:[#allocation7 + $0xc8] sm:$0xff]
    %v199 = vld [vmem:[#allocation7 + $0xd0] sm:$0xff]
    %v200 = vld [vmem:[#allocation7 + $0xd8] sm:$0xff]
    %v201 = vld [vmem:[#allocation7 + $0xe0] sm:$0xff]
    %v202 = vld [vmem:[#allocation7 + $0xe8] sm:$0xff]
    %v203 = vld [vmem:[#allocation7 + $0xf0] sm:$0xff]
    %v204 = vld [vmem:[#allocation7 + $0xf8] sm:$0xff]
    %v237 = vunpack.c.l.b16 %v173
    %v238 = vunpack.c.h.b16 %v173
    %v239 = vunpack.c.l.b16 %v174
    %v240 = vunpack.c.h.b16 %v174
    %v241 = vunpack.c.l.b16 %v175
    %v242 = vunpack.c.h.b16 %v175
    %v243 = vunpack.c.l.b16 %v176
    %v244 = vunpack.c.h.b16 %v176
    %v245 = vunpack.c.l.b16 %v177
    %v246 = vunpack.c.h.b16 %v177
    %v247 = vunpack.c.l.b16 %v178
    %v248 = vunpack.c.h.b16 %v178
    %v249 = vunpack.c.l.b16 %v179
    %v250 = vunpack.c.h.b16 %v179
    %v251 = vunpack.c.l.b16 %v180
    %v252 = vunpack.c.h.b16 %v180
    %v253 = vunpack.c.l.b16 %v181
    %v254 = vunpack.c.h.b16 %v181
    %v255 = vunpack.c.l.b16 %v182
    %v256 = vunpack.c.h.b16 %v182
    %v257 = vunpack.c.l.b16 %v183
    %v258 = vunpack.c.h.b16 %v183
    %v259 = vunpack.c.l.b16 %v184
    %v260 = vunpack.c.h.b16 %v184
    %v261 = vunpack.c.l.b16 %v185
    %v262 = vunpack.c.h.b16 %v185
    %v263 = vunpack.c.l.b16 %v186
    %v264 = vunpack.c.h.b16 %v186
    %v265 = vunpack.c.l.b16 %v187
    %v266 = vunpack.c.h.b16 %v187
    %v267 = vunpack.c.l.b16 %v188
    %v268 = vunpack.c.h.b16 %v188
    %v269 = vunpack.c.l.b16 %v189
    %v270 = vunpack.c.h.b16 %v189
    %v271 = vunpack.c.l.b16 %v190
    %v272 = vunpack.c.h.b16 %v190
    %v273 = vunpack.c.l.b16 %v191
    %v274 = vunpack.c.h.b16 %v191
    %v275 = vunpack.c.l.b16 %v192
    %v276 = vunpack.c.h.b16 %v192
    %v277 = vunpack.c.l.b16 %v193
    %v278 = vunpack.c.h.b16 %v193
    %v279 = vunpack.c.l.b16 %v194
    %v280 = vunpack.c.h.b16 %v194
    %v281 = vunpack.c.l.b16 %v195
    %v282 = vunpack.c.h.b16 %v195
    %v283 = vunpack.c.l.b16 %v196
    %v284 = vunpack.c.h.b16 %v196
    %v285 = vunpack.c.l.b16 %v197
    %v286 = vunpack.c.h.b16 %v197
    %v287 = vunpack.c.l.b16 %v198
    %v288 = vunpack.c.h.b16 %v198
    %v289 = vunpack.c.l.b16 %v199
    %v290 = vunpack.c.h.b16 %v199
    %v291 = vunpack.c.l.b16 %v200
    %v292 = vunpack.c.h.b16 %v200
    %v293 = vunpack.c.l.b16 %v201
    %v294 = vunpack.c.h.b16 %v201
    %v295 = vunpack.c.l.b16 %v202
    %v296 = vunpack.c.h.b16 %v202
    %v297 = vunpack.c.l.b16 %v203
    %v298 = vunpack.c.h.b16 %v203
    %v299 = vunpack.c.l.b16 %v204
    %v300 = vunpack.c.h.b16 %v204
    %v301 = vpack.c.b16 %v241, %v237
    %v302 = vpack.c.b16 %v242, %v238
    %v303 = vpack.c.b16 %v243, %v239
    %v304 = vpack.c.b16 %v244, %v240
    %v305 = vpack.c.b16 %v249, %v245
    %v306 = vpack.c.b16 %v250, %v246
    %v307 = vpack.c.b16 %v251, %v247
    %v308 = vpack.c.b16 %v252, %v248
    %v309 = vpack.c.b16 %v257, %v253
    %v310 = vpack.c.b16 %v258, %v254
    %v311 = vpack.c.b16 %v259, %v255
    %v312 = vpack.c.b16 %v260, %v256
    %v313 = vpack.c.b16 %v265, %v261
    %v314 = vpack.c.b16 %v266, %v262
    %v315 = vpack.c.b16 %v267, %v263
    %v316 = vpack.c.b16 %v268, %v264
    %v317 = vpack.c.b16 %v273, %v269
    %v318 = vpack.c.b16 %v274, %v270
    %v319 = vpack.c.b16 %v275, %v271
    %v320 = vpack.c.b16 %v276, %v272
    %v321 = vpack.c.b16 %v281, %v277
    %v322 = vpack.c.b16 %v282, %v278
    %v323 = vpack.c.b16 %v283, %v279
    %v324 = vpack.c.b16 %v284, %v280
    %v325 = vpack.c.b16 %v289, %v285
    %v326 = vpack.c.b16 %v290, %v286
    %v327 = vpack.c.b16 %v291, %v287
    %v328 = vpack.c.b16 %v292, %v288
    %v329 = vpack.c.b16 %v297, %v293
    %v330 = vpack.c.b16 %v298, %v294
    %v331 = vpack.c.b16 %v299, %v295
    %v332 = vpack.c.b16 %v300, %v296
    %365 = vmatprep.subr.bf16.mxu0 %v302
    %366 = vmatpush1.bf16.msra.mxu0 %v301
    %367 = vmatprep.subr.bf16.mxu0 %v306
    %368 = vmatpush1.bf16.msra.mxu0 %v305
    %369 = vmatprep.subr.bf16.mxu0 %v310
    %370 = vmatpush1.bf16.msra.mxu0 %v309
    %371 = vmatprep.subr.bf16.mxu0 %v314
    %372 = vmatpush1.bf16.msra.mxu0 %v313
    %373 = vmatprep.subr.bf16.mxu0 %v318
    %374 = vmatpush1.bf16.msra.mxu0 %v317
    %375 = vmatprep.subr.bf16.mxu0 %v322
    %376 = vmatpush1.bf16.msra.mxu0 %v321
    %377 = vmatprep.subr.bf16.mxu0 %v326
    %378 = vmatpush1.bf16.msra.mxu0 %v325
    %379 = vmatprep.subr.bf16.mxu0 %v330
    %380 = vmatpush1.bf16.msra.mxu0 %v329
    %381 = vmatprep.subr.bf16.mxu0 0
    %382 = vmatpush1.bf16.msra.mxu0 0
    %383 = vmatprep.subr.bf16.mxu0 0
    %384 = vmatpush1.bf16.msra.mxu0 0
    %385 = vmatprep.subr.bf16.mxu0 0
    %386 = vmatpush1.bf16.msra.mxu0 0
    %387 = vmatprep.subr.bf16.mxu0 0
    %388 = vmatpush1.bf16.msra.mxu0 0
    %389 = vmatprep.subr.bf16.mxu0 0
    %390 = vmatpush1.bf16.msra.mxu0 0
    %391 = vmatprep.subr.bf16.mxu0 0
    %392 = vmatpush1.bf16.msra.mxu0 0
    %393 = vmatprep.subr.bf16.mxu0 0
    %394 = vmatpush1.bf16.msra.mxu0 0
    %395 = vmatprep.subr.bf16.mxu0 0
    %396 = vmatpush1.bf16.msra.mxu0 0
    %397 = vmatprep.mubr.bf16.mxu0 0
    %398 = vmatmul.mubr.bf16.gmra.mrb[0].mxu0 %v172
    %v399 = vpop.f32.mrb[0].mxu0
    %v400 = vadd.f32 0.0, %v399
    %v401 = vpop.f32.mrb[0].mxu0
    %v402 = vadd.f32 0.0, %v401
    %v403 = vpop.f32.mrb[0].mxu0
    %v404 = vpop.f32.mrb[0].mxu0
    %405 = vdwg.mxu0
    %406 = vmatprep.subr.bf16.mxu0 %v304
    %407 = vmatpush1.bf16.msra.mxu0 %v303
    %408 = vmatprep.subr.bf16.mxu0 %v308
    %409 = vmatpush1.bf16.msra.mxu0 %v307
    %410 = vmatprep.subr.bf16.mxu0 %v312
    %411 = vmatpush1.bf16.msra.mxu0 %v311
    %412 = vmatprep.subr.bf16.mxu0 %v316
    %413 = vmatpush1.bf16.msra.mxu0 %v315
    %414 = vmatprep.subr.bf16.mxu0 %v320
    %415 = vmatpush1.bf16.msra.mxu0 %v319
    %416 = vmatprep.subr.bf16.mxu0 %v324
    %417 = vmatpush1.bf16.msra.mxu0 %v323
    %418 = vmatprep.subr.bf16.mxu0 %v328
    %419 = vmatpush1.bf16.msra.mxu0 %v327
    %420 = vmatprep.subr.bf16.mxu0 %v332
    %421 = vmatpush1.bf16.msra.mxu0 %v331
    %422 = vmatprep.subr.bf16.mxu0 0
    %423 = vmatpush1.bf16.msra.mxu0 0
    %424 = vmatprep.subr.bf16.mxu0 0
    %425 = vmatpush1.bf16.msra.mxu0 0
    %426 = vmatprep.subr.bf16.mxu0 0
    %427 = vmatpush1.bf16.msra.mxu0 0
    %428 = vmatprep.subr.bf16.mxu0 0
    %429 = vmatpush1.bf16.msra.mxu0 0
    %430 = vmatprep.subr.bf16.mxu0 0
    %431 = vmatpush1.bf16.msra.mxu0 0
    %432 = vmatprep.subr.bf16.mxu0 0
    %433 = vmatpush1.bf16.msra.mxu0 0
    %434 = vmatprep.subr.bf16.mxu0 0
    %435 = vmatpush1.bf16.msra.mxu0 0
    %436 = vmatprep.subr.bf16.mxu0 0
    %437 = vmatpush1.bf16.msra.mxu0 0
    %438 = vmatprep.mubr.bf16.mxu0 0
    %439 = vmatmul.mubr.bf16.gmra.mrb[0].mxu0 %v172
    %v440 = vpop.f32.mrb[0].mxu0
    %v441 = vadd.f32 0.0, %v440
    %v442 = vpop.f32.mrb[0].mxu0
    %v443 = vadd.f32 0.0, %v442
    %v444 = vpop.f32.mrb[0].mxu0
    %v445 = vpop.f32.mrb[0].mxu0
    %446 = vdwg.mxu0
    %v448 = vrot.slane %v402, 6
    %v451 = vrot.slane %v441, 4
    %v454 = vrot.slane %v443, 2
    %vm456 = vcmask 1041408
    %v457 = vsel %vm456, %v400, %v448
    %vm458 = vcmask 1043456
    %v459 = vsel %vm458, %v457, %v451
    %vm460 = vcmask 1045504
    %v461 = vsel %vm460, %v459, %v454
    %v462 = vadd.f32 %v461, %v80
    %v463 = vmax.f32 %v462, 0.0
    %v464 = vpack.c.bf16 %v463, %v463
    %v465 = vld [vmem:[#allocation8 + $0x2c8] sm:$0xf]
    %v466 = vld [vmem:[#allocation8 + $0x2cc] sm:$0x7]
    %v469 = vunpack.c.l.b16 %v465
    %v470 = vunpack.c.l.b16 %v466
    %v471 = vpack.c.b16 %v470, %v469
    %vm472 = vcmask 64512
    %v474 = vsel %vm472, %v471, 0
    %v477 = vsel %vm458, %v464, 0
    %479 = vmatprep.subr.bf16.mxu0 0
    %480 = vmatpush1.bf16.msra.mxu0 %v477
    %481 = vmatprep.subr.bf16.mxu0 0
    %482 = vmatpush1.bf16.msra.mxu0 0
    %483 = vmatprep.subr.bf16.mxu0 0
    %484 = vmatpush1.bf16.msra.mxu0 0
    %485 = vmatprep.subr.bf16.mxu0 0
    %486 = vmatpush1.bf16.msra.mxu0 0
    %487 = vmatprep.subr.bf16.mxu0 0
    %488 = vmatpush1.bf16.msra.mxu0 0
    %489 = vmatprep.subr.bf16.mxu0 0
    %490 = vmatpush1.bf16.msra.mxu0 0
    %491 = vmatprep.subr.bf16.mxu0 0
    %492 = vmatpush1.bf16.msra.mxu0 0
    %493 = vmatprep.subr.bf16.mxu0 0
    %494 = vmatpush1.bf16.msra.mxu0 0
    %495 = vmatprep.subr.bf16.mxu0 0
    %496 = vmatpush1.bf16.msra.mxu0 0
    %497 = vmatprep.subr.bf16.mxu0 0
    %498 = vmatpush1.bf16.msra.mxu0 0
    %499 = vmatprep.subr.bf16.mxu0 0
    %500 = vmatpush1.bf16.msra.mxu0 0
    %501 = vmatprep.subr.bf16.mxu0 0
    %502 = vmatpush1.bf16.msra.mxu0 0
    %503 = vmatprep.subr.bf16.mxu0 0
    %504 = vmatpush1.bf16.msra.mxu0 0
    %505 = vmatprep.subr.bf16.mxu0 0
    %506 = vmatpush1.bf16.msra.mxu0 0
    %507 = vmatprep.subr.bf16.mxu0 0
    %508 = vmatpush1.bf16.msra.mxu0 0
    %509 = vmatprep.subr.bf16.mxu0 0
    %510 = vmatpush1.bf16.msra.mxu0 0
    %511 = vmatprep.mubr.bf16.mxu0 0
    %512 = vmatmul.mubr.bf16.gmra.mrb[0].mxu0 %v474
    %v513 = vpop.f32.mrb[0].mxu0
    %v514 = vadd.f32 0.0, %v513
    %v515 = vpop.f32.mrb[0].mxu0
    %v516 = vpop.f32.mrb[0].mxu0
    %v517 = vadd.f32 0.0, %v516
    %v518 = vpop.f32.mrb[0].mxu0
    %519 = vdwg.mxu0
    %v520 = vld [vmem:[#allocation8 + $0x2d0] sm:$0xf]
    %v521 = vld [vmem:[#allocation8 + $0x2d4] sm:$0x7]
    %v524 = vunpack.c.l.b16 %v520
    %v525 = vunpack.c.l.b16 %v521
    %v526 = vpack.c.b16 %v525, %v524
    %v528 = vsel %vm472, %v526, 0
    %530 = vmatprep.subr.bf16.mxu0 0
    %531 = vmatpush1.bf16.msra.mxu0 %v477
    %532 = vmatprep.subr.bf16.mxu0 0
    %533 = vmatpush1.bf16.msra.mxu0 0
    %534 = vmatprep.subr.bf16.mxu0 0
    %535 = vmatpush1.bf16.msra.mxu0 0
    %536 = vmatprep.subr.bf16.mxu0 0
    %537 = vmatpush1.bf16.msra.mxu0 0
    %538 = vmatprep.subr.bf16.mxu0 0
    %539 = vmatpush1.bf16.msra.mxu0 0
    %540 = vmatprep.subr.bf16.mxu0 0
    %541 = vmatpush1.bf16.msra.mxu0 0
    %542 = vmatprep.subr.bf16.mxu0 0
    %543 = vmatpush1.bf16.msra.mxu0 0
    %544 = vmatprep.subr.bf16.mxu0 0
    %545 = vmatpush1.bf16.msra.mxu0 0
    %546 = vmatprep.subr.bf16.mxu0 0
    %547 = vmatpush1.bf16.msra.mxu0 0
    %548 = vmatprep.subr.bf16.mxu0 0
    %549 = vmatpush1.bf16.msra.mxu0 0
    %550 = vmatprep.subr.bf16.mxu0 0
    %551 = vmatpush1.bf16.msra.mxu0 0
    %552 = vmatprep.subr.bf16.mxu0 0
    %553 = vmatpush1.bf16.msra.mxu0 0
    %554 = vmatprep.subr.bf16.mxu0 0
    %555 = vmatpush1.bf16.msra.mxu0 0
    %556 = vmatprep.subr.bf16.mxu0 0
    %557 = vmatpush1.bf16.msra.mxu0 0
    %558 = vmatprep.subr.bf16.mxu0 0
    %559 = vmatpush1.bf16.msra.mxu0 0
    %560 = vmatprep.subr.bf16.mxu0 0
    %561 = vmatpush1.bf16.msra.mxu0 0
    %562 = vmatprep.mubr.bf16.mxu0 0
    %563 = vmatmul.mubr.bf16.gmra.mrb[0].mxu0 %v528
    %v564 = vpop.f32.mrb[0].mxu0
    %v565 = vadd.f32 0.0, %v564
    %v566 = vpop.f32.mrb[0].mxu0
    %v567 = vpop.f32.mrb[0].mxu0
    %v568 = vadd.f32 0.0, %v567
    %v569 = vpop.f32.mrb[0].mxu0
    %570 = vdwg.mxu0
    %v571 = vld [vmem:[#allocation8 + $0x2d8] sm:$0xf]
    %v572 = vld [vmem:[#allocation8 + $0x2dc] sm:$0x7]
    %v575 = vunpack.c.l.b16 %v571
    %v576 = vunpack.c.l.b16 %v572
    %v577 = vpack.c.b16 %v576, %v575
    %v579 = vsel %vm472, %v577, 0
    %581 = vmatprep.subr.bf16.mxu0 0
    %582 = vmatpush1.bf16.msra.mxu0 %v477
    %583 = vmatprep.subr.bf16.mxu0 0
    %584 = vmatpush1.bf16.msra.mxu0 0
    %585 = vmatprep.subr.bf16.mxu0 0
    %586 = vmatpush1.bf16.msra.mxu0 0
    %587 = vmatprep.subr.bf16.mxu0 0
    %588 = vmatpush1.bf16.msra.mxu0 0
    %589 = vmatprep.subr.bf16.mxu0 0
    %590 = vmatpush1.bf16.msra.mxu0 0
    %591 = vmatprep.subr.bf16.mxu0 0
    %592 = vmatpush1.bf16.msra.mxu0 0
    %593 = vmatprep.subr.bf16.mxu0 0
    %594 = vmatpush1.bf16.msra.mxu0 0
    %595 = vmatprep.subr.bf16.mxu0 0
    %596 = vmatpush1.bf16.msra.mxu0 0
    %597 = vmatprep.subr.bf16.mxu0 0
    %598 = vmatpush1.bf16.msra.mxu0 0
    %599 = vmatprep.subr.bf16.mxu0 0
    %600 = vmatpush1.bf16.msra.mxu0 0
    %601 = vmatprep.subr.bf16.mxu0 0
    %602 = vmatpush1.bf16.msra.mxu0 0
    %603 = vmatprep.subr.bf16.mxu0 0
    %604 = vmatpush1.bf16.msra.mxu0 0
    %605 = vmatprep.subr.bf16.mxu0 0
    %606 = vmatpush1.bf16.msra.mxu0 0
    %607 = vmatprep.subr.bf16.mxu0 0
    %608 = vmatpush1.bf16.msra.mxu0 0
    %609 = vmatprep.subr.bf16.mxu0 0
    %610 = vmatpush1.bf16.msra.mxu0 0
    %611 = vmatprep.subr.bf16.mxu0 0
    %612 = vmatpush1.bf16.msra.mxu0 0
    %613 = vmatprep.mubr.bf16.mxu0 0
    %614 = vmatmul.mubr.bf16.gmra.mrb[0].mxu0 %v579
    %v615 = vpop.f32.mrb[0].mxu0
    %v616 = vadd.f32 0.0, %v615
    %v617 = vpop.f32.mrb[0].mxu0
    %v618 = vpop.f32.mrb[0].mxu0
    %v619 = vadd.f32 0.0, %v618
    %v620 = vpop.f32.mrb[0].mxu0
    %621 = vdwg.mxu0
    %v622 = vpack.c.bf16 %v517, %v514
    %v623 = vpack.c.bf16 %v568, %v565
    %v624 = vpack.c.bf16 %v619, %v616
    %v625 = vld [vmem:[#allocation8 + $0x8] sm:$0xf]
    %v626 = vld [vmem:[#allocation8 + $0xc] sm:$0xf]
    %v627 = vld [vmem:[#allocation8 + $0x10] sm:$0xf]
    %v628 = vld [vmem:[#allocation8 + $0x14] sm:$0xf]
    %v629 = vld [vmem:[#allocation8 + $0x18] sm:$0xf]
    %v630 = vld [vmem:[#allocation8 + $0x1c] sm:$0xf]
    %v631 = vld [vmem:[#allocation8 + $0x20] sm:$0xf]
    %v632 = vld [vmem:[#allocation8 + $0x24] sm:$0xf]
    %v633 = vld [vmem:[#allocation8 + $0x28] sm:$0xf]
    %v634 = vld [vmem:[#allocation8 + $0x2c] sm:$0xf]
    %v635 = vld [vmem:[#allocation8 + $0x30] sm:$0xf]
    %v636 = vld [vmem:[#allocation8 + $0x34] sm:$0xf]
    %v637 = vld [vmem:[#allocation8 + $0x38] sm:$0xf]
    %v638 = vld [vmem:[#allocation8 + $0x3c] sm:$0xf]
    %v639 = vld [vmem:[#allocation8 + $0x40] sm:$0xf]
    %v640 = vld [vmem:[#allocation8 + $0x44] sm:$0xf]
    %v641 = vld [vmem:[#allocation8 + $0x48] sm:$0xf]
    %v642 = vld [vmem:[#allocation8 + $0x4c] sm:$0xf]
    %v643 = vld [vmem:[#allocation8 + $0x50] sm:$0xf]
    %v644 = vld [vmem:[#allocation8 + $0x54] sm:$0xf]
    %v645 = vld [vmem:[#allocation8 + $0x58] sm:$0xf]
    %v646 = vld [vmem:[#allocation8 + $0x5c] sm:$0xf]
    %v647 = vld [vmem:[#allocation8 + $0x60] sm:$0xf]
    %v648 = vld [vmem:[#allocation8 + $0x64] sm:$0xf]
    %v649 = vld [vmem:[#allocation8 + $0x68] sm:$0xf]
    %v650 = vld [vmem:[#allocation8 + $0x6c] sm:$0xf]
    %v651 = vld [vmem:[#allocation8 + $0x70] sm:$0xf]
    %v652 = vld [vmem:[#allocation8 + $0x74] sm:$0xf]
    %v653 = vld [vmem:[#allocation8 + $0x78] sm:$0xf]
    %v654 = vld [vmem:[#allocation8 + $0x7c] sm:$0xf]
    %v655 = vld [vmem:[#allocation8 + $0x80] sm:$0xf]
    %v656 = vld [vmem:[#allocation8 + $0x84] sm:$0xf]
    %v657 = vld [vmem:[#allocation8 + $0x88] sm:$0xf]
    %v658 = vld [vmem:[#allocation8 + $0x8c] sm:$0xf]
    %v659 = vld [vmem:[#allocation8 + $0x90] sm:$0xf]
    %v660 = vld [vmem:[#allocation8 + $0x94] sm:$0xf]
    %v661 = vld [vmem:[#allocation8 + $0x98] sm:$0xf]
    %v662 = vld [vmem:[#allocation8 + $0x9c] sm:$0xf]
    %v663 = vld [vmem:[#allocation8 + $0xa0] sm:$0xf]
    %v664 = vld [vmem:[#allocation8 + $0xa4] sm:$0xf]
    %v665 = vld [vmem:[#allocation8 + $0xa8] sm:$0xf]
    %v666 = vld [vmem:[#allocation8 + $0xac] sm:$0xf]
    %v667 = vld [vmem:[#allocation8 + $0xb0] sm:$0xf]
    %v668 = vld [vmem:[#allocation8 + $0xb4] sm:$0xf]
    %v669 = vld [vmem:[#allocation8 + $0xb8] sm:$0xf]
    %v670 = vld [vmem:[#allocation8 + $0xbc] sm:$0xf]
    %v671 = vld [vmem:[#allocation8 + $0xc0] sm:$0xf]
    %v672 = vld [vmem:[#allocation8 + $0xc4] sm:$0xf]
    %v673 = vlaneseq
    %v674 = vshrl.u32 %v673, 7
    %v675 = vsub.s32 0, %v674
    %v676 = vrot.slane %v73, %v675
    %v725 = vunpack.c.l.b16 %v625
    %v726 = vunpack.c.l.b16 %v626
    %v727 = vunpack.c.l.b16 %v627
    %v728 = vunpack.c.l.b16 %v628
    %v729 = vunpack.c.l.b16 %v629
    %v730 = vunpack.c.l.b16 %v630
    %v731 = vunpack.c.l.b16 %v631
    %v732 = vunpack.c.l.b16 %v632
    %v733 = vunpack.c.l.b16 %v633
    %v734 = vunpack.c.l.b16 %v634
    %v735 = vunpack.c.l.b16 %v635
    %v736 = vunpack.c.l.b16 %v636
    %v737 = vunpack.c.l.b16 %v637
    %v738 = vunpack.c.l.b16 %v638
    %v739 = vunpack.c.l.b16 %v639
    %v740 = vunpack.c.l.b16 %v640
    %v741 = vunpack.c.l.b16 %v641
    %v742 = vunpack.c.l.b16 %v642
    %v743 = vunpack.c.l.b16 %v643
    %v744 = vunpack.c.l.b16 %v644
    %v745 = vunpack.c.l.b16 %v645
    %v746 = vunpack.c.l.b16 %v646
    %v747 = vunpack.c.l.b16 %v647
    %v748 = vunpack.c.l.b16 %v648
    %v749 = vunpack.c.l.b16 %v649
    %v750 = vunpack.c.l.b16 %v650
    %v751 = vunpack.c.l.b16 %v651
    %v752 = vunpack.c.l.b16 %v652
    %v753 = vunpack.c.l.b16 %v653
    %v754 = vunpack.c.l.b16 %v654
    %v755 = vunpack.c.l.b16 %v655
    %v756 = vunpack.c.l.b16 %v656
    %v757 = vunpack.c.l.b16 %v657
    %v758 = vunpack.c.l.b16 %v658
    %v759 = vunpack.c.l.b16 %v659
    %v760 = vunpack.c.l.b16 %v660
    %v761 = vunpack.c.l.b16 %v661
    %v762 = vunpack.c.l.b16 %v662
    %v763 = vunpack.c.l.b16 %v663
    %v764 = vunpack.c.l.b16 %v664
    %v765 = vunpack.c.l.b16 %v665
    %v766 = vunpack.c.l.b16 %v666
    %v767 = vunpack.c.l.b16 %v667
    %v768 = vunpack.c.l.b16 %v668
    %v769 = vunpack.c.l.b16 %v669
    %v770 = vunpack.c.l.b16 %v670
    %v771 = vunpack.c.l.b16 %v671
    %v772 = vunpack.c.l.b16 %v672
    %v773 = vpack.c.b16 %v726, %v725
    %v774 = vpack.c.b16 %v728, %v727
    %v775 = vpack.c.b16 %v730, %v729
    %v776 = vpack.c.b16 %v732, %v731
    %v777 = vpack.c.b16 %v734, %v733
    %v778 = vpack.c.b16 %v736, %v735
    %v779 = vpack.c.b16 %v738, %v737
    %v780 = vpack.c.b16 %v740, %v739
    %v781 = vpack.c.b16 %v742, %v741
    %v782 = vpack.c.b16 %v744, %v743
    %v783 = vpack.c.b16 %v746, %v745
    %v784 = vpack.c.b16 %v748, %v747
    %v785 = vpack.c.b16 %v750, %v749
    %v786 = vpack.c.b16 %v752, %v751
    %v787 = vpack.c.b16 %v754, %v753
    %v788 = vpack.c.b16 %v756, %v755
    %v789 = vpack.c.b16 %v758, %v757
    %v790 = vpack.c.b16 %v760, %v759
    %v791 = vpack.c.b16 %v762, %v761
    %v792 = vpack.c.b16 %v764, %v763
    %v793 = vpack.c.b16 %v766, %v765
    %v794 = vpack.c.b16 %v768, %v767
    %v795 = vpack.c.b16 %v770, %v769
    %v796 = vpack.c.b16 %v772, %v771
    %821 = vmatprep.subr.bf16.mxu0 0
    %822 = vmatpush1.bf16.msra.mxu0 %v773
    %823 = vmatprep.subr.bf16.mxu0 0
    %824 = vmatpush1.bf16.msra.mxu0 %v774
    %825 = vmatprep.subr.bf16.mxu0 0
    %826 = vmatpush1.bf16.msra.mxu0 %v775
    %827 = vmatprep.subr.bf16.mxu0 0
    %828 = vmatpush1.bf16.msra.mxu0 %v776
    %829 = vmatprep.subr.bf16.mxu0 0
    %830 = vmatpush1.bf16.msra.mxu0 %v777
    %831 = vmatprep.subr.bf16.mxu0 0
    %832 = vmatpush1.bf16.msra.mxu0 %v778
    %833 = vmatprep.subr.bf16.mxu0 0
    %834 = vmatpush1.bf16.msra.mxu0 %v779
    %835 = vmatprep.subr.bf16.mxu0 0
    %836 = vmatpush1.bf16.msra.mxu0 %v780
    %837 = vmatprep.subr.bf16.mxu0 0
    %838 = vmatpush1.bf16.msra.mxu0 %v781
    %839 = vmatprep.subr.bf16.mxu0 0
    %840 = vmatpush1.bf16.msra.mxu0 %v782
    %841 = vmatprep.subr.bf16.mxu0 0
    %842 = vmatpush1.bf16.msra.mxu0 %v783
    %843 = vmatprep.subr.bf16.mxu0 0
    %844 = vmatpush1.bf16.msra.mxu0 %v784
    %845 = vmatprep.subr.bf16.mxu0 0
    %846 = vmatpush1.bf16.msra.mxu0 %v785
    %847 = vmatprep.subr.bf16.mxu0 0
    %848 = vmatpush1.bf16.msra.mxu0 %v786
    %849 = vmatprep.subr.bf16.mxu0 0
    %850 = vmatpush1.bf16.msra.mxu0 %v787
    %851 = vmatprep.subr.bf16.mxu0 0
    %852 = vmatpush1.bf16.msra.mxu0 %v788
    %853 = vmatprep.mubr.bf16.mxu0 %v623
    %854 = vmatmul.mubr.bf16.gmra.mrb[0].mxu0 %v622
    %v855 = vpop.f32.mrb[0].mxu0
    %v856 = vadd.f32 %v676, %v855
    %v857 = vpop.f32.mrb[0].mxu0
    %v858 = vpop.f32.mrb[0].mxu0
    %v859 = vadd.f32 %v676, %v858
    %v860 = vpop.f32.mrb[0].mxu0
    %861 = vdwg.mxu0
    %862 = vmatprep.subr.bf16.mxu0 0
    %863 = vmatpush1.bf16.msra.mxu0 %v789
    %864 = vmatprep.subr.bf16.mxu0 0
    %865 = vmatpush1.bf16.msra.mxu0 %v790
    %866 = vmatprep.subr.bf16.mxu0 0
    %867 = vmatpush1.bf16.msra.mxu0 %v791
    %868 = vmatprep.subr.bf16.mxu0 0
    %869 = vmatpush1.bf16.msra.mxu0 %v792
    %870 = vmatprep.subr.bf16.mxu0 0
    %871 = vmatpush1.bf16.msra.mxu0 %v793
    %872 = vmatprep.subr.bf16.mxu0 0
    %873 = vmatpush1.bf16.msra.mxu0 %v794
    %874 = vmatprep.subr.bf16.mxu0 0
    %875 = vmatpush1.bf16.msra.mxu0 %v795
    %876 = vmatprep.subr.bf16.mxu0 0
    %877 = vmatpush1.bf16.msra.mxu0 %v796
    %878 = vmatprep.subr.bf16.mxu0 0
    %879 = vmatpush1.bf16.msra.mxu0 0
    %880 = vmatprep.subr.bf16.mxu0 0
    %881 = vmatpush1.bf16.msra.mxu0 0
    %882 = vmatprep.subr.bf16.mxu0 0
    %883 = vmatpush1.bf16.msra.mxu0 0
    %884 = vmatprep.subr.bf16.mxu0 0
    %885 = vmatpush1.bf16.msra.mxu0 0
    %886 = vmatprep.subr.bf16.mxu0 0
    %887 = vmatpush1.bf16.msra.mxu0 0
    %888 = vmatprep.subr.bf16.mxu0 0
    %889 = vmatpush1.bf16.msra.mxu0 0
    %890 = vmatprep.subr.bf16.mxu0 0
    %891 = vmatpush1.bf16.msra.mxu0 0
    %892 = vmatprep.subr.bf16.mxu0 0
    %893 = vmatpush1.bf16.msra.mxu0 0
    %894 = vmatprep.mubr.bf16.mxu0 0
    %895 = vmatmul.mubr.bf16.gmra.mrb[0].mxu0 %v624
    %v896 = vpop.f32.mrb[0].mxu0
    %v897 = vadd.f32 %v856, %v896
    %v898 = vpop.f32.mrb[0].mxu0
    %v899 = vpop.f32.mrb[0].mxu0
    %v900 = vadd.f32 %v859, %v899
    %v901 = vpop.f32.mrb[0].mxu0
    %902 = vdwg.mxu0
    %v903 = vsel %vm460, %v900, 0.0
    %v904 = vadd.f32 %v897, %v903
    %v905 = vrot.slane %v904, 4
    %v906 = vadd.f32 %v904, %v905
    %v907 = vrot.slane %v906, 2
    %v908 = vadd.f32 %v906, %v907
    %v909 = vrot.slane %v908, 1
    %v910 = vadd.f32 %v908, %v909
    %v911 = vmul.f32 %v897, %v897
    %v912 = vmul.f32 %v900, %v900
    %v913 = vsel %vm460, %v912, 0.0
    %v914 = vadd.f32 %v911, %v913
    %v915 = vrot.slane %v914, 4
    %v916 = vadd.f32 %v914, %v915
    %v917 = vrot.slane %v916, 2
    %v918 = vadd.f32 %v916, %v917
    %v919 = vrot.slane %v918, 1
    %v920 = vadd.f32 %v918, %v919
    %vm921 = vcmask 1040384
    %v922 = vsel %vm921, %v910, %v920
    %923 = vmatprep.subr.mxu0 0.0
    %v924 = vand.u32 %v81, 4294901760
    %925 = vmatpush1.msra.mxu0 %v924
    %926 = vmatprep.subr.mxu0 0.0
    %v927 = vand.u32 %v82, 4294901760
    %928 = vmatpush1.msra.mxu0 %v927
    %929 = vmatprep.subr.mxu0 0.0
    %v930 = vand.u32 %v83, 4294901760
    %931 = vmatpush1.msra.mxu0 %v930
    %932 = vmatprep.subr.mxu0 0.0
    %v933 = vand.u32 %v84, 4294901760
    %934 = vmatpush1.msra.mxu0 %v933
    %935 = vmatprep.subr.mxu0 0.0
    %v936 = vand.u32 %v85, 4294901760
    %937 = vmatpush1.msra.mxu0 %v936
    %938 = vmatprep.subr.mxu0 0.0
    %v939 = vand.u32 %v86, 4294901760
    %940 = vmatpush1.msra.mxu0 %v939
    %941 = vmatprep.subr.mxu0 0.0
    %v942 = vand.u32 %v87, 4294901760
    %943 = vmatpush1.msra.mxu0 %v942
    %944 = vmatprep.subr.mxu0 0.0
    %v945 = vand.u32 %v88, 4294901760
    %946 = vmatpush1.msra.mxu0 %v945
    %947 = vmatprep.subr.mxu0 0.0
    %v948 = vand.u32 %v89, 4294901760
    %949 = vmatpush1.msra.mxu0 %v948
    %950 = vmatprep.subr.mxu0 0.0
    %v951 = vand.u32 %v90, 4294901760
    %952 = vmatpush1.msra.mxu0 %v951
    %953 = vmatprep.subr.mxu0 0.0
    %v954 = vand.u32 %v91, 4294901760
    %955 = vmatpush1.msra.mxu0 %v954
    %956 = vmatprep.subr.mxu0 0.0
    %v957 = vand.u32 %v92, 4294901760
    %958 = vmatpush1.msra.mxu0 %v957
    %959 = vmatprep.subr.mxu0 0.0
    %v960 = vand.u32 %v93, 4294901760
    %961 = vmatpush1.msra.mxu0 %v960
    %962 = vmatprep.subr.mxu0 0.0
    %v963 = vand.u32 %v94, 4294901760
    %964 = vmatpush1.msra.mxu0 %v963
    %965 = vmatprep.subr.mxu0 0.0
    %v966 = vand.u32 %v95, 4294901760
    %967 = vmatpush1.msra.mxu0 %v966
    %968 = vmatprep.subr.mxu0 0.0
    %v969 = vand.u32 %v96, 4294901760
    %970 = vmatpush1.msra.mxu0 %v969
    %971 = vmatprep.subr.mxu0 0.0
    %972 = vmatpush1.msra.mxu0 0.0
    %973 = vmatprep.subr.mxu0 0.0
    %974 = vmatpush1.msra.mxu0 0.0
    %975 = vmatprep.subr.mxu0 0.0
    %976 = vmatpush1.msra.mxu0 0.0
    %977 = vmatprep.subr.mxu0 0.0
    %978 = vmatpush1.msra.mxu0 0.0
    %979 = vmatprep.subr.mxu0 0.0
    %980 = vmatpush1.msra.mxu0 0.0
    %981 = vmatprep.subr.mxu0 0.0
    %982 = vmatpush1.msra.mxu0 0.0
    %983 = vmatprep.subr.mxu0 0.0
    %984 = vmatpush1.msra.mxu0 0.0
    %985 = vmatprep.subr.mxu0 0.0
    %986 = vmatpush1.msra.mxu0 0.0
    %987 = vmatprep.subr.mxu0 0.0
    %988 = vmatpush1.msra.mxu0 0.0
    %989 = vmatprep.subr.mxu0 0.0
    %990 = vmatpush1.msra.mxu0 0.0
    %991 = vmatprep.subr.mxu0 0.0
    %992 = vmatpush1.msra.mxu0 0.0
    %993 = vmatprep.subr.mxu0 0.0
    %994 = vmatpush1.msra.mxu0 0.0
    %995 = vmatprep.subr.mxu0 0.0
    %996 = vmatpush1.msra.mxu0 0.0
    %997 = vmatprep.subr.mxu0 0.0
    %998 = vmatpush1.msra.mxu0 0.0
    %999 = vmatprep.subr.mxu0 0.0
    %1000 = vmatpush1.msra.mxu0 0.0
    %1001 = vmatprep.subr.mxu0 0.0
    %1002 = vmatpush1.msra.mxu0 0.0
    %1003 = vmatprep.mubr.f32.mxu0 0.0
    %v1004 = vand.u32 %v922, 4294901760
    %v1005 = vsub.f32 %v922, %v1004
    %v1006 = vand.u32 %v1005, 4294901760
    %v1007 = vsub.f32 %v1005, %v1006
    %v1008 = vand.u32 %v1007, 4294901760
    %1009 = vmatmul.mubr.f32.gmra.mrb[0].mxu0 %v1008
    %v1010 = vpop.f32.mrb[0].mxu0
    %v1011 = vadd.f32 0.0, %v1010
    %v1012 = vpop.f32.mrb[0].mxu0
    %1013 = vdwg.mxu0
    %1014 = vmatprep.subr.mxu0 0.0
    %v1015 = vand.u32 %v81, 4294901760
    %v1016 = vsub.f32 %v81, %v1015
    %v1017 = vand.u32 %v1016, 4294901760
    %v1018 = vsub.f32 %v1016, %v1017
    %v1019 = vand.u32 %v1018, 4294901760
    %1020 = vmatpush1.msra.mxu0 %v1019
    %1021 = vmatprep.subr.mxu0 0.0
    %v1022 = vand.u32 %v82, 4294901760
    %v1023 = vsub.f32 %v82, %v1022
    %v1024 = vand.u32 %v1023, 4294901760
    %v1025 = vsub.f32 %v1023, %v1024
    %v1026 = vand.u32 %v1025, 4294901760
    %1027 = vmatpush1.msra.mxu0 %v1026
    %1028 = vmatprep.subr.mxu0 0.0
    %v1029 = vand.u32 %v83, 4294901760
    %v1030 = vsub.f32 %v83, %v1029
    %v1031 = vand.u32 %v1030, 4294901760
    %v1032 = vsub.f32 %v1030, %v1031
    %v1033 = vand.u32 %v1032, 4294901760
    %1034 = vmatpush1.msra.mxu0 %v1033
    %1035 = vmatprep.subr.mxu0 0.0
    %v1036 = vand.u32 %v84, 4294901760
    %v1037 = vsub.f32 %v84, %v1036
    %v1038 = vand.u32 %v1037, 4294901760
    %v1039 = vsub.f32 %v1037, %v1038
    %v1040 = vand.u32 %v1039, 4294901760
    %1041 = vmatpush1.msra.mxu0 %v1040
    %1042 = vmatprep.subr.mxu0 0.0
    %v1043 = vand.u32 %v85, 4294901760
    %v1044 = vsub.f32 %v85, %v1043
    %v1045 = vand.u32 %v1044, 4294901760
    %v1046 = vsub.f32 %v1044, %v1045
    %v1047 = vand.u32 %v1046, 4294901760
    %1048 = vmatpush1.msra.mxu0 %v1047
    %1049 = vmatprep.subr.mxu0 0.0
    %v1050 = vand.u32 %v86, 4294901760
    %v1051 = vsub.f32 %v86, %v1050
    %v1052 = vand.u32 %v1051, 4294901760
    %v1053 = vsub.f32 %v1051, %v1052
    %v1054 = vand.u32 %v1053, 4294901760
    %1055 = vmatpush1.msra.mxu0 %v1054
    %1056 = vmatprep.subr.mxu0 0.0
    %v1057 = vand.u32 %v87, 4294901760
    %v1058 = vsub.f32 %v87, %v1057
    %v1059 = vand.u32 %v1058, 4294901760
    %v1060 = vsub.f32 %v1058, %v1059
    %v1061 = vand.u32 %v1060, 4294901760
    %1062 = vmatpush1.msra.mxu0 %v1061
    %1063 = vmatprep.subr.mxu0 0.0
    %v1064 = vand.u32 %v88, 4294901760
    %v1065 = vsub.f32 %v88, %v1064
    %v1066 = vand.u32 %v1065, 4294901760
    %v1067 = vsub.f32 %v1065, %v1066
    %v1068 = vand.u32 %v1067, 4294901760
    %1069 = vmatpush1.msra.mxu0 %v1068
    %1070 = vmatprep.subr.mxu0 0.0
    %v1071 = vand.u32 %v89, 4294901760
    %v1072 = vsub.f32 %v89, %v1071
    %v1073 = vand.u32 %v1072, 4294901760
    %v1074 = vsub.f32 %v1072, %v1073
    %v1075 = vand.u32 %v1074, 4294901760
    %1076 = vmatpush1.msra.mxu0 %v1075
    %1077 = vmatprep.subr.mxu0 0.0
    %v1078 = vand.u32 %v90, 4294901760
    %v1079 = vsub.f32 %v90, %v1078
    %v1080 = vand.u32 %v1079, 4294901760
    %v1081 = vsub.f32 %v1079, %v1080
    %v1082 = vand.u32 %v1081, 4294901760
    %1083 = vmatpush1.msra.mxu0 %v1082
    %1084 = vmatprep.subr.mxu0 0.0
    %v1085 = vand.u32 %v91, 4294901760
    %v1086 = vsub.f32 %v91, %v1085
    %v1087 = vand.u32 %v1086, 4294901760
    %v1088 = vsub.f32 %v1086, %v1087
    %v1089 = vand.u32 %v1088, 4294901760
    %1090 = vmatpush1.msra.mxu0 %v1089
    %1091 = vmatprep.subr.mxu0 0.0
    %v1092 = vand.u32 %v92, 4294901760
    %v1093 = vsub.f32 %v92, %v1092
    %v1094 = vand.u32 %v1093, 4294901760
    %v1095 = vsub.f32 %v1093, %v1094
    %v1096 = vand.u32 %v1095, 4294901760
    %1097 = vmatpush1.msra.mxu0 %v1096
    %1098 = vmatprep.subr.mxu0 0.0
    %v1099 = vand.u32 %v93, 4294901760
    %v1100 = vsub.f32 %v93, %v1099
    %v1101 = vand.u32 %v1100, 4294901760
    %v1102 = vsub.f32 %v1100, %v1101
    %v1103 = vand.u32 %v1102, 4294901760
    %1104 = vmatpush1.msra.mxu0 %v1103
    %1105 = vmatprep.subr.mxu0 0.0
    %v1106 = vand.u32 %v94, 4294901760
    %v1107 = vsub.f32 %v94, %v1106
    %v1108 = vand.u32 %v1107, 4294901760
    %v1109 = vsub.f32 %v1107, %v1108
    %v1110 = vand.u32 %v1109, 4294901760
    %1111 = vmatpush1.msra.mxu0 %v1110
    %1112 = vmatprep.subr.mxu0 0.0
    %v1113 = vand.u32 %v95, 4294901760
    %v1114 = vsub.f32 %v95, %v1113
    %v1115 = vand.u32 %v1114, 4294901760
    %v1116 = vsub.f32 %v1114, %v1115
    %v1117 = vand.u32 %v1116, 4294901760
    %1118 = vmatpush1.msra.mxu0 %v1117
    %1119 = vmatprep.subr.mxu0 0.0
    %v1120 = vand.u32 %v96, 4294901760
    %v1121 = vsub.f32 %v96, %v1120
    %v1122 = vand.u32 %v1121, 4294901760
    %v1123 = vsub.f32 %v1121, %v1122
    %v1124 = vand.u32 %v1123, 4294901760
    %1125 = vmatpush1.msra.mxu0 %v1124
    %1126 = vmatprep.subr.mxu0 0.0
    %1127 = vmatpush1.msra.mxu0 0.0
    %1128 = vmatprep.subr.mxu0 0.0
    %1129 = vmatpush1.msra.mxu0 0.0
    %1130 = vmatprep.subr.mxu0 0.0
    %1131 = vmatpush1.msra.mxu0 0.0
    %1132 = vmatprep.subr.mxu0 0.0
    %1133 = vmatpush1.msra.mxu0 0.0
    %1134 = vmatprep.subr.mxu0 0.0
    %1135 = vmatpush1.msra.mxu0 0.0
    %1136 = vmatprep.subr.mxu0 0.0
    %1137 = vmatpush1.msra.mxu0 0.0
    %1138 = vmatprep.subr.mxu0 0.0
    %1139 = vmatpush1.msra.mxu0 0.0
    %1140 = vmatprep.subr.mxu0 0.0
    %1141 = vmatpush1.msra.mxu0 0.0
    %1142 = vmatprep.subr.mxu0 0.0
    %1143 = vmatpush1.msra.mxu0 0.0
    %1144 = vmatprep.subr.mxu0 0.0
    %1145 = vmatpush1.msra.mxu0 0.0
    %1146 = vmatprep.subr.mxu0 0.0
    %1147 = vmatpush1.msra.mxu0 0.0
    %1148 = vmatprep.subr.mxu0 0.0
    %1149 = vmatpush1.msra.mxu0 0.0
    %1150 = vmatprep.subr.mxu0 0.0
    %1151 = vmatpush1.msra.mxu0 0.0
    %1152 = vmatprep.subr.mxu0 0.0
    %1153 = vmatpush1.msra.mxu0 0.0
    %1154 = vmatprep.subr.mxu0 0.0
    %1155 = vmatpush1.msra.mxu0 0.0
    %1156 = vmatprep.subr.mxu0 0.0
    %1157 = vmatpush1.msra.mxu0 0.0
    %1158 = vmatprep.mubr.f32.mxu0 0.0
    %v1159 = vand.u32 %v922, 4294901760
    %1160 = vmatmul.mubr.f32.gmra.mrb[0].mxu0 %v1159
    %v1161 = vpop.f32.mrb[0].mxu0
    %v1162 = vadd.f32 %v1011, %v1161
    %v1163 = vpop.f32.mrb[0].mxu0
    %1164 = vdwg.mxu0
    %1165 = vmatprep.subr.mxu0 0.0
    %v1166 = vand.u32 %v81, 4294901760
    %v1167 = vsub.f32 %v81, %v1166
    %1168 = vmatpush1.msra.mxu0 %v1167
    %1169 = vmatprep.subr.mxu0 0.0
    %v1170 = vand.u32 %v82, 4294901760
    %v1171 = vsub.f32 %v82, %v1170
    %1172 = vmatpush1.msra.mxu0 %v1171
    %1173 = vmatprep.subr.mxu0 0.0
    %v1174 = vand.u32 %v83, 4294901760
    %v1175 = vsub.f32 %v83, %v1174
    %1176 = vmatpush1.msra.mxu0 %v1175
    %1177 = vmatprep.subr.mxu0 0.0
    %v1178 = vand.u32 %v84, 4294901760
    %v1179 = vsub.f32 %v84, %v1178
    %1180 = vmatpush1.msra.mxu0 %v1179
    %1181 = vmatprep.subr.mxu0 0.0
    %v1182 = vand.u32 %v85, 4294901760
    %v1183 = vsub.f32 %v85, %v1182
    %1184 = vmatpush1.msra.mxu0 %v1183
    %1185 = vmatprep.subr.mxu0 0.0
    %v1186 = vand.u32 %v86, 4294901760
    %v1187 = vsub.f32 %v86, %v1186
    %1188 = vmatpush1.msra.mxu0 %v1187
    %1189 = vmatprep.subr.mxu0 0.0
    %v1190 = vand.u32 %v87, 4294901760
    %v1191 = vsub.f32 %v87, %v1190
    %1192 = vmatpush1.msra.mxu0 %v1191
    %1193 = vmatprep.subr.mxu0 0.0
    %v1194 = vand.u32 %v88, 4294901760
    %v1195 = vsub.f32 %v88, %v1194
    %1196 = vmatpush1.msra.mxu0 %v1195
    %1197 = vmatprep.subr.mxu0 0.0
    %v1198 = vand.u32 %v89, 4294901760
    %v1199 = vsub.f32 %v89, %v1198
    %1200 = vmatpush1.msra.mxu0 %v1199
    %1201 = vmatprep.subr.mxu0 0.0
    %v1202 = vand.u32 %v90, 4294901760
    %v1203 = vsub.f32 %v90, %v1202
    %1204 = vmatpush1.msra.mxu0 %v1203
    %1205 = vmatprep.subr.mxu0 0.0
    %v1206 = vand.u32 %v91, 4294901760
    %v1207 = vsub.f32 %v91, %v1206
    %1208 = vmatpush1.msra.mxu0 %v1207
    %1209 = vmatprep.subr.mxu0 0.0
    %v1210 = vand.u32 %v92, 4294901760
    %v1211 = vsub.f32 %v92, %v1210
    %1212 = vmatpush1.msra.mxu0 %v1211
    %1213 = vmatprep.subr.mxu0 0.0
    %v1214 = vand.u32 %v93, 4294901760
    %v1215 = vsub.f32 %v93, %v1214
    %1216 = vmatpush1.msra.mxu0 %v1215
    %1217 = vmatprep.subr.mxu0 0.0
    %v1218 = vand.u32 %v94, 4294901760
    %v1219 = vsub.f32 %v94, %v1218
    %1220 = vmatpush1.msra.mxu0 %v1219
    %1221 = vmatprep.subr.mxu0 0.0
    %v1222 = vand.u32 %v95, 4294901760
    %v1223 = vsub.f32 %v95, %v1222
    %1224 = vmatpush1.msra.mxu0 %v1223
    %1225 = vmatprep.subr.mxu0 0.0
    %v1226 = vand.u32 %v96, 4294901760
    %v1227 = vsub.f32 %v96, %v1226
    %1228 = vmatpush1.msra.mxu0 %v1227
    %1229 = vmatprep.subr.mxu0 0.0
    %1230 = vmatpush1.msra.mxu0 0.0
    %1231 = vmatprep.subr.mxu0 0.0
    %1232 = vmatpush1.msra.mxu0 0.0
    %1233 = vmatprep.subr.mxu0 0.0
    %1234 = vmatpush1.msra.mxu0 0.0
    %1235 = vmatprep.subr.mxu0 0.0
    %1236 = vmatpush1.msra.mxu0 0.0
    %1237 = vmatprep.subr.mxu0 0.0
    %1238 = vmatpush1.msra.mxu0 0.0
    %1239 = vmatprep.subr.mxu0 0.0
    %1240 = vmatpush1.msra.mxu0 0.0
    %1241 = vmatprep.subr.mxu0 0.0
    %1242 = vmatpush1.msra.mxu0 0.0
    %1243 = vmatprep.subr.mxu0 0.0
    %1244 = vmatpush1.msra.mxu0 0.0
    %1245 = vmatprep.subr.mxu0 0.0
    %1246 = vmatpush1.msra.mxu0 0.0
    %1247 = vmatprep.subr.mxu0 0.0
    %1248 = vmatpush1.msra.mxu0 0.0
    %1249 = vmatprep.subr.mxu0 0.0
    %1250 = vmatpush1.msra.mxu0 0.0
    %1251 = vmatprep.subr.mxu0 0.0
    %1252 = vmatpush1.msra.mxu0 0.0
    %1253 = vmatprep.subr.mxu0 0.0
    %1254 = vmatpush1.msra.mxu0 0.0
    %1255 = vmatprep.subr.mxu0 0.0
    %1256 = vmatpush1.msra.mxu0 0.0
    %1257 = vmatprep.subr.mxu0 0.0
    %1258 = vmatpush1.msra.mxu0 0.0
    %1259 = vmatprep.subr.mxu0 0.0
    %1260 = vmatpush1.msra.mxu0 0.0
    %1261 = vmatprep.mubr.f32.mxu0 0.0
    %v1262 = vand.u32 %v922, 4294901760
    %v1263 = vsub.f32 %v922, %v1262
    %1264 = vmatmul.mubr.f32.gmra.mrb[0].mxu0 %v1263
    %v1265 = vpop.f32.mrb[0].mxu0
    %v1266 = vadd.f32 %v1162, %v1265
    %v1267 = vpop.f32.mrb[0].mxu0
    %1268 = vdwg.mxu0
    %1269 = vmatprep.subr.mxu0 0.0
    %v1270 = vand.u32 %v81, 4294901760
    %1271 = vmatpush1.msra.mxu0 %v1270
    %1272 = vmatprep.subr.mxu0 0.0
    %v1273 = vand.u32 %v82, 4294901760
    %1274 = vmatpush1.msra.mxu0 %v1273
    %1275 = vmatprep.subr.mxu0 0.0
    %v1276 = vand.u32 %v83, 4294901760
    %1277 = vmatpush1.msra.mxu0 %v1276
    %1278 = vmatprep.subr.mxu0 0.0
    %v1279 = vand.u32 %v84, 4294901760
    %1280 = vmatpush1.msra.mxu0 %v1279
    %1281 = vmatprep.subr.mxu0 0.0
    %v1282 = vand.u32 %v85, 4294901760
    %1283 = vmatpush1.msra.mxu0 %v1282
    %1284 = vmatprep.subr.mxu0 0.0
    %v1285 = vand.u32 %v86, 4294901760
    %1286 = vmatpush1.msra.mxu0 %v1285
    %1287 = vmatprep.subr.mxu0 0.0
    %v1288 = vand.u32 %v87, 4294901760
    %1289 = vmatpush1.msra.mxu0 %v1288
    %1290 = vmatprep.subr.mxu0 0.0
    %v1291 = vand.u32 %v88, 4294901760
    %1292 = vmatpush1.msra.mxu0 %v1291
    %1293 = vmatprep.subr.mxu0 0.0
    %v1294 = vand.u32 %v89, 4294901760
    %1295 = vmatpush1.msra.mxu0 %v1294
    %1296 = vmatprep.subr.mxu0 0.0
    %v1297 = vand.u32 %v90, 4294901760
    %1298 = vmatpush1.msra.mxu0 %v1297
    %1299 = vmatprep.subr.mxu0 0.0
    %v1300 = vand.u32 %v91, 4294901760
    %1301 = vmatpush1.msra.mxu0 %v1300
    %1302 = vmatprep.subr.mxu0 0.0
    %v1303 = vand.u32 %v92, 4294901760
    %1304 = vmatpush1.msra.mxu0 %v1303
    %1305 = vmatprep.subr.mxu0 0.0
    %v1306 = vand.u32 %v93, 4294901760
    %1307 = vmatpush1.msra.mxu0 %v1306
    %1308 = vmatprep.subr.mxu0 0.0
    %v1309 = vand.u32 %v94, 4294901760
    %1310 = vmatpush1.msra.mxu0 %v1309
    %1311 = vmatprep.subr.mxu0 0.0
    %v1312 = vand.u32 %v95, 4294901760
    %1313 = vmatpush1.msra.mxu0 %v1312
    %1314 = vmatprep.subr.mxu0 0.0
    %v1315 = vand.u32 %v96, 4294901760
    %1316 = vmatpush1.msra.mxu0 %v1315
    %1317 = vmatprep.subr.mxu0 0.0
    %1318 = vmatpush1.msra.mxu0 0.0
    %1319 = vmatprep.subr.mxu0 0.0
    %1320 = vmatpush1.msra.mxu0 0.0
    %1321 = vmatprep.subr.mxu0 0.0
    %1322 = vmatpush1.msra.mxu0 0.0
    %1323 = vmatprep.subr.mxu0 0.0
    %1324 = vmatpush1.msra.mxu0 0.0
    %1325 = vmatprep.subr.mxu0 0.0
    %1326 = vmatpush1.msra.mxu0 0.0
    %1327 = vmatprep.subr.mxu0 0.0
    %1328 = vmatpush1.msra.mxu0 0.0
    %1329 = vmatprep.subr.mxu0 0.0
    %1330 = vmatpush1.msra.mxu0 0.0
    %1331 = vmatprep.subr.mxu0 0.0
    %1332 = vmatpush1.msra.mxu0 0.0
    %1333 = vmatprep.subr.mxu0 0.0
    %1334 = vmatpush1.msra.mxu0 0.0
    %1335 = vmatprep.subr.mxu0 0.0
    %1336 = vmatpush1.msra.mxu0 0.0
    %1337 = vmatprep.subr.mxu0 0.0
    %1338 = vmatpush1.msra.mxu0 0.0
    %1339 = vmatprep.subr.mxu0 0.0
    %1340 = vmatpush1.msra.mxu0 0.0
    %1341 = vmatprep.subr.mxu0 0.0
    %1342 = vmatpush1.msra.mxu0 0.0
    %1343 = vmatprep.subr.mxu0 0.0
    %1344 = vmatpush1.msra.mxu0 0.0
    %1345 = vmatprep.subr.mxu0 0.0
    %1346 = vmatpush1.msra.mxu0 0.0
    %1347 = vmatprep.subr.mxu0 0.0
    %1348 = vmatpush1.msra.mxu0 0.0
    %1349 = vmatprep.mubr.f32.mxu0 0.0
    %v1350 = vand.u32 %v922, 4294901760
    %v1351 = vsub.f32 %v922, %v1350
    %v1352 = vand.u32 %v1351, 4294901760
    %1353 = vmatmul.mubr.f32.gmra.mrb[0].mxu0 %v1352
    %v1354 = vpop.f32.mrb[0].mxu0
    %v1355 = vadd.f32 %v1266, %v1354
    %v1356 = vpop.f32.mrb[0].mxu0
    %1357 = vdwg.mxu0
    %1358 = vmatprep.subr.mxu0 0.0
    %v1359 = vand.u32 %v81, 4294901760
    %v1360 = vsub.f32 %v81, %v1359
    %v1361 = vand.u32 %v1360, 4294901760
    %1362 = vmatpush1.msra.mxu0 %v1361
    %1363 = vmatprep.subr.mxu0 0.0
    %v1364 = vand.u32 %v82, 4294901760
    %v1365 = vsub.f32 %v82, %v1364
    %v1366 = vand.u32 %v1365, 4294901760
    %1367 = vmatpush1.msra.mxu0 %v1366
    %1368 = vmatprep.subr.mxu0 0.0
    %v1369 = vand.u32 %v83, 4294901760
    %v1370 = vsub.f32 %v83, %v1369
    %v1371 = vand.u32 %v1370, 4294901760
    %1372 = vmatpush1.msra.mxu0 %v1371
    %1373 = vmatprep.subr.mxu0 0.0
    %v1374 = vand.u32 %v84, 4294901760
    %v1375 = vsub.f32 %v84, %v1374
    %v1376 = vand.u32 %v1375, 4294901760
    %1377 = vmatpush1.msra.mxu0 %v1376
    %1378 = vmatprep.subr.mxu0 0.0
    %v1379 = vand.u32 %v85, 4294901760
    %v1380 = vsub.f32 %v85, %v1379
    %v1381 = vand.u32 %v1380, 4294901760
    %1382 = vmatpush1.msra.mxu0 %v1381
    %1383 = vmatprep.subr.mxu0 0.0
    %v1384 = vand.u32 %v86, 4294901760
    %v1385 = vsub.f32 %v86, %v1384
    %v1386 = vand.u32 %v1385, 4294901760
    %1387 = vmatpush1.msra.mxu0 %v1386
    %1388 = vmatprep.subr.mxu0 0.0
    %v1389 = vand.u32 %v87, 4294901760
    %v1390 = vsub.f32 %v87, %v1389
    %v1391 = vand.u32 %v1390, 4294901760
    %1392 = vmatpush1.msra.mxu0 %v1391
    %1393 = vmatprep.subr.mxu0 0.0
    %v1394 = vand.u32 %v88, 4294901760
    %v1395 = vsub.f32 %v88, %v1394
    %v1396 = vand.u32 %v1395, 4294901760
    %1397 = vmatpush1.msra.mxu0 %v1396
    %1398 = vmatprep.subr.mxu0 0.0
    %v1399 = vand.u32 %v89, 4294901760
    %v1400 = vsub.f32 %v89, %v1399
    %v1401 = vand.u32 %v1400, 4294901760
    %1402 = vmatpush1.msra.mxu0 %v1401
    %1403 = vmatprep.subr.mxu0 0.0
    %v1404 = vand.u32 %v90, 4294901760
    %v1405 = vsub.f32 %v90, %v1404
    %v1406 = vand.u32 %v1405, 4294901760
    %1407 = vmatpush1.msra.mxu0 %v1406
    %1408 = vmatprep.subr.mxu0 0.0
    %v1409 = vand.u32 %v91, 4294901760
    %v1410 = vsub.f32 %v91, %v1409
    %v1411 = vand.u32 %v1410, 4294901760
    %1412 = vmatpush1.msra.mxu0 %v1411
    %1413 = vmatprep.subr.mxu0 0.0
    %v1414 = vand.u32 %v92, 4294901760
    %v1415 = vsub.f32 %v92, %v1414
    %v1416 = vand.u32 %v1415, 4294901760
    %1417 = vmatpush1.msra.mxu0 %v1416
    %1418 = vmatprep.subr.mxu0 0.0
    %v1419 = vand.u32 %v93, 4294901760
    %v1420 = vsub.f32 %v93, %v1419
    %v1421 = vand.u32 %v1420, 4294901760
    %1422 = vmatpush1.msra.mxu0 %v1421
    %1423 = vmatprep.subr.mxu0 0.0
    %v1424 = vand.u32 %v94, 4294901760
    %v1425 = vsub.f32 %v94, %v1424
    %v1426 = vand.u32 %v1425, 4294901760
    %1427 = vmatpush1.msra.mxu0 %v1426
    %1428 = vmatprep.subr.mxu0 0.0
    %v1429 = vand.u32 %v95, 4294901760
    %v1430 = vsub.f32 %v95, %v1429
    %v1431 = vand.u32 %v1430, 4294901760
    %1432 = vmatpush1.msra.mxu0 %v1431
    %1433 = vmatprep.subr.mxu0 0.0
    %v1434 = vand.u32 %v96, 4294901760
    %v1435 = vsub.f32 %v96, %v1434
    %v1436 = vand.u32 %v1435, 4294901760
    %1437 = vmatpush1.msra.mxu0 %v1436
    %1438 = vmatprep.subr.mxu0 0.0
    %1439 = vmatpush1.msra.mxu0 0.0
    %1440 = vmatprep.subr.mxu0 0.0
    %1441 = vmatpush1.msra.mxu0 0.0
    %1442 = vmatprep.subr.mxu0 0.0
    %1443 = vmatpush1.msra.mxu0 0.0
    %1444 = vmatprep.subr.mxu0 0.0
    %1445 = vmatpush1.msra.mxu0 0.0
    %1446 = vmatprep.subr.mxu0 0.0
    %1447 = vmatpush1.msra.mxu0 0.0
    %1448 = vmatprep.subr.mxu0 0.0
    %1449 = vmatpush1.msra.mxu0 0.0
    %1450 = vmatprep.subr.mxu0 0.0
    %1451 = vmatpush1.msra.mxu0 0.0
    %1452 = vmatprep.subr.mxu0 0.0
    %1453 = vmatpush1.msra.mxu0 0.0
    %1454 = vmatprep.subr.mxu0 0.0
    %1455 = vmatpush1.msra.mxu0 0.0
    %1456 = vmatprep.subr.mxu0 0.0
    %1457 = vmatpush1.msra.mxu0 0.0
    %1458 = vmatprep.subr.mxu0 0.0
    %1459 = vmatpush1.msra.mxu0 0.0
    %1460 = vmatprep.subr.mxu0 0.0
    %1461 = vmatpush1.msra.mxu0 0.0
    %1462 = vmatprep.subr.mxu0 0.0
    %1463 = vmatpush1.msra.mxu0 0.0
    %1464 = vmatprep.subr.mxu0 0.0
    %1465 = vmatpush1.msra.mxu0 0.0
    %1466 = vmatprep.subr.mxu0 0.0
    %1467 = vmatpush1.msra.mxu0 0.0
    %1468 = vmatprep.subr.mxu0 0.0
    %1469 = vmatpush1.msra.mxu0 0.0
    %1470 = vmatprep.mubr.f32.mxu0 0.0
    %v1471 = vand.u32 %v922, 4294901760
    %1472 = vmatmul.mubr.f32.gmra.mrb[0].mxu0 %v1471
    %v1473 = vpop.f32.mrb[0].mxu0
    %v1474 = vadd.f32 %v1355, %v1473
    %v1475 = vpop.f32.mrb[0].mxu0
    %1476 = vdwg.mxu0
    %1477 = vmatprep.subr.mxu0 0.0
    %v1478 = vand.u32 %v81, 4294901760
    %1479 = vmatpush1.msra.mxu0 %v1478
    %1480 = vmatprep.subr.mxu0 0.0
    %v1481 = vand.u32 %v82, 4294901760
    %1482 = vmatpush1.msra.mxu0 %v1481
    %1483 = vmatprep.subr.mxu0 0.0
    %v1484 = vand.u32 %v83, 4294901760
    %1485 = vmatpush1.msra.mxu0 %v1484
    %1486 = vmatprep.subr.mxu0 0.0
    %v1487 = vand.u32 %v84, 4294901760
    %1488 = vmatpush1.msra.mxu0 %v1487
    %1489 = vmatprep.subr.mxu0 0.0
    %v1490 = vand.u32 %v85, 4294901760
    %1491 = vmatpush1.msra.mxu0 %v1490
    %1492 = vmatprep.subr.mxu0 0.0
    %v1493 = vand.u32 %v86, 4294901760
    %1494 = vmatpush1.msra.mxu0 %v1493
    %1495 = vmatprep.subr.mxu0 0.0
    %v1496 = vand.u32 %v87, 4294901760
    %1497 = vmatpush1.msra.mxu0 %v1496
    %1498 = vmatprep.subr.mxu0 0.0
    %v1499 = vand.u32 %v88, 4294901760
    %1500 = vmatpush1.msra.mxu0 %v1499
    %1501 = vmatprep.subr.mxu0 0.0
    %v1502 = vand.u32 %v89, 4294901760
    %1503 = vmatpush1.msra.mxu0 %v1502
    %1504 = vmatprep.subr.mxu0 0.0
    %v1505 = vand.u32 %v90, 4294901760
    %1506 = vmatpush1.msra.mxu0 %v1505
    %1507 = vmatprep.subr.mxu0 0.0
    %v1508 = vand.u32 %v91, 4294901760
    %1509 = vmatpush1.msra.mxu0 %v1508
    %1510 = vmatprep.subr.mxu0 0.0
    %v1511 = vand.u32 %v92, 4294901760
    %1512 = vmatpush1.msra.mxu0 %v1511
    %1513 = vmatprep.subr.mxu0 0.0
    %v1514 = vand.u32 %v93, 4294901760
    %1515 = vmatpush1.msra.mxu0 %v1514
    %1516 = vmatprep.subr.mxu0 0.0
    %v1517 = vand.u32 %v94, 4294901760
    %1518 = vmatpush1.msra.mxu0 %v1517
    %1519 = vmatprep.subr.mxu0 0.0
    %v1520 = vand.u32 %v95, 4294901760
    %1521 = vmatpush1.msra.mxu0 %v1520
    %1522 = vmatprep.subr.mxu0 0.0
    %v1523 = vand.u32 %v96, 4294901760
    %1524 = vmatpush1.msra.mxu0 %v1523
    %1525 = vmatprep.subr.mxu0 0.0
    %1526 = vmatpush1.msra.mxu0 0.0
    %1527 = vmatprep.subr.mxu0 0.0
    %1528 = vmatpush1.msra.mxu0 0.0
    %1529 = vmatprep.subr.mxu0 0.0
    %1530 = vmatpush1.msra.mxu0 0.0
    %1531 = vmatprep.subr.mxu0 0.0
    %1532 = vmatpush1.msra.mxu0 0.0
    %1533 = vmatprep.subr.mxu0 0.0
    %1534 = vmatpush1.msra.mxu0 0.0
    %1535 = vmatprep.subr.mxu0 0.0
    %1536 = vmatpush1.msra.mxu0 0.0
    %1537 = vmatprep.subr.mxu0 0.0
    %1538 = vmatpush1.msra.mxu0 0.0
    %1539 = vmatprep.subr.mxu0 0.0
    %1540 = vmatpush1.msra.mxu0 0.0
    %1541 = vmatprep.subr.mxu0 0.0
    %1542 = vmatpush1.msra.mxu0 0.0
    %1543 = vmatprep.subr.mxu0 0.0
    %1544 = vmatpush1.msra.mxu0 0.0
    %1545 = vmatprep.subr.mxu0 0.0
    %1546 = vmatpush1.msra.mxu0 0.0
    %1547 = vmatprep.subr.mxu0 0.0
    %1548 = vmatpush1.msra.mxu0 0.0
    %1549 = vmatprep.subr.mxu0 0.0
    %1550 = vmatpush1.msra.mxu0 0.0
    %1551 = vmatprep.subr.mxu0 0.0
    %1552 = vmatpush1.msra.mxu0 0.0
    %1553 = vmatprep.subr.mxu0 0.0
    %1554 = vmatpush1.msra.mxu0 0.0
    %1555 = vmatprep.subr.mxu0 0.0
    %1556 = vmatpush1.msra.mxu0 0.0
    %1557 = vmatprep.mubr.f32.mxu0 0.0
    %v1558 = vand.u32 %v922, 4294901760
    %1559 = vmatmul.mubr.f32.gmra.mrb[0].mxu0 %v1558
    %v1560 = vpop.f32.mrb[0].mxu0
    %v1561 = vadd.f32 %v1474, %v1560
    %v1562 = vpop.f32.mrb[0].mxu0
    %1563 = vdwg.mxu0
    %v1564 = vmul.f32 %v1561, %v1561
    %v1566 = vrot.slane %v1564, 7
    %v1568 = vsub.f32 %v1561, %v1566
    %v1569 = vadd.f32 %v1568, 1e-05
    %v1570 = vrsqrt.pop %v1569
    %v1571 = vlaneseq
    %v1572 = vshrl.u32 %v1571, 7
    %v1573 = vsub.s32 0, %v1572
    %v1574 = vrot.slane %v1561, %v1573
    %v1575 = vsub.f32 %v897, %v1574
    %v1576 = vsub.f32 %v900, %v1574
    %v1578 = vrot.slane %v74, 7
    %v1580 = vmul.f32 %v1570, %v1578
    %v1581 = vlaneseq
    %v1582 = vshrl.u32 %v1581, 7
    %v1583 = vsub.s32 1, %v1582
    %v1584 = vrot.slane %v1580, %v1583
    %v1585 = vmul.f32 %v1575, %v1584
    %v1586 = vmul.f32 %v1576, %v1584
    %v1587 = vlaneseq
    %v1588 = vshrl.u32 %v1587, 7
    %v1589 = vsub.s32 0, %v1588
    %v1590 = vrot.slane %v75, %v1589
    %v1591 = vadd.f32 %v1585, %v1590
    %v1592 = vadd.f32 %v1586, %v1590
    %v1593 = vmax.f32 %v1591, 0.0
    %v1594 = vmax.f32 %v1592, 0.0
    %v1595 = vpack.c.bf16 %v1594, %v1593
    %v1596 = vld [vmem:[#allocation8 + $0x2e0] sm:$0xf]
    %v1597 = vld [vmem:[#allocation8 + $0x2e4] sm:$0xf]
    %v1598 = vld [vmem:[#allocation8 + $0x2e8] sm:$0xf]
    %v1599 = vld [vmem:[#allocation8 + $0x2ec] sm:$0x3]
    %v1604 = vunpack.c.l.b16 %v1596
    %v1605 = vunpack.c.l.b16 %v1597
    %v1606 = vunpack.c.l.b16 %v1598
    %v1607 = vunpack.c.l.b16 %v1599
    %v1608 = vpack.c.b16 %v1605, %v1604
    %v1609 = vpack.c.b16 %v1607, %v1606
    %vm1610 = vcmask 113664
    %v1612 = vsel %vm1610, %v1608, 0
    %v1615 = vsel %vm1610, %v1609, 0
    %vm1617 = vcmask 1046528
    %v1619 = vsel %vm1617, %v1595, 0
    %1621 = vmatprep.subr.bf16.mxu0 0
    %1622 = vmatpush1.bf16.msra.mxu0 %v1619
    %1623 = vmatprep.subr.bf16.mxu0 0
    %1624 = vmatpush1.bf16.msra.mxu0 0
    %1625 = vmatprep.subr.bf16.mxu0 0
    %1626 = vmatpush1.bf16.msra.mxu0 0
    %1627 = vmatprep.subr.bf16.mxu0 0
    %1628 = vmatpush1.bf16.msra.mxu0 0
    %1629 = vmatprep.subr.bf16.mxu0 0
    %1630 = vmatpush1.bf16.msra.mxu0 0
    %1631 = vmatprep.subr.bf16.mxu0 0
    %1632 = vmatpush1.bf16.msra.mxu0 0
    %1633 = vmatprep.subr.bf16.mxu0 0
    %1634 = vmatpush1.bf16.msra.mxu0 0
    %1635 = vmatprep.subr.bf16.mxu0 0
    %1636 = vmatpush1.bf16.msra.mxu0 0
    %1637 = vmatprep.subr.bf16.mxu0 0
    %1638 = vmatpush1.bf16.msra.mxu0 0
    %1639 = vmatprep.subr.bf16.mxu0 0
    %1640 = vmatpush1.bf16.msra.mxu0 0
    %1641 = vmatprep.subr.bf16.mxu0 0
    %1642 = vmatpush1.bf16.msra.mxu0 0
    %1643 = vmatprep.subr.bf16.mxu0 0
    %1644 = vmatpush1.bf16.msra.mxu0 0
    %1645 = vmatprep.subr.bf16.mxu0 0
    %1646 = vmatpush1.bf16.msra.mxu0 0
    %1647 = vmatprep.subr.bf16.mxu0 0
    %1648 = vmatpush1.bf16.msra.mxu0 0
    %1649 = vmatprep.subr.bf16.mxu0 0
    %1650 = vmatpush1.bf16.msra.mxu0 0
    %1651 = vmatprep.subr.bf16.mxu0 0
    %1652 = vmatpush1.bf16.msra.mxu0 0
    %1653 = vmatprep.mubr.bf16.mxu0 0
    %1654 = vmatmul.mubr.bf16.gmra.mrb[0].mxu0 %v1612
    %v1655 = vpop.f32.mrb[0].mxu0
    %v1656 = vadd.f32 0.0, %v1655
    %v1657 = vpop.f32.mrb[0].mxu0
    %v1658 = vpop.f32.mrb[0].mxu0
    %v1659 = vadd.f32 0.0, %v1658
    %v1660 = vpop.f32.mrb[0].mxu0
    %1661 = vmatprep.mubr.bf16.mxu0 0
    %1662 = vmatmul.mubr.bf16.gmra.mrb[0].mxu0 %v1615
    %v1663 = vpop.f32.mrb[0].mxu0
    %v1664 = vadd.f32 0.0, %v1663
    %v1665 = vpop.f32.mrb[0].mxu0
    %v1666 = vpop.f32.mrb[0].mxu0
    %v1667 = vadd.f32 0.0, %v1666
    %v1668 = vpop.f32.mrb[0].mxu0
    %1669 = vdwg.mxu0
    %v1670 = vld [vmem:[#allocation8 + $0x2f0] sm:$0xf]
    %v1671 = vld [vmem:[#allocation8 + $0x2f4] sm:$0xf]
    %v1672 = vld [vmem:[#allocation8 + $0x2f8] sm:$0xf]
    %v1673 = vld [vmem:[#allocation8 + $0x2fc] sm:$0x3]
    %v1678 = vunpack.c.l.b16 %v1670
    %v1679 = vunpack.c.l.b16 %v1671
    %v1680 = vunpack.c.l.b16 %v1672
    %v1681 = vunpack.c.l.b16 %v1673
    %v1682 = vpack.c.b16 %v1679, %v1678
    %v1683 = vpack.c.b16 %v1681, %v1680
    %v1685 = vsel %vm1610, %v1682, 0
    %v1688 = vsel %vm1610, %v1683, 0
    %1690 = vmatprep.subr.bf16.mxu0 0
    %1691 = vmatpush1.bf16.msra.mxu0 %v1619
    %1692 = vmatprep.subr.bf16.mxu0 0
    %1693 = vmatpush1.bf16.msra.mxu0 0
    %1694 = vmatprep.subr.bf16.mxu0 0
    %1695 = vmatpush1.bf16.msra.mxu0 0
    %1696 = vmatprep.subr.bf16.mxu0 0
    %1697 = vmatpush1.bf16.msra.mxu0 0
    %1698 = vmatprep.subr.bf16.mxu0 0
    %1699 = vmatpush1.bf16.msra.mxu0 0
    %1700 = vmatprep.subr.bf16.mxu0 0
    %1701 = vmatpush1.bf16.msra.mxu0 0
    %1702 = vmatprep.subr.bf16.mxu0 0
    %1703 = vmatpush1.bf16.msra.mxu0 0
    %1704 = vmatprep.subr.bf16.mxu0 0
    %1705 = vmatpush1.bf16.msra.mxu0 0
    %1706 = vmatprep.subr.bf16.mxu0 0
    %1707 = vmatpush1.bf16.msra.mxu0 0
    %1708 = vmatprep.subr.bf16.mxu0 0
    %1709 = vmatpush1.bf16.msra.mxu0 0
    %1710 = vmatprep.subr.bf16.mxu0 0
    %1711 = vmatpush1.bf16.msra.mxu0 0
    %1712 = vmatprep.subr.bf16.mxu0 0
    %1713 = vmatpush1.bf16.msra.mxu0 0
    %1714 = vmatprep.subr.bf16.mxu0 0
    %1715 = vmatpush1.bf16.msra.mxu0 0
    %1716 = vmatprep.subr.bf16.mxu0 0
    %1717 = vmatpush1.bf16.msra.mxu0 0
    %1718 = vmatprep.subr.bf16.mxu0 0
    %1719 = vmatpush1.bf16.msra.mxu0 0
    %1720 = vmatprep.subr.bf16.mxu0 0
    %1721 = vmatpush1.bf16.msra.mxu0 0
    %1722 = vmatprep.mubr.bf16.mxu0 0
    %1723 = vmatmul.mubr.bf16.gmra.mrb[0].mxu0 %v1685
    %v1724 = vpop.f32.mrb[0].mxu0
    %v1725 = vadd.f32 0.0, %v1724
    %v1726 = vpop.f32.mrb[0].mxu0
    %v1727 = vpop.f32.mrb[0].mxu0
    %v1728 = vadd.f32 0.0, %v1727
    %v1729 = vpop.f32.mrb[0].mxu0
    %1730 = vmatprep.mubr.bf16.mxu0 0
    %1731 = vmatmul.mubr.bf16.gmra.mrb[0].mxu0 %v1688
    %v1732 = vpop.f32.mrb[0].mxu0
    %v1733 = vadd.f32 0.0, %v1732
    %v1734 = vpop.f32.mrb[0].mxu0
    %v1735 = vpop.f32.mrb[0].mxu0
    %v1736 = vadd.f32 0.0, %v1735
    %v1737 = vpop.f32.mrb[0].mxu0
    %1738 = vdwg.mxu0
    %v1739 = vld [vmem:[#allocation8 + $0x300] sm:$0xf]
    %v1740 = vld [vmem:[#allocation8 + $0x304] sm:$0xf]
    %v1741 = vld [vmem:[#allocation8 + $0x308] sm:$0xf]
    %v1742 = vld [vmem:[#allocation8 + $0x30c] sm:$0x3]
    %v1747 = vunpack.c.l.b16 %v1739
    %v1748 = vunpack.c.l.b16 %v1740
    %v1749 = vunpack.c.l.b16 %v1741
    %v1750 = vunpack.c.l.b16 %v1742
    %v1751 = vpack.c.b16 %v1748, %v1747
    %v1752 = vpack.c.b16 %v1750, %v1749
    %v1754 = vsel %vm1610, %v1751, 0
    %v1757 = vsel %vm1610, %v1752, 0
    %1759 = vmatprep.subr.bf16.mxu0 0
    %1760 = vmatpush1.bf16.msra.mxu0 %v1619
    %1761 = vmatprep.subr.bf16.mxu0 0
    %1762 = vmatpush1.bf16.msra.mxu0 0
    %1763 = vmatprep.subr.bf16.mxu0 0
    %1764 = vmatpush1.bf16.msra.mxu0 0
    %1765 = vmatprep.subr.bf16.mxu0 0
    %1766 = vmatpush1.bf16.msra.mxu0 0
    %1767 = vmatprep.subr.bf16.mxu0 0
    %1768 = vmatpush1.bf16.msra.mxu0 0
    %1769 = vmatprep.subr.bf16.mxu0 0
    %1770 = vmatpush1.bf16.msra.mxu0 0
    %1771 = vmatprep.subr.bf16.mxu0 0
    %1772 = vmatpush1.bf16.msra.mxu0 0
    %1773 = vmatprep.subr.bf16.mxu0 0
    %1774 = vmatpush1.bf16.msra.mxu0 0
    %1775 = vmatprep.subr.bf16.mxu0 0
    %1776 = vmatpush1.bf16.msra.mxu0 0
    %1777 = vmatprep.subr.bf16.mxu0 0
    %1778 = vmatpush1.bf16.msra.mxu0 0
    %1779 = vmatprep.subr.bf16.mxu0 0
    %1780 = vmatpush1.bf16.msra.mxu0 0
    %1781 = vmatprep.subr.bf16.mxu0 0
    %1782 = vmatpush1.bf16.msra.mxu0 0
    %1783 = vmatprep.subr.bf16.mxu0 0
    %1784 = vmatpush1.bf16.msra.mxu0 0
    %1785 = vmatprep.subr.bf16.mxu0 0
    %1786 = vmatpush1.bf16.msra.mxu0 0
    %1787 = vmatprep.subr.bf16.mxu0 0
    %1788 = vmatpush1.bf16.msra.mxu0 0
    %1789 = vmatprep.subr.bf16.mxu0 0
    %1790 = vmatpush1.bf16.msra.mxu0 0
    %1791 = vmatprep.mubr.bf16.mxu0 0
    %1792 = vmatmul.mubr.bf16.gmra.mrb[0].mxu0 %v1754
    %v1793 = vpop.f32.mrb[0].mxu0
    %v1794 = vadd.f32 0.0, %v1793
    %v1795 = vpop.f32.mrb[0].mxu0
    %v1796 = vpop.f32.mrb[0].mxu0
    %v1797 = vadd.f32 0.0, %v1796
    %v1798 = vpop.f32.mrb[0].mxu0
    %1799 = vmatprep.mubr.bf16.mxu0 0
    %1800 = vmatmul.mubr.bf16.gmra.mrb[0].mxu0 %v1757
    %v1801 = vpop.f32.mrb[0].mxu0
    %v1802 = vadd.f32 0.0, %v1801
    %v1803 = vpop.f32.mrb[0].mxu0
    %v1804 = vpop.f32.mrb[0].mxu0
    %v1805 = vadd.f32 0.0, %v1804
    %v1806 = vpop.f32.mrb[0].mxu0
    %1807 = vdwg.mxu0
    %v1808 = vld [vmem:[#allocation8 + $0x310] sm:$0xf]
    %v1809 = vld [vmem:[#allocation8 + $0x314] sm:$0xf]
    %v1810 = vld [vmem:[#allocation8 + $0x318] sm:$0xf]
    %v1811 = vld [vmem:[#allocation8 + $0x31c] sm:$0x3]
    %v1816 = vunpack.c.l.b16 %v1808
    %v1817 = vunpack.c.l.b16 %v1809
    %v1818 = vunpack.c.l.b16 %v1810
    %v1819 = vunpack.c.l.b16 %v1811
    %v1820 = vpack.c.b16 %v1817, %v1816
    %v1821 = vpack.c.b16 %v1819, %v1818
    %v1823 = vsel %vm1610, %v1820, 0
    %v1826 = vsel %vm1610, %v1821, 0
    %1828 = vmatprep.subr.bf16.mxu0 0
    %1829 = vmatpush1.bf16.msra.mxu0 %v1619
    %1830 = vmatprep.subr.bf16.mxu0 0
    %1831 = vmatpush1.bf16.msra.mxu0 0
    %1832 = vmatprep.subr.bf16.mxu0 0
    %1833 = vmatpush1.bf16.msra.mxu0 0
    %1834 = vmatprep.subr.bf16.mxu0 0
    %1835 = vmatpush1.bf16.msra.mxu0 0
    %1836 = vmatprep.subr.bf16.mxu0 0
    %1837 = vmatpush1.bf16.msra.mxu0 0
    %1838 = vmatprep.subr.bf16.mxu0 0
    %1839 = vmatpush1.bf16.msra.mxu0 0
    %1840 = vmatprep.subr.bf16.mxu0 0
    %1841 = vmatpush1.bf16.msra.mxu0 0
    %1842 = vmatprep.subr.bf16.mxu0 0
    %1843 = vmatpush1.bf16.msra.mxu0 0
    %1844 = vmatprep.subr.bf16.mxu0 0
    %1845 = vmatpush1.bf16.msra.mxu0 0
    %1846 = vmatprep.subr.bf16.mxu0 0
    %1847 = vmatpush1.bf16.msra.mxu0 0
    %1848 = vmatprep.subr.bf16.mxu0 0
    %1849 = vmatpush1.bf16.msra.mxu0 0
    %1850 = vmatprep.subr.bf16.mxu0 0
    %1851 = vmatpush1.bf16.msra.mxu0 0
    %1852 = vmatprep.subr.bf16.mxu0 0
    %1853 = vmatpush1.bf16.msra.mxu0 0
    %1854 = vmatprep.subr.bf16.mxu0 0
    %1855 = vmatpush1.bf16.msra.mxu0 0
    %1856 = vmatprep.subr.bf16.mxu0 0
    %1857 = vmatpush1.bf16.msra.mxu0 0
    %1858 = vmatprep.subr.bf16.mxu0 0
    %1859 = vmatpush1.bf16.msra.mxu0 0
    %1860 = vmatprep.mubr.bf16.mxu0 0
    %1861 = vmatmul.mubr.bf16.gmra.mrb[0].mxu0 %v1823
    %v1862 = vpop.f32.mrb[0].mxu0
    %v1863 = vadd.f32 0.0, %v1862
    %v1864 = vpop.f32.mrb[0].mxu0
    %v1865 = vpop.f32.mrb[0].mxu0
    %v1866 = vadd.f32 0.0, %v1865
    %v1867 = vpop.f32.mrb[0].mxu0
    %1868 = vmatprep.mubr.bf16.mxu0 0
    %1869 = vmatmul.mubr.bf16.gmra.mrb[0].mxu0 %v1826
    %v1870 = vpop.f32.mrb[0].mxu0
    %v1871 = vadd.f32 0.0, %v1870
    %v1872 = vpop.f32.mrb[0].mxu0
    %v1873 = vpop.f32.mrb[0].mxu0
    %v1874 = vadd.f32 0.0, %v1873
    %v1875 = vpop.f32.mrb[0].mxu0
    %1876 = vdwg.mxu0
    %v1877 = vpack.c.bf16 %v1659, %v1656
    %v1878 = vpack.c.bf16 %v1728, %v1725
    %v1879 = vpack.c.bf16 %v1797, %v1794
    %v1880 = vpack.c.bf16 %v1866, %v1863
    %v1881 = vpack.c.bf16 %v1667, %v1664
    %v1882 = vpack.c.bf16 %v1736, %v1733
    %v1883 = vpack.c.bf16 %v1805, %v1802
    %v1884 = vpack.c.bf16 %v1874, %v1871
    %v1885 = vld [vmem:[#allocation8 + $0xc8] sm:$0xf]
    %v1886 = vld [vmem:[#allocation8 + $0xcc] sm:$0xf]
    %v1887 = vld [vmem:[#allocation8 + $0xd0] sm:$0xf]
    %v1888 = vld [vmem:[#allocation8 + $0xd4] sm:$0xf]
    %v1889 = vld [vmem:[#allocation8 + $0xd8] sm:$0xf]
    %v1890 = vld [vmem:[#allocation8 + $0xdc] sm:$0xf]
    %v1891 = vld [vmem:[#allocation8 + $0xe0] sm:$0xf]
    %v1892 = vld [vmem:[#allocation8 + $0xe4] sm:$0xf]
    %v1893 = vld [vmem:[#allocation8 + $0xe8] sm:$0xf]
    %v1894 = vld [vmem:[#allocation8 + $0xec] sm:$0xf]
    %v1895 = vld [vmem:[#allocation8 + $0xf0] sm:$0xf]
    %v1896 = vld [vmem:[#allocation8 + $0xf4] sm:$0xf]
    %v1897 = vld [vmem:[#allocation8 + $0xf8] sm:$0xf]
    %v1898 = vld [vmem:[#allocation8 + $0xfc] sm:$0xf]
    %v1899 = vld [vmem:[#allocation8 + $0x100] sm:$0xf]
    %v1900 = vld [vmem:[#allocation8 + $0x104] sm:$0xf]
    %v1901 = vld [vmem:[#allocation8 + $0x108] sm:$0xf]
    %v1902 = vld [vmem:[#allocation8 + $0x10c] sm:$0xf]
    %v1903 = vld [vmem:[#allocation8 + $0x110] sm:$0xf]
    %v1904 = vld [vmem:[#allocation8 + $0x114] sm:$0xf]
    %v1905 = vld [vmem:[#allocation8 + $0x118] sm:$0xf]
    %v1906 = vld [vmem:[#allocation8 + $0x11c] sm:$0xf]
    %v1907 = vld [vmem:[#allocation8 + $0x120] sm:$0xf]
    %v1908 = vld [vmem:[#allocation8 + $0x124] sm:$0xf]
    %v1909 = vld [vmem:[#allocation8 + $0x128] sm:$0xf]
    %v1910 = vld [vmem:[#allocation8 + $0x12c] sm:$0xf]
    %v1911 = vld [vmem:[#allocation8 + $0x130] sm:$0xf]
    %v1912 = vld [vmem:[#allocation8 + $0x134] sm:$0xf]
    %v1913 = vld [vmem:[#allocation8 + $0x138] sm:$0xf]
    %v1914 = vld [vmem:[#allocation8 + $0x13c] sm:$0xf]
    %v1915 = vld [vmem:[#allocation8 + $0x140] sm:$0xf]
    %v1916 = vld [vmem:[#allocation8 + $0x144] sm:$0xf]
    %v1917 = vld [vmem:[#allocation8 + $0x148] sm:$0xf]
    %v1918 = vld [vmem:[#allocation8 + $0x14c] sm:$0xf]
    %v1919 = vld [vmem:[#allocation8 + $0x150] sm:$0xf]
    %v1920 = vld [vmem:[#allocation8 + $0x154] sm:$0xf]
    %v1921 = vld [vmem:[#allocation8 + $0x158] sm:$0xf]
    %v1922 = vld [vmem:[#allocation8 + $0x15c] sm:$0xf]
    %v1923 = vld [vmem:[#allocation8 + $0x160] sm:$0xf]
    %v1924 = vld [vmem:[#allocation8 + $0x164] sm:$0xf]
    %v1925 = vld [vmem:[#allocation8 + $0x168] sm:$0xf]
    %v1926 = vld [vmem:[#allocation8 + $0x16c] sm:$0xf]
    %v1927 = vld [vmem:[#allocation8 + $0x170] sm:$0xf]
    %v1928 = vld [vmem:[#allocation8 + $0x174] sm:$0xf]
    %v1929 = vld [vmem:[#allocation8 + $0x178] sm:$0xf]
    %v1930 = vld [vmem:[#allocation8 + $0x17c] sm:$0xf]
    %v1931 = vld [vmem:[#allocation8 + $0x180] sm:$0xf]
    %v1932 = vld [vmem:[#allocation8 + $0x184] sm:$0xf]
    %v1933 = vld [vmem:[#allocation8 + $0x188] sm:$0xf]
    %v1934 = vld [vmem:[#allocation8 + $0x18c] sm:$0xf]
    %v1935 = vld [vmem:[#allocation8 + $0x190] sm:$0xf]
    %v1936 = vld [vmem:[#allocation8 + $0x194] sm:$0xf]
    %v1937 = vld [vmem:[#allocation8 + $0x198] sm:$0xf]
    %v1938 = vld [vmem:[#allocation8 + $0x19c] sm:$0xf]
    %v1939 = vld [vmem:[#allocation8 + $0x1a0] sm:$0xf]
    %v1940 = vld [vmem:[#allocation8 + $0x1a4] sm:$0xf]
    %v1941 = vld [vmem:[#allocation8 + $0x1a8] sm:$0xf]
    %v1942 = vld [vmem:[#allocation8 + $0x1ac] sm:$0xf]
    %v1943 = vld [vmem:[#allocation8 + $0x1b0] sm:$0xf]
    %v1944 = vld [vmem:[#allocation8 + $0x1b4] sm:$0xf]
    %v1945 = vld [vmem:[#allocation8 + $0x1b8] sm:$0xf]
    %v1946 = vld [vmem:[#allocation8 + $0x1bc] sm:$0xf]
    %v1947 = vld [vmem:[#allocation8 + $0x1c0] sm:$0xf]
    %v1948 = vld [vmem:[#allocation8 + $0x1c4] sm:$0xf]
    %v1949 = vlaneseq
    %v1950 = vshrl.u32 %v1949, 7
    %v1951 = vsub.s32 0, %v1950
    %v1952 = vrot.slane %v76, %v1951
    %v2017 = vunpack.c.l.b16 %v1885
    %v2018 = vunpack.c.l.b16 %v1886
    %v2019 = vunpack.c.l.b16 %v1887
    %v2020 = vunpack.c.l.b16 %v1888
    %v2021 = vunpack.c.l.b16 %v1889
    %v2022 = vunpack.c.l.b16 %v1890
    %v2023 = vunpack.c.l.b16 %v1891
    %v2024 = vunpack.c.l.b16 %v1892
    %v2025 = vunpack.c.l.b16 %v1893
    %v2026 = vunpack.c.l.b16 %v1894
    %v2027 = vunpack.c.l.b16 %v1895
    %v2028 = vunpack.c.l.b16 %v1896
    %v2029 = vunpack.c.l.b16 %v1897
    %v2030 = vunpack.c.l.b16 %v1898
    %v2031 = vunpack.c.l.b16 %v1899
    %v2032 = vunpack.c.l.b16 %v1900
    %v2033 = vunpack.c.l.b16 %v1901
    %v2034 = vunpack.c.l.b16 %v1902
    %v2035 = vunpack.c.l.b16 %v1903
    %v2036 = vunpack.c.l.b16 %v1904
    %v2037 = vunpack.c.l.b16 %v1905
    %v2038 = vunpack.c.l.b16 %v1906
    %v2039 = vunpack.c.l.b16 %v1907
    %v2040 = vunpack.c.l.b16 %v1908
    %v2041 = vunpack.c.l.b16 %v1909
    %v2042 = vunpack.c.l.b16 %v1910
    %v2043 = vunpack.c.l.b16 %v1911
    %v2044 = vunpack.c.l.b16 %v1912
    %v2045 = vunpack.c.l.b16 %v1913
    %v2046 = vunpack.c.l.b16 %v1914
    %v2047 = vunpack.c.l.b16 %v1915
    %v2048 = vunpack.c.l.b16 %v1916
    %v2049 = vunpack.c.l.b16 %v1917
    %v2050 = vunpack.c.l.b16 %v1918
    %v2051 = vunpack.c.l.b16 %v1919
    %v2052 = vunpack.c.l.b16 %v1920
    %v2053 = vunpack.c.l.b16 %v1921
    %v2054 = vunpack.c.l.b16 %v1922
    %v2055 = vunpack.c.l.b16 %v1923
    %v2056 = vunpack.c.l.b16 %v1924
    %v2057 = vunpack.c.l.b16 %v1925
    %v2058 = vunpack.c.l.b16 %v1926
    %v2059 = vunpack.c.l.b16 %v1927
    %v2060 = vunpack.c.l.b16 %v1928
    %v2061 = vunpack.c.l.b16 %v1929
    %v2062 = vunpack.c.l.b16 %v1930
    %v2063 = vunpack.c.l.b16 %v1931
    %v2064 = vunpack.c.l.b16 %v1932
    %v2065 = vunpack.c.l.b16 %v1933
    %v2066 = vunpack.c.l.b16 %v1934
    %v2067 = vunpack.c.l.b16 %v1935
    %v2068 = vunpack.c.l.b16 %v1936
    %v2069 = vunpack.c.l.b16 %v1937
    %v2070 = vunpack.c.l.b16 %v1938
    %v2071 = vunpack.c.l.b16 %v1939
    %v2072 = vunpack.c.l.b16 %v1940
    %v2073 = vunpack.c.l.b16 %v1941
    %v2074 = vunpack.c.l.b16 %v1942
    %v2075 = vunpack.c.l.b16 %v1943
    %v2076 = vunpack.c.l.b16 %v1944
    %v2077 = vunpack.c.l.b16 %v1945
    %v2078 = vunpack.c.l.b16 %v1946
    %v2079 = vunpack.c.l.b16 %v1947
    %v2080 = vunpack.c.l.b16 %v1948
    %v2081 = vpack.c.b16 %v2018, %v2017
    %v2082 = vpack.c.b16 %v2020, %v2019
    %v2083 = vpack.c.b16 %v2022, %v2021
    %v2084 = vpack.c.b16 %v2024, %v2023
    %v2085 = vpack.c.b16 %v2026, %v2025
    %v2086 = vpack.c.b16 %v2028, %v2027
    %v2087 = vpack.c.b16 %v2030, %v2029
    %v2088 = vpack.c.b16 %v2032, %v2031
    %v2089 = vpack.c.b16 %v2034, %v2033
    %v2090 = vpack.c.b16 %v2036, %v2035
    %v2091 = vpack.c.b16 %v2038, %v2037
    %v2092 = vpack.c.b16 %v2040, %v2039
    %v2093 = vpack.c.b16 %v2042, %v2041
    %v2094 = vpack.c.b16 %v2044, %v2043
    %v2095 = vpack.c.b16 %v2046, %v2045
    %v2096 = vpack.c.b16 %v2048, %v2047
    %v2097 = vpack.c.b16 %v2050, %v2049
    %v2098 = vpack.c.b16 %v2052, %v2051
    %v2099 = vpack.c.b16 %v2054, %v2053
    %v2100 = vpack.c.b16 %v2056, %v2055
    %v2101 = vpack.c.b16 %v2058, %v2057
    %v2102 = vpack.c.b16 %v2060, %v2059
    %v2103 = vpack.c.b16 %v2062, %v2061
    %v2104 = vpack.c.b16 %v2064, %v2063
    %v2105 = vpack.c.b16 %v2066, %v2065
    %v2106 = vpack.c.b16 %v2068, %v2067
    %v2107 = vpack.c.b16 %v2070, %v2069
    %v2108 = vpack.c.b16 %v2072, %v2071
    %v2109 = vpack.c.b16 %v2074, %v2073
    %v2110 = vpack.c.b16 %v2076, %v2075
    %v2111 = vpack.c.b16 %v2078, %v2077
    %v2112 = vpack.c.b16 %v2080, %v2079
    %2145 = vmatprep.subr.bf16.mxu0 0
    %2146 = vmatpush1.bf16.msra.mxu0 %v2081
    %2147 = vmatprep.subr.bf16.mxu0 0
    %2148 = vmatpush1.bf16.msra.mxu0 %v2082
    %2149 = vmatprep.subr.bf16.mxu0 0
    %2150 = vmatpush1.bf16.msra.mxu0 %v2083
    %2151 = vmatprep.subr.bf16.mxu0 0
    %2152 = vmatpush1.bf16.msra.mxu0 %v2084
    %2153 = vmatprep.subr.bf16.mxu0 0
    %2154 = vmatpush1.bf16.msra.mxu0 %v2085
    %2155 = vmatprep.subr.bf16.mxu0 0
    %2156 = vmatpush1.bf16.msra.mxu0 %v2086
    %2157 = vmatprep.subr.bf16.mxu0 0
    %2158 = vmatpush1.bf16.msra.mxu0 %v2087
    %2159 = vmatprep.subr.bf16.mxu0 0
    %2160 = vmatpush1.bf16.msra.mxu0 %v2088
    %2161 = vmatprep.subr.bf16.mxu0 0
    %2162 = vmatpush1.bf16.msra.mxu0 %v2089
    %2163 = vmatprep.subr.bf16.mxu0 0
    %2164 = vmatpush1.bf16.msra.mxu0 %v2090
    %2165 = vmatprep.subr.bf16.mxu0 0
    %2166 = vmatpush1.bf16.msra.mxu0 %v2091
    %2167 = vmatprep.subr.bf16.mxu0 0
    %2168 = vmatpush1.bf16.msra.mxu0 %v2092
    %2169 = vmatprep.subr.bf16.mxu0 0
    %2170 = vmatpush1.bf16.msra.mxu0 %v2093
    %2171 = vmatprep.subr.bf16.mxu0 0
    %2172 = vmatpush1.bf16.msra.mxu0 %v2094
    %2173 = vmatprep.subr.bf16.mxu0 0
    %2174 = vmatpush1.bf16.msra.mxu0 %v2095
    %2175 = vmatprep.subr.bf16.mxu0 0
    %2176 = vmatpush1.bf16.msra.mxu0 %v2096
    %2177 = vmatprep.mubr.bf16.mxu0 %v1878
    %2178 = vmatmul.mubr.bf16.gmra.mrb[0].mxu0 %v1877
    %v2179 = vpop.f32.mrb[0].mxu0
    %v2180 = vadd.f32 %v1952, %v2179
    %v2181 = vpop.f32.mrb[0].mxu0
    %v2182 = vpop.f32.mrb[0].mxu0
    %v2183 = vadd.f32 %v1952, %v2182
    %v2184 = vpop.f32.mrb[0].mxu0
    %2185 = vmatprep.mubr.bf16.mxu0 %v1882
    %2186 = vmatmul.mubr.bf16.gmra.mrb[0].mxu0 %v1881
    %v2187 = vpop.f32.mrb[0].mxu0
    %v2188 = vadd.f32 %v1952, %v2187
    %v2189 = vpop.f32.mrb[0].mxu0
    %v2190 = vpop.f32.mrb[0].mxu0
    %v2191 = vadd.f32 %v1952, %v2190
    %v2192 = vpop.f32.mrb[0].mxu0
    %2193 = vdwg.mxu0
    %2194 = vmatprep.subr.bf16.mxu0 0
    %2195 = vmatpush1.bf16.msra.mxu0 %v2097
    %2196 = vmatprep.subr.bf16.mxu0 0
    %2197 = vmatpush1.bf16.msra.mxu0 %v2098
    %2198 = vmatprep.subr.bf16.mxu0 0
    %2199 = vmatpush1.bf16.msra.mxu0 %v2099
    %2200 = vmatprep.subr.bf16.mxu0 0
    %2201 = vmatpush1.bf16.msra.mxu0 %v2100
    %2202 = vmatprep.subr.bf16.mxu0 0
    %2203 = vmatpush1.bf16.msra.mxu0 %v2101
    %2204 = vmatprep.subr.bf16.mxu0 0
    %2205 = vmatpush1.bf16.msra.mxu0 %v2102
    %2206 = vmatprep.subr.bf16.mxu0 0
    %2207 = vmatpush1.bf16.msra.mxu0 %v2103
    %2208 = vmatprep.subr.bf16.mxu0 0
    %2209 = vmatpush1.bf16.msra.mxu0 %v2104
    %2210 = vmatprep.subr.bf16.mxu0 0
    %2211 = vmatpush1.bf16.msra.mxu0 %v2105
    %2212 = vmatprep.subr.bf16.mxu0 0
    %2213 = vmatpush1.bf16.msra.mxu0 %v2106
    %2214 = vmatprep.subr.bf16.mxu0 0
    %2215 = vmatpush1.bf16.msra.mxu0 %v2107
    %2216 = vmatprep.subr.bf16.mxu0 0
    %2217 = vmatpush1.bf16.msra.mxu0 %v2108
    %2218 = vmatprep.subr.bf16.mxu0 0
    %2219 = vmatpush1.bf16.msra.mxu0 %v2109
    %2220 = vmatprep.subr.bf16.mxu0 0
    %2221 = vmatpush1.bf16.msra.mxu0 %v2110
    %2222 = vmatprep.subr.bf16.mxu0 0
    %2223 = vmatpush1.bf16.msra.mxu0 %v2111
    %2224 = vmatprep.subr.bf16.mxu0 0
    %2225 = vmatpush1.bf16.msra.mxu0 %v2112
    %2226 = vmatprep.mubr.bf16.mxu0 %v1880
    %2227 = vmatmul.mubr.bf16.gmra.mrb[0].mxu0 %v1879
    %v2228 = vpop.f32.mrb[0].mxu0
    %v2229 = vadd.f32 %v2180, %v2228
    %v2230 = vpop.f32.mrb[0].mxu0
    %v2231 = vpop.f32.mrb[0].mxu0
    %v2232 = vadd.f32 %v2183, %v2231
    %v2233 = vpop.f32.mrb[0].mxu0
    %2234 = vmatprep.mubr.bf16.mxu0 %v1884
    %2235 = vmatmul.mubr.bf16.gmra.mrb[0].mxu0 %v1883
    %v2236 = vpop.f32.mrb[0].mxu0
    %v2237 = vadd.f32 %v2188, %v2236
    %v2238 = vpop.f32.mrb[0].mxu0
    %v2239 = vpop.f32.mrb[0].mxu0
    %v2240 = vadd.f32 %v2191, %v2239
    %v2241 = vpop.f32.mrb[0].mxu0
    %2242 = vdwg.mxu0
    %v2243 = vadd.f32 %v2229, %v2232
    %v2244 = vadd.f32 %v2243, %v2237
    %v2245 = vsel %vm458, %v2240, 0.0
    %v2246 = vadd.f32 %v2244, %v2245
    %v2247 = vrot.slane %v2246, 4
    %v2248 = vadd.f32 %v2246, %v2247
    %v2249 = vrot.slane %v2248, 2
    %v2250 = vadd.f32 %v2248, %v2249
    %v2251 = vrot.slane %v2250, 1
    %v2252 = vadd.f32 %v2250, %v2251
    %v2253 = vmul.f32 %v2229, %v2229
    %v2254 = vmul.f32 %v2232, %v2232
    %v2255 = vmul.f32 %v2237, %v2237
    %v2256 = vmul.f32 %v2240, %v2240
    %v2257 = vadd.f32 %v2253, %v2254
    %v2258 = vadd.f32 %v2257, %v2255
    %v2259 = vsel %vm458, %v2256, 0.0
    %v2260 = vadd.f32 %v2258, %v2259
    %v2261 = vrot.slane %v2260, 4
    %v2262 = vadd.f32 %v2260, %v2261
    %v2263 = vrot.slane %v2262, 2
    %v2264 = vadd.f32 %v2262, %v2263
    %v2265 = vrot.slane %v2264, 1
    %v2266 = vadd.f32 %v2264, %v2265
    %v2267 = vsel %vm921, %v2252, %v2266
    %2268 = vmatprep.subr.mxu0 0.0
    %v2269 = vand.u32 %v97, 4294901760
    %2270 = vmatpush1.msra.mxu0 %v2269
    %2271 = vmatprep.subr.mxu0 0.0
    %v2272 = vand.u32 %v98, 4294901760
    %2273 = vmatpush1.msra.mxu0 %v2272
    %2274 = vmatprep.subr.mxu0 0.0
    %v2275 = vand.u32 %v99, 4294901760
    %2276 = vmatpush1.msra.mxu0 %v2275
    %2277 = vmatprep.subr.mxu0 0.0
    %v2278 = vand.u32 %v100, 4294901760
    %2279 = vmatpush1.msra.mxu0 %v2278
    %2280 = vmatprep.subr.mxu0 0.0
    %v2281 = vand.u32 %v101, 4294901760
    %2282 = vmatpush1.msra.mxu0 %v2281
    %2283 = vmatprep.subr.mxu0 0.0
    %v2284 = vand.u32 %v102, 4294901760
    %2285 = vmatpush1.msra.mxu0 %v2284
    %2286 = vmatprep.subr.mxu0 0.0
    %v2287 = vand.u32 %v103, 4294901760
    %2288 = vmatpush1.msra.mxu0 %v2287
    %2289 = vmatprep.subr.mxu0 0.0
    %v2290 = vand.u32 %v104, 4294901760
    %2291 = vmatpush1.msra.mxu0 %v2290
    %2292 = vmatprep.subr.mxu0 0.0
    %v2293 = vand.u32 %v105, 4294901760
    %2294 = vmatpush1.msra.mxu0 %v2293
    %2295 = vmatprep.subr.mxu0 0.0
    %v2296 = vand.u32 %v106, 4294901760
    %2297 = vmatpush1.msra.mxu0 %v2296
    %2298 = vmatprep.subr.mxu0 0.0
    %v2299 = vand.u32 %v107, 4294901760
    %2300 = vmatpush1.msra.mxu0 %v2299
    %2301 = vmatprep.subr.mxu0 0.0
    %v2302 = vand.u32 %v108, 4294901760
    %2303 = vmatpush1.msra.mxu0 %v2302
    %2304 = vmatprep.subr.mxu0 0.0
    %v2305 = vand.u32 %v109, 4294901760
    %2306 = vmatpush1.msra.mxu0 %v2305
    %2307 = vmatprep.subr.mxu0 0.0
    %v2308 = vand.u32 %v110, 4294901760
    %2309 = vmatpush1.msra.mxu0 %v2308
    %2310 = vmatprep.subr.mxu0 0.0
    %v2311 = vand.u32 %v111, 4294901760
    %2312 = vmatpush1.msra.mxu0 %v2311
    %2313 = vmatprep.subr.mxu0 0.0
    %v2314 = vand.u32 %v112, 4294901760
    %2315 = vmatpush1.msra.mxu0 %v2314
    %2316 = vmatprep.subr.mxu0 0.0
    %2317 = vmatpush1.msra.mxu0 0.0
    %2318 = vmatprep.subr.mxu0 0.0
    %2319 = vmatpush1.msra.mxu0 0.0
    %2320 = vmatprep.subr.mxu0 0.0
    %2321 = vmatpush1.msra.mxu0 0.0
    %2322 = vmatprep.subr.mxu0 0.0
    %2323 = vmatpush1.msra.mxu0 0.0
    %2324 = vmatprep.subr.mxu0 0.0
    %2325 = vmatpush1.msra.mxu0 0.0
    %2326 = vmatprep.subr.mxu0 0.0
    %2327 = vmatpush1.msra.mxu0 0.0
    %2328 = vmatprep.subr.mxu0 0.0
    %2329 = vmatpush1.msra.mxu0 0.0
    %2330 = vmatprep.subr.mxu0 0.0
    %2331 = vmatpush1.msra.mxu0 0.0
    %2332 = vmatprep.subr.mxu0 0.0
    %2333 = vmatpush1.msra.mxu0 0.0
    %2334 = vmatprep.subr.mxu0 0.0
    %2335 = vmatpush1.msra.mxu0 0.0
    %2336 = vmatprep.subr.mxu0 0.0
    %2337 = vmatpush1.msra.mxu0 0.0
    %2338 = vmatprep.subr.mxu0 0.0
    %2339 = vmatpush1.msra.mxu0 0.0
    %2340 = vmatprep.subr.mxu0 0.0
    %2341 = vmatpush1.msra.mxu0 0.0
    %2342 = vmatprep.subr.mxu0 0.0
    %2343 = vmatpush1.msra.mxu0 0.0
    %2344 = vmatprep.subr.mxu0 0.0
    %2345 = vmatpush1.msra.mxu0 0.0
    %2346 = vmatprep.subr.mxu0 0.0
    %2347 = vmatpush1.msra.mxu0 0.0
    %2348 = vmatprep.mubr.f32.mxu0 0.0
    %v2349 = vand.u32 %v2267, 4294901760
    %v2350 = vsub.f32 %v2267, %v2349
    %v2351 = vand.u32 %v2350, 4294901760
    %v2352 = vsub.f32 %v2350, %v2351
    %v2353 = vand.u32 %v2352, 4294901760
    %2354 = vmatmul.mubr.f32.gmra.mrb[0].mxu0 %v2353
    %v2355 = vpop.f32.mrb[0].mxu0
    %v2356 = vadd.f32 0.0, %v2355
    %v2357 = vpop.f32.mrb[0].mxu0
    %2358 = vdwg.mxu0
    %2359 = vmatprep.subr.mxu0 0.0
    %v2360 = vand.u32 %v97, 4294901760
    %v2361 = vsub.f32 %v97, %v2360
    %v2362 = vand.u32 %v2361, 4294901760
    %v2363 = vsub.f32 %v2361, %v2362
    %v2364 = vand.u32 %v2363, 4294901760
    %2365 = vmatpush1.msra.mxu0 %v2364
    %2366 = vmatprep.subr.mxu0 0.0
    %v2367 = vand.u32 %v98, 4294901760
    %v2368 = vsub.f32 %v98, %v2367
    %v2369 = vand.u32 %v2368, 4294901760
    %v2370 = vsub.f32 %v2368, %v2369
    %v2371 = vand.u32 %v2370, 4294901760
    %2372 = vmatpush1.msra.mxu0 %v2371
    %2373 = vmatprep.subr.mxu0 0.0
    %v2374 = vand.u32 %v99, 4294901760
    %v2375 = vsub.f32 %v99, %v2374
    %v2376 = vand.u32 %v2375, 4294901760
    %v2377 = vsub.f32 %v2375, %v2376
    %v2378 = vand.u32 %v2377, 4294901760
    %2379 = vmatpush1.msra.mxu0 %v2378
    %2380 = vmatprep.subr.mxu0 0.0
    %v2381 = vand.u32 %v100, 4294901760
    %v2382 = vsub.f32 %v100, %v2381
    %v2383 = vand.u32 %v2382, 4294901760
    %v2384 = vsub.f32 %v2382, %v2383
    %v2385 = vand.u32 %v2384, 4294901760
    %2386 = vmatpush1.msra.mxu0 %v2385
    %2387 = vmatprep.subr.mxu0 0.0
    %v2388 = vand.u32 %v101, 4294901760
    %v2389 = vsub.f32 %v101, %v2388
    %v2390 = vand.u32 %v2389, 4294901760
    %v2391 = vsub.f32 %v2389, %v2390
    %v2392 = vand.u32 %v2391, 4294901760
    %2393 = vmatpush1.msra.mxu0 %v2392
    %2394 = vmatprep.subr.mxu0 0.0
    %v2395 = vand.u32 %v102, 4294901760
    %v2396 = vsub.f32 %v102, %v2395
    %v2397 = vand.u32 %v2396, 4294901760
    %v2398 = vsub.f32 %v2396, %v2397
    %v2399 = vand.u32 %v2398, 4294901760
    %2400 = vmatpush1.msra.mxu0 %v2399
    %2401 = vmatprep.subr.mxu0 0.0
    %v2402 = vand.u32 %v103, 4294901760
    %v2403 = vsub.f32 %v103, %v2402
    %v2404 = vand.u32 %v2403, 4294901760
    %v2405 = vsub.f32 %v2403, %v2404
    %v2406 = vand.u32 %v2405, 4294901760
    %2407 = vmatpush1.msra.mxu0 %v2406
    %2408 = vmatprep.subr.mxu0 0.0
    %v2409 = vand.u32 %v104, 4294901760
    %v2410 = vsub.f32 %v104, %v2409
    %v2411 = vand.u32 %v2410, 4294901760
    %v2412 = vsub.f32 %v2410, %v2411
    %v2413 = vand.u32 %v2412, 4294901760
    %2414 = vmatpush1.msra.mxu0 %v2413
    %2415 = vmatprep.subr.mxu0 0.0
    %v2416 = vand.u32 %v105, 4294901760
    %v2417 = vsub.f32 %v105, %v2416
    %v2418 = vand.u32 %v2417, 4294901760
    %v2419 = vsub.f32 %v2417, %v2418
    %v2420 = vand.u32 %v2419, 4294901760
    %2421 = vmatpush1.msra.mxu0 %v2420
    %2422 = vmatprep.subr.mxu0 0.0
    %v2423 = vand.u32 %v106, 4294901760
    %v2424 = vsub.f32 %v106, %v2423
    %v2425 = vand.u32 %v2424, 4294901760
    %v2426 = vsub.f32 %v2424, %v2425
    %v2427 = vand.u32 %v2426, 4294901760
    %2428 = vmatpush1.msra.mxu0 %v2427
    %2429 = vmatprep.subr.mxu0 0.0
    %v2430 = vand.u32 %v107, 4294901760
    %v2431 = vsub.f32 %v107, %v2430
    %v2432 = vand.u32 %v2431, 4294901760
    %v2433 = vsub.f32 %v2431, %v2432
    %v2434 = vand.u32 %v2433, 4294901760
    %2435 = vmatpush1.msra.mxu0 %v2434
    %2436 = vmatprep.subr.mxu0 0.0
    %v2437 = vand.u32 %v108, 4294901760
    %v2438 = vsub.f32 %v108, %v2437
    %v2439 = vand.u32 %v2438, 4294901760
    %v2440 = vsub.f32 %v2438, %v2439
    %v2441 = vand.u32 %v2440, 4294901760
    %2442 = vmatpush1.msra.mxu0 %v2441
    %2443 = vmatprep.subr.mxu0 0.0
    %v2444 = vand.u32 %v109, 4294901760
    %v2445 = vsub.f32 %v109, %v2444
    %v2446 = vand.u32 %v2445, 4294901760
    %v2447 = vsub.f32 %v2445, %v2446
    %v2448 = vand.u32 %v2447, 4294901760
    %2449 = vmatpush1.msra.mxu0 %v2448
    %2450 = vmatprep.subr.mxu0 0.0
    %v2451 = vand.u32 %v110, 4294901760
    %v2452 = vsub.f32 %v110, %v2451
    %v2453 = vand.u32 %v2452, 4294901760
    %v2454 = vsub.f32 %v2452, %v2453
    %v2455 = vand.u32 %v2454, 4294901760
    %2456 = vmatpush1.msra.mxu0 %v2455
    %2457 = vmatprep.subr.mxu0 0.0
    %v2458 = vand.u32 %v111, 4294901760
    %v2459 = vsub.f32 %v111, %v2458
    %v2460 = vand.u32 %v2459, 4294901760
    %v2461 = vsub.f32 %v2459, %v2460
    %v2462 = vand.u32 %v2461, 4294901760
    %2463 = vmatpush1.msra.mxu0 %v2462
    %2464 = vmatprep.subr.mxu0 0.0
    %v2465 = vand.u32 %v112, 4294901760
    %v2466 = vsub.f32 %v112, %v2465
    %v2467 = vand.u32 %v2466, 4294901760
    %v2468 = vsub.f32 %v2466, %v2467
    %v2469 = vand.u32 %v2468, 4294901760
    %2470 = vmatpush1.msra.mxu0 %v2469
    %2471 = vmatprep.subr.mxu0 0.0
    %2472 = vmatpush1.msra.mxu0 0.0
    %2473 = vmatprep.subr.mxu0 0.0
    %2474 = vmatpush1.msra.mxu0 0.0
    %2475 = vmatprep.subr.mxu0 0.0
    %2476 = vmatpush1.msra.mxu0 0.0
    %2477 = vmatprep.subr.mxu0 0.0
    %2478 = vmatpush1.msra.mxu0 0.0
    %2479 = vmatprep.subr.mxu0 0.0
    %2480 = vmatpush1.msra.mxu0 0.0
    %2481 = vmatprep.subr.mxu0 0.0
    %2482 = vmatpush1.msra.mxu0 0.0
    %2483 = vmatprep.subr.mxu0 0.0
    %2484 = vmatpush1.msra.mxu0 0.0
    %2485 = vmatprep.subr.mxu0 0.0
    %2486 = vmatpush1.msra.mxu0 0.0
    %2487 = vmatprep.subr.mxu0 0.0
    %2488 = vmatpush1.msra.mxu0 0.0
    %2489 = vmatprep.subr.mxu0 0.0
    %2490 = vmatpush1.msra.mxu0 0.0
    %2491 = vmatprep.subr.mxu0 0.0
    %2492 = vmatpush1.msra.mxu0 0.0
    %2493 = vmatprep.subr.mxu0 0.0
    %2494 = vmatpush1.msra.mxu0 0.0
    %2495 = vmatprep.subr.mxu0 0.0
    %2496 = vmatpush1.msra.mxu0 0.0
    %2497 = vmatprep.subr.mxu0 0.0
    %2498 = vmatpush1.msra.mxu0 0.0
    %2499 = vmatprep.subr.mxu0 0.0
    %2500 = vmatpush1.msra.mxu0 0.0
    %2501 = vmatprep.subr.mxu0 0.0
    %2502 = vmatpush1.msra.mxu0 0.0
    %2503 = vmatprep.mubr.f32.mxu0 0.0
    %v2504 = vand.u32 %v2267, 4294901760
    %2505 = vmatmul.mubr.f32.gmra.mrb[0].mxu0 %v2504
    %v2506 = vpop.f32.mrb[0].mxu0
    %v2507 = vadd.f32 %v2356, %v2506
    %v2508 = vpop.f32.mrb[0].mxu0
    %2509 = vdwg.mxu0
    %2510 = vmatprep.subr.mxu0 0.0
    %v2511 = vand.u32 %v97, 4294901760
    %v2512 = vsub.f32 %v97, %v2511
    %2513 = vmatpush1.msra.mxu0 %v2512
    %2514 = vmatprep.subr.mxu0 0.0
    %v2515 = vand.u32 %v98, 4294901760
    %v2516 = vsub.f32 %v98, %v2515
    %2517 = vmatpush1.msra.mxu0 %v2516
    %2518 = vmatprep.subr.mxu0 0.0
    %v2519 = vand.u32 %v99, 4294901760
    %v2520 = vsub.f32 %v99, %v2519
    %2521 = vmatpush1.msra.mxu0 %v2520
    %2522 = vmatprep.subr.mxu0 0.0
    %v2523 = vand.u32 %v100, 4294901760
    %v2524 = vsub.f32 %v100, %v2523
    %2525 = vmatpush1.msra.mxu0 %v2524
    %2526 = vmatprep.subr.mxu0 0.0
    %v2527 = vand.u32 %v101, 4294901760
    %v2528 = vsub.f32 %v101, %v2527
    %2529 = vmatpush1.msra.mxu0 %v2528
    %2530 = vmatprep.subr.mxu0 0.0
    %v2531 = vand.u32 %v102, 4294901760
    %v2532 = vsub.f32 %v102, %v2531
    %2533 = vmatpush1.msra.mxu0 %v2532
    %2534 = vmatprep.subr.mxu0 0.0
    %v2535 = vand.u32 %v103, 4294901760
    %v2536 = vsub.f32 %v103, %v2535
    %2537 = vmatpush1.msra.mxu0 %v2536
    %2538 = vmatprep.subr.mxu0 0.0
    %v2539 = vand.u32 %v104, 4294901760
    %v2540 = vsub.f32 %v104, %v2539
    %2541 = vmatpush1.msra.mxu0 %v2540
    %2542 = vmatprep.subr.mxu0 0.0
    %v2543 = vand.u32 %v105, 4294901760
    %v2544 = vsub.f32 %v105, %v2543
    %2545 = vmatpush1.msra.mxu0 %v2544
    %2546 = vmatprep.subr.mxu0 0.0
    %v2547 = vand.u32 %v106, 4294901760
    %v2548 = vsub.f32 %v106, %v2547
    %2549 = vmatpush1.msra.mxu0 %v2548
    %2550 = vmatprep.subr.mxu0 0.0
    %v2551 = vand.u32 %v107, 4294901760
    %v2552 = vsub.f32 %v107, %v2551
    %2553 = vmatpush1.msra.mxu0 %v2552
    %2554 = vmatprep.subr.mxu0 0.0
    %v2555 = vand.u32 %v108, 4294901760
    %v2556 = vsub.f32 %v108, %v2555
    %2557 = vmatpush1.msra.mxu0 %v2556
    %2558 = vmatprep.subr.mxu0 0.0
    %v2559 = vand.u32 %v109, 4294901760
    %v2560 = vsub.f32 %v109, %v2559
    %2561 = vmatpush1.msra.mxu0 %v2560
    %2562 = vmatprep.subr.mxu0 0.0
    %v2563 = vand.u32 %v110, 4294901760
    %v2564 = vsub.f32 %v110, %v2563
    %2565 = vmatpush1.msra.mxu0 %v2564
    %2566 = vmatprep.subr.mxu0 0.0
    %v2567 = vand.u32 %v111, 4294901760
    %v2568 = vsub.f32 %v111, %v2567
    %2569 = vmatpush1.msra.mxu0 %v2568
    %2570 = vmatprep.subr.mxu0 0.0
    %v2571 = vand.u32 %v112, 4294901760
    %v2572 = vsub.f32 %v112, %v2571
    %2573 = vmatpush1.msra.mxu0 %v2572
    %2574 = vmatprep.subr.mxu0 0.0
    %2575 = vmatpush1.msra.mxu0 0.0
    %2576 = vmatprep.subr.mxu0 0.0
    %2577 = vmatpush1.msra.mxu0 0.0
    %2578 = vmatprep.subr.mxu0 0.0
    %2579 = vmatpush1.msra.mxu0 0.0
    %2580 = vmatprep.subr.mxu0 0.0
    %2581 = vmatpush1.msra.mxu0 0.0
    %2582 = vmatprep.subr.mxu0 0.0
    %2583 = vmatpush1.msra.mxu0 0.0
    %2584 = vmatprep.subr.mxu0 0.0
    %2585 = vmatpush1.msra.mxu0 0.0
    %2586 = vmatprep.subr.mxu0 0.0
    %2587 = vmatpush1.msra.mxu0 0.0
    %2588 = vmatprep.subr.mxu0 0.0
    %2589 = vmatpush1.msra.mxu0 0.0
    %2590 = vmatprep.subr.mxu0 0.0
    %2591 = vmatpush1.msra.mxu0 0.0
    %2592 = vmatprep.subr.mxu0 0.0
    %2593 = vmatpush1.msra.mxu0 0.0
    %2594 = vmatprep.subr.mxu0 0.0
    %2595 = vmatpush1.msra.mxu0 0.0
    %2596 = vmatprep.subr.mxu0 0.0
    %2597 = vmatpush1.msra.mxu0 0.0
    %2598 = vmatprep.subr.mxu0 0.0
    %2599 = vmatpush1.msra.mxu0 0.0
    %2600 = vmatprep.subr.mxu0 0.0
    %2601 = vmatpush1.msra.mxu0 0.0
    %2602 = vmatprep.subr.mxu0 0.0
    %2603 = vmatpush1.msra.mxu0 0.0
    %2604 = vmatprep.subr.mxu0 0.0
    %2605 = vmatpush1.msra.mxu0 0.0
    %2606 = vmatprep.mubr.f32.mxu0 0.0
    %v2607 = vand.u32 %v2267, 4294901760
    %v2608 = vsub.f32 %v2267, %v2607
    %2609 = vmatmul.mubr.f32.gmra.mrb[0].mxu0 %v2608
    %v2610 = vpop.f32.mrb[0].mxu0
    %v2611 = vadd.f32 %v2507, %v2610
    %v2612 = vpop.f32.mrb[0].mxu0
    %2613 = vdwg.mxu0
    %2614 = vmatprep.subr.mxu0 0.0
    %v2615 = vand.u32 %v97, 4294901760
    %2616 = vmatpush1.msra.mxu0 %v2615
    %2617 = vmatprep.subr.mxu0 0.0
    %v2618 = vand.u32 %v98, 4294901760
    %2619 = vmatpush1.msra.mxu0 %v2618
    %2620 = vmatprep.subr.mxu0 0.0
    %v2621 = vand.u32 %v99, 4294901760
    %2622 = vmatpush1.msra.mxu0 %v2621
    %2623 = vmatprep.subr.mxu0 0.0
    %v2624 = vand.u32 %v100, 4294901760
    %2625 = vmatpush1.msra.mxu0 %v2624
    %2626 = vmatprep.subr.mxu0 0.0
    %v2627 = vand.u32 %v101, 4294901760
    %2628 = vmatpush1.msra.mxu0 %v2627
    %2629 = vmatprep.subr.mxu0 0.0
    %v2630 = vand.u32 %v102, 4294901760
    %2631 = vmatpush1.msra.mxu0 %v2630
    %2632 = vmatprep.subr.mxu0 0.0
    %v2633 = vand.u32 %v103, 4294901760
    %2634 = vmatpush1.msra.mxu0 %v2633
    %2635 = vmatprep.subr.mxu0 0.0
    %v2636 = vand.u32 %v104, 4294901760
    %2637 = vmatpush1.msra.mxu0 %v2636
    %2638 = vmatprep.subr.mxu0 0.0
    %v2639 = vand.u32 %v105, 4294901760
    %2640 = vmatpush1.msra.mxu0 %v2639
    %2641 = vmatprep.subr.mxu0 0.0
    %v2642 = vand.u32 %v106, 4294901760
    %2643 = vmatpush1.msra.mxu0 %v2642
    %2644 = vmatprep.subr.mxu0 0.0
    %v2645 = vand.u32 %v107, 4294901760
    %2646 = vmatpush1.msra.mxu0 %v2645
    %2647 = vmatprep.subr.mxu0 0.0
    %v2648 = vand.u32 %v108, 4294901760
    %2649 = vmatpush1.msra.mxu0 %v2648
    %2650 = vmatprep.subr.mxu0 0.0
    %v2651 = vand.u32 %v109, 4294901760
    %2652 = vmatpush1.msra.mxu0 %v2651
    %2653 = vmatprep.subr.mxu0 0.0
    %v2654 = vand.u32 %v110, 4294901760
    %2655 = vmatpush1.msra.mxu0 %v2654
    %2656 = vmatprep.subr.mxu0 0.0
    %v2657 = vand.u32 %v111, 4294901760
    %2658 = vmatpush1.msra.mxu0 %v2657
    %2659 = vmatprep.subr.mxu0 0.0
    %v2660 = vand.u32 %v112, 4294901760
    %2661 = vmatpush1.msra.mxu0 %v2660
    %2662 = vmatprep.subr.mxu0 0.0
    %2663 = vmatpush1.msra.mxu0 0.0
    %2664 = vmatprep.subr.mxu0 0.0
    %2665 = vmatpush1.msra.mxu0 0.0
    %2666 = vmatprep.subr.mxu0 0.0
    %2667 = vmatpush1.msra.mxu0 0.0
    %2668 = vmatprep.subr.mxu0 0.0
    %2669 = vmatpush1.msra.mxu0 0.0
    %2670 = vmatprep.subr.mxu0 0.0
    %2671 = vmatpush1.msra.mxu0 0.0
    %2672 = vmatprep.subr.mxu0 0.0
    %2673 = vmatpush1.msra.mxu0 0.0
    %2674 = vmatprep.subr.mxu0 0.0
    %2675 = vmatpush1.msra.mxu0 0.0
    %2676 = vmatprep.subr.mxu0 0.0
    %2677 = vmatpush1.msra.mxu0 0.0
    %2678 = vmatprep.subr.mxu0 0.0
    %2679 = vmatpush1.msra.mxu0 0.0
    %2680 = vmatprep.subr.mxu0 0.0
    %2681 = vmatpush1.msra.mxu0 0.0
    %2682 = vmatprep.subr.mxu0 0.0
    %2683 = vmatpush1.msra.mxu0 0.0
    %2684 = vmatprep.subr.mxu0 0.0
    %2685 = vmatpush1.msra.mxu0 0.0
    %2686 = vmatprep.subr.mxu0 0.0
    %2687 = vmatpush1.msra.mxu0 0.0
    %2688 = vmatprep.subr.mxu0 0.0
    %2689 = vmatpush1.msra.mxu0 0.0
    %2690 = vmatprep.subr.mxu0 0.0
    %2691 = vmatpush1.msra.mxu0 0.0
    %2692 = vmatprep.subr.mxu0 0.0
    %2693 = vmatpush1.msra.mxu0 0.0
    %2694 = vmatprep.mubr.f32.mxu0 0.0
    %v2695 = vand.u32 %v2267, 4294901760
    %v2696 = vsub.f32 %v2267, %v2695
    %v2697 = vand.u32 %v2696, 4294901760
    %2698 = vmatmul.mubr.f32.gmra.mrb[0].mxu0 %v2697
    %v2699 = vpop.f32.mrb[0].mxu0
    %v2700 = vadd.f32 %v2611, %v2699
    %v2701 = vpop.f32.mrb[0].mxu0
    %2702 = vdwg.mxu0
    %2703 = vmatprep.subr.mxu0 0.0
    %v2704 = vand.u32 %v97, 4294901760
    %v2705 = vsub.f32 %v97, %v2704
    %v2706 = vand.u32 %v2705, 4294901760
    %2707 = vmatpush1.msra.mxu0 %v2706
    %2708 = vmatprep.subr.mxu0 0.0
    %v2709 = vand.u32 %v98, 4294901760
    %v2710 = vsub.f32 %v98, %v2709
    %v2711 = vand.u32 %v2710, 4294901760
    %2712 = vmatpush1.msra.mxu0 %v2711
    %2713 = vmatprep.subr.mxu0 0.0
    %v2714 = vand.u32 %v99, 4294901760
    %v2715 = vsub.f32 %v99, %v2714
    %v2716 = vand.u32 %v2715, 4294901760
    %2717 = vmatpush1.msra.mxu0 %v2716
    %2718 = vmatprep.subr.mxu0 0.0
    %v2719 = vand.u32 %v100, 4294901760
    %v2720 = vsub.f32 %v100, %v2719
    %v2721 = vand.u32 %v2720, 4294901760
    %2722 = vmatpush1.msra.mxu0 %v2721
    %2723 = vmatprep.subr.mxu0 0.0
    %v2724 = vand.u32 %v101, 4294901760
    %v2725 = vsub.f32 %v101, %v2724
    %v2726 = vand.u32 %v2725, 4294901760
    %2727 = vmatpush1.msra.mxu0 %v2726
    %2728 = vmatprep.subr.mxu0 0.0
    %v2729 = vand.u32 %v102, 4294901760
    %v2730 = vsub.f32 %v102, %v2729
    %v2731 = vand.u32 %v2730, 4294901760
    %2732 = vmatpush1.msra.mxu0 %v2731
    %2733 = vmatprep.subr.mxu0 0.0
    %v2734 = vand.u32 %v103, 4294901760
    %v2735 = vsub.f32 %v103, %v2734
    %v2736 = vand.u32 %v2735, 4294901760
    %2737 = vmatpush1.msra.mxu0 %v2736
    %2738 = vmatprep.subr.mxu0 0.0
    %v2739 = vand.u32 %v104, 4294901760
    %v2740 = vsub.f32 %v104, %v2739
    %v2741 = vand.u32 %v2740, 4294901760
    %2742 = vmatpush1.msra.mxu0 %v2741
    %2743 = vmatprep.subr.mxu0 0.0
    %v2744 = vand.u32 %v105, 4294901760
    %v2745 = vsub.f32 %v105, %v2744
    %v2746 = vand.u32 %v2745, 4294901760
    %2747 = vmatpush1.msra.mxu0 %v2746
    %2748 = vmatprep.subr.mxu0 0.0
    %v2749 = vand.u32 %v106, 4294901760
    %v2750 = vsub.f32 %v106, %v2749
    %v2751 = vand.u32 %v2750, 4294901760
    %2752 = vmatpush1.msra.mxu0 %v2751
    %2753 = vmatprep.subr.mxu0 0.0
    %v2754 = vand.u32 %v107, 4294901760
    %v2755 = vsub.f32 %v107, %v2754
    %v2756 = vand.u32 %v2755, 4294901760
    %2757 = vmatpush1.msra.mxu0 %v2756
    %2758 = vmatprep.subr.mxu0 0.0
    %v2759 = vand.u32 %v108, 4294901760
    %v2760 = vsub.f32 %v108, %v2759
    %v2761 = vand.u32 %v2760, 4294901760
    %2762 = vmatpush1.msra.mxu0 %v2761
    %2763 = vmatprep.subr.mxu0 0.0
    %v2764 = vand.u32 %v109, 4294901760
    %v2765 = vsub.f32 %v109, %v2764
    %v2766 = vand.u32 %v2765, 4294901760
    %2767 = vmatpush1.msra.mxu0 %v2766
    %2768 = vmatprep.subr.mxu0 0.0
    %v2769 = vand.u32 %v110, 4294901760
    %v2770 = vsub.f32 %v110, %v2769
    %v2771 = vand.u32 %v2770, 4294901760
    %2772 = vmatpush1.msra.mxu0 %v2771
    %2773 = vmatprep.subr.mxu0 0.0
    %v2774 = vand.u32 %v111, 4294901760
    %v2775 = vsub.f32 %v111, %v2774
    %v2776 = vand.u32 %v2775, 4294901760
    %2777 = vmatpush1.msra.mxu0 %v2776
    %2778 = vmatprep.subr.mxu0 0.0
    %v2779 = vand.u32 %v112, 4294901760
    %v2780 = vsub.f32 %v112, %v2779
    %v2781 = vand.u32 %v2780, 4294901760
    %2782 = vmatpush1.msra.mxu0 %v2781
    %2783 = vmatprep.subr.mxu0 0.0
    %2784 = vmatpush1.msra.mxu0 0.0
    %2785 = vmatprep.subr.mxu0 0.0
    %2786 = vmatpush1.msra.mxu0 0.0
    %2787 = vmatprep.subr.mxu0 0.0
    %2788 = vmatpush1.msra.mxu0 0.0
    %2789 = vmatprep.subr.mxu0 0.0
    %2790 = vmatpush1.msra.mxu0 0.0
    %2791 = vmatprep.subr.mxu0 0.0
    %2792 = vmatpush1.msra.mxu0 0.0
    %2793 = vmatprep.subr.mxu0 0.0
    %2794 = vmatpush1.msra.mxu0 0.0
    %2795 = vmatprep.subr.mxu0 0.0
    %2796 = vmatpush1.msra.mxu0 0.0
    %2797 = vmatprep.subr.mxu0 0.0
    %2798 = vmatpush1.msra.mxu0 0.0
    %2799 = vmatprep.subr.mxu0 0.0
    %2800 = vmatpush1.msra.mxu0 0.0
    %2801 = vmatprep.subr.mxu0 0.0
    %2802 = vmatpush1.msra.mxu0 0.0
    %2803 = vmatprep.subr.mxu0 0.0
    %2804 = vmatpush1.msra.mxu0 0.0
    %2805 = vmatprep.subr.mxu0 0.0
    %2806 = vmatpush1.msra.mxu0 0.0
    %2807 = vmatprep.subr.mxu0 0.0
    %2808 = vmatpush1.msra.mxu0 0.0
    %2809 = vmatprep.subr.mxu0 0.0
    %2810 = vmatpush1.msra.mxu0 0.0
    %2811 = vmatprep.subr.mxu0 0.0
    %2812 = vmatpush1.msra.mxu0 0.0
    %2813 = vmatprep.subr.mxu0 0.0
    %2814 = vmatpush1.msra.mxu0 0.0
    %2815 = vmatprep.mubr.f32.mxu0 0.0
    %v2816 = vand.u32 %v2267, 4294901760
    %2817 = vmatmul.mubr.f32.gmra.mrb[0].mxu0 %v2816
    %v2818 = vpop.f32.mrb[0].mxu0
    %v2819 = vadd.f32 %v2700, %v2818
    %v2820 = vpop.f32.mrb[0].mxu0
    %2821 = vdwg.mxu0
    %2822 = vmatprep.subr.mxu0 0.0
    %v2823 = vand.u32 %v97, 4294901760
    %2824 = vmatpush1.msra.mxu0 %v2823
    %2825 = vmatprep.subr.mxu0 0.0
    %v2826 = vand.u32 %v98, 4294901760
    %2827 = vmatpush1.msra.mxu0 %v2826
    %2828 = vmatprep.subr.mxu0 0.0
    %v2829 = vand.u32 %v99, 4294901760
    %2830 = vmatpush1.msra.mxu0 %v2829
    %2831 = vmatprep.subr.mxu0 0.0
    %v2832 = vand.u32 %v100, 4294901760
    %2833 = vmatpush1.msra.mxu0 %v2832
    %2834 = vmatprep.subr.mxu0 0.0
    %v2835 = vand.u32 %v101, 4294901760
    %2836 = vmatpush1.msra.mxu0 %v2835
    %2837 = vmatprep.subr.mxu0 0.0
    %v2838 = vand.u32 %v102, 4294901760
    %2839 = vmatpush1.msra.mxu0 %v2838
    %2840 = vmatprep.subr.mxu0 0.0
    %v2841 = vand.u32 %v103, 4294901760
    %2842 = vmatpush1.msra.mxu0 %v2841
    %2843 = vmatprep.subr.mxu0 0.0
    %v2844 = vand.u32 %v104, 4294901760
    %2845 = vmatpush1.msra.mxu0 %v2844
    %2846 = vmatprep.subr.mxu0 0.0
    %v2847 = vand.u32 %v105, 4294901760
    %2848 = vmatpush1.msra.mxu0 %v2847
    %2849 = vmatprep.subr.mxu0 0.0
    %v2850 = vand.u32 %v106, 4294901760
    %2851 = vmatpush1.msra.mxu0 %v2850
    %2852 = vmatprep.subr.mxu0 0.0
    %v2853 = vand.u32 %v107, 4294901760
    %2854 = vmatpush1.msra.mxu0 %v2853
    %2855 = vmatprep.subr.mxu0 0.0
    %v2856 = vand.u32 %v108, 4294901760
    %2857 = vmatpush1.msra.mxu0 %v2856
    %2858 = vmatprep.subr.mxu0 0.0
    %v2859 = vand.u32 %v109, 4294901760
    %2860 = vmatpush1.msra.mxu0 %v2859
    %2861 = vmatprep.subr.mxu0 0.0
    %v2862 = vand.u32 %v110, 4294901760
    %2863 = vmatpush1.msra.mxu0 %v2862
    %2864 = vmatprep.subr.mxu0 0.0
    %v2865 = vand.u32 %v111, 4294901760
    %2866 = vmatpush1.msra.mxu0 %v2865
    %2867 = vmatprep.subr.mxu0 0.0
    %v2868 = vand.u32 %v112, 4294901760
    %2869 = vmatpush1.msra.mxu0 %v2868
    %2870 = vmatprep.subr.mxu0 0.0
    %2871 = vmatpush1.msra.mxu0 0.0
    %2872 = vmatprep.subr.mxu0 0.0
    %2873 = vmatpush1.msra.mxu0 0.0
    %2874 = vmatprep.subr.mxu0 0.0
    %2875 = vmatpush1.msra.mxu0 0.0
    %2876 = vmatprep.subr.mxu0 0.0
    %2877 = vmatpush1.msra.mxu0 0.0
    %2878 = vmatprep.subr.mxu0 0.0
    %2879 = vmatpush1.msra.mxu0 0.0
    %2880 = vmatprep.subr.mxu0 0.0
    %2881 = vmatpush1.msra.mxu0 0.0
    %2882 = vmatprep.subr.mxu0 0.0
    %2883 = vmatpush1.msra.mxu0 0.0
    %2884 = vmatprep.subr.mxu0 0.0
    %2885 = vmatpush1.msra.mxu0 0.0
    %2886 = vmatprep.subr.mxu0 0.0
    %2887 = vmatpush1.msra.mxu0 0.0
    %2888 = vmatprep.subr.mxu0 0.0
    %2889 = vmatpush1.msra.mxu0 0.0
    %2890 = vmatprep.subr.mxu0 0.0
    %2891 = vmatpush1.msra.mxu0 0.0
    %2892 = vmatprep.subr.mxu0 0.0
    %2893 = vmatpush1.msra.mxu0 0.0
    %2894 = vmatprep.subr.mxu0 0.0
    %2895 = vmatpush1.msra.mxu0 0.0
    %2896 = vmatprep.subr.mxu0 0.0
    %2897 = vmatpush1.msra.mxu0 0.0
    %2898 = vmatprep.subr.mxu0 0.0
    %2899 = vmatpush1.msra.mxu0 0.0
    %2900 = vmatprep.subr.mxu0 0.0
    %2901 = vmatpush1.msra.mxu0 0.0
    %2902 = vmatprep.mubr.f32.mxu0 0.0
    %v2903 = vand.u32 %v2267, 4294901760
    %2904 = vmatmul.mubr.f32.gmra.mrb[0].mxu0 %v2903
    %v2905 = vpop.f32.mrb[0].mxu0
    %v2906 = vadd.f32 %v2819, %v2905
    %v2907 = vpop.f32.mrb[0].mxu0
    %2908 = vdwg.mxu0
    %v2909 = vmul.f32 %v2906, %v2906
    %v2911 = vrot.slane %v2909, 7
    %v2913 = vsub.f32 %v2906, %v2911
    %v2914 = vadd.f32 %v2913, 1e-05
    %v2915 = vrsqrt.pop %v2914
    %v2916 = vlaneseq
    %v2917 = vshrl.u32 %v2916, 7
    %v2918 = vsub.s32 0, %v2917
    %v2919 = vrot.slane %v2906, %v2918
    %v2920 = vsub.f32 %v2229, %v2919
    %v2921 = vsub.f32 %v2232, %v2919
    %v2922 = vsub.f32 %v2237, %v2919
    %v2923 = vsub.f32 %v2240, %v2919
    %v2925 = vrot.slane %v77, 7
    %v2927 = vmul.f32 %v2915, %v2925
    %v2928 = vlaneseq
    %v2929 = vshrl.u32 %v2928, 7
    %v2930 = vsub.s32 1, %v2929
    %v2931 = vrot.slane %v2927, %v2930
    %v2932 = vmul.f32 %v2920, %v2931
    %v2933 = vmul.f32 %v2921, %v2931
    %v2934 = vmul.f32 %v2922, %v2931
    %v2935 = vmul.f32 %v2923, %v2931
    %v2936 = vlaneseq
    %v2937 = vshrl.u32 %v2936, 7
    %v2938 = vsub.s32 0, %v2937
    %v2939 = vrot.slane %v78, %v2938
    %v2940 = vadd.f32 %v2932, %v2939
    %v2941 = vadd.f32 %v2933, %v2939
    %v2942 = vadd.f32 %v2934, %v2939
    %v2943 = vadd.f32 %v2935, %v2939
    %v2944 = vmax.f32 %v2940, 0.0
    %v2945 = vmax.f32 %v2941, 0.0
    %v2946 = vmax.f32 %v2942, 0.0
    %v2947 = vmax.f32 %v2943, 0.0
    %v2948 = vpack.c.bf16 %v2945, %v2944
    %v2949 = vpack.c.bf16 %v2947, %v2946
    %v2950 = vld [vmem:[#allocation8 + $0x320] sm:$0xf]
    %v2951 = vld [vmem:[#allocation8 + $0x324] sm:$0xf]
    %v2952 = vld [vmem:[#allocation8 + $0x328] sm:$0xf]
    %v2953 = vld [vmem:[#allocation8 + $0x32c] sm:$0xf]
    %v2954 = vld [vmem:[#allocation8 + $0x330] sm:$0xf]
    %v2955 = vld [vmem:[#allocation8 + $0x334] sm:$0xf]
    %v2956 = vld [vmem:[#allocation8 + $0x338] sm:$0xf]
    %v2964 = vunpack.c.l.b16 %v2950
    %v2965 = vunpack.c.l.b16 %v2951
    %v2966 = vunpack.c.l.b16 %v2952
    %v2967 = vunpack.c.l.b16 %v2953
    %v2968 = vunpack.c.l.b16 %v2954
    %v2969 = vunpack.c.l.b16 %v2955
    %v2970 = vunpack.c.l.b16 %v2956
    %v2971 = vpack.c.b16 %v2965, %v2964
    %v2972 = vpack.c.b16 %v2967, %v2966
    %v2973 = vpack.c.b16 %v2969, %v2968
    %v2974 = vpack.c.b16 %v2970, %v2970
    %vm2975 = vcmask 228352
    %v2977 = vsel %vm2975, %v2971, 0
    %v2980 = vsel %vm2975, %v2972, 0
    %v2983 = vsel %vm2975, %v2973, 0
    %v2986 = vsel %vm2975, %v2974, 0
    %v2989 = vsel %vm460, %v2949, 0
    %2991 = vmatprep.subr.bf16.mxu0 0
    %2992 = vmatpush1.bf16.msra.mxu0 %v2948
    %2993 = vmatprep.subr.bf16.mxu0 0
    %2994 = vmatpush1.bf16.msra.mxu0 %v2989
    %2995 = vmatprep.subr.bf16.mxu0 0
    %2996 = vmatpush1.bf16.msra.mxu0 0
    %2997 = vmatprep.subr.bf16.mxu0 0
    %2998 = vmatpush1.bf16.msra.mxu0 0
    %2999 = vmatprep.subr.bf16.mxu0 0
    %3000 = vmatpush1.bf16.msra.mxu0 0
    %3001 = vmatprep.subr.bf16.mxu0 0
    %3002 = vmatpush1.bf16.msra.mxu0 0
    %3003 = vmatprep.subr.bf16.mxu0 0
    %3004 = vmatpush1.bf16.msra.mxu0 0
    %3005 = vmatprep.subr.bf16.mxu0 0
    %3006 = vmatpush1.bf16.msra.mxu0 0
    %3007 = vmatprep.subr.bf16.mxu0 0
    %3008 = vmatpush1.bf16.msra.mxu0 0
    %3009 = vmatprep.subr.bf16.mxu0 0
    %3010 = vmatpush1.bf16.msra.mxu0 0
    %3011 = vmatprep.subr.bf16.mxu0 0
    %3012 = vmatpush1.bf16.msra.mxu0 0
    %3013 = vmatprep.subr.bf16.mxu0 0
    %3014 = vmatpush1.bf16.msra.mxu0 0
    %3015 = vmatprep.subr.bf16.mxu0 0
    %3016 = vmatpush1.bf16.msra.mxu0 0
    %3017 = vmatprep.subr.bf16.mxu0 0
    %3018 = vmatpush1.bf16.msra.mxu0 0
    %3019 = vmatprep.subr.bf16.mxu0 0
    %3020 = vmatpush1.bf16.msra.mxu0 0
    %3021 = vmatprep.subr.bf16.mxu0 0
    %3022 = vmatpush1.bf16.msra.mxu0 0
    %3023 = vmatprep.mubr.bf16.mxu0 0
    %3024 = vmatmul.mubr.bf16.gmra.mrb[0].mxu0 %v2977
    %v3025 = vpop.f32.mrb[0].mxu0
    %v3026 = vadd.f32 0.0, %v3025
    %v3027 = vpop.f32.mrb[0].mxu0
    %v3028 = vpop.f32.mrb[0].mxu0
    %v3029 = vadd.f32 0.0, %v3028
    %v3030 = vpop.f32.mrb[0].mxu0
    %3031 = vmatprep.mubr.bf16.mxu0 0
    %3032 = vmatmul.mubr.bf16.gmra.mrb[0].mxu0 %v2980
    %v3033 = vpop.f32.mrb[0].mxu0
    %v3034 = vadd.f32 0.0, %v3033
    %v3035 = vpop.f32.mrb[0].mxu0
    %v3036 = vpop.f32.mrb[0].mxu0
    %v3037 = vadd.f32 0.0, %v3036
    %v3038 = vpop.f32.mrb[0].mxu0
    %3039 = vmatprep.mubr.bf16.mxu0 0
    %3040 = vmatmul.mubr.bf16.gmra.mrb[0].mxu0 %v2983
    %v3041 = vpop.f32.mrb[0].mxu0
    %v3042 = vadd.f32 0.0, %v3041
    %v3043 = vpop.f32.mrb[0].mxu0
    %v3044 = vpop.f32.mrb[0].mxu0
    %v3045 = vadd.f32 0.0, %v3044
    %v3046 = vpop.f32.mrb[0].mxu0
    %3047 = vmatprep.mubr.bf16.mxu0 0
    %3048 = vmatmul.mubr.bf16.gmra.mrb[0].mxu0 %v2986
    %v3049 = vpop.f32.mrb[0].mxu0
    %v3050 = vadd.f32 0.0, %v3049
    %v3051 = vpop.f32.mrb[0].mxu0
    %v3052 = vpop.f32.mrb[0].mxu0
    %v3053 = vpop.f32.mrb[0].mxu0
    %3054 = vdwg.mxu0
    %v3055 = vld [vmem:[#allocation8 + $0x33c] sm:$0xf]
    %v3056 = vld [vmem:[#allocation8 + $0x340] sm:$0xf]
    %v3057 = vld [vmem:[#allocation8 + $0x344] sm:$0xf]
    %v3058 = vld [vmem:[#allocation8 + $0x348] sm:$0xf]
    %v3059 = vld [vmem:[#allocation8 + $0x34c] sm:$0xf]
    %v3060 = vld [vmem:[#allocation8 + $0x350] sm:$0xf]
    %v3061 = vld [vmem:[#allocation8 + $0x354] sm:$0xf]
    %v3069 = vunpack.c.l.b16 %v3055
    %v3070 = vunpack.c.l.b16 %v3056
    %v3071 = vunpack.c.l.b16 %v3057
    %v3072 = vunpack.c.l.b16 %v3058
    %v3073 = vunpack.c.l.b16 %v3059
    %v3074 = vunpack.c.l.b16 %v3060
    %v3075 = vunpack.c.l.b16 %v3061
    %v3076 = vpack.c.b16 %v3070, %v3069
    %v3077 = vpack.c.b16 %v3072, %v3071
    %v3078 = vpack.c.b16 %v3074, %v3073
    %v3079 = vpack.c.b16 %v3075, %v3075
    %v3081 = vsel %vm2975, %v3076, 0
    %v3084 = vsel %vm2975, %v3077, 0
    %v3087 = vsel %vm2975, %v3078, 0
    %v3090 = vsel %vm2975, %v3079, 0
    %3092 = vmatprep.subr.bf16.mxu0 0
    %3093 = vmatpush1.bf16.msra.mxu0 %v2948
    %3094 = vmatprep.subr.bf16.mxu0 0
    %3095 = vmatpush1.bf16.msra.mxu0 %v2989
    %3096 = vmatprep.subr.bf16.mxu0 0
    %3097 = vmatpush1.bf16.msra.mxu0 0
    %3098 = vmatprep.subr.bf16.mxu0 0
    %3099 = vmatpush1.bf16.msra.mxu0 0
    %3100 = vmatprep.subr.bf16.mxu0 0
    %3101 = vmatpush1.bf16.msra.mxu0 0
    %3102 = vmatprep.subr.bf16.mxu0 0
    %3103 = vmatpush1.bf16.msra.mxu0 0
    %3104 = vmatprep.subr.bf16.mxu0 0
    %3105 = vmatpush1.bf16.msra.mxu0 0
    %3106 = vmatprep.subr.bf16.mxu0 0
    %3107 = vmatpush1.bf16.msra.mxu0 0
    %3108 = vmatprep.subr.bf16.mxu0 0
    %3109 = vmatpush1.bf16.msra.mxu0 0
    %3110 = vmatprep.subr.bf16.mxu0 0
    %3111 = vmatpush1.bf16.msra.mxu0 0
    %3112 = vmatprep.subr.bf16.mxu0 0
    %3113 = vmatpush1.bf16.msra.mxu0 0
    %3114 = vmatprep.subr.bf16.mxu0 0
    %3115 = vmatpush1.bf16.msra.mxu0 0
    %3116 = vmatprep.subr.bf16.mxu0 0
    %3117 = vmatpush1.bf16.msra.mxu0 0
    %3118 = vmatprep.subr.bf16.mxu0 0
    %3119 = vmatpush1.bf16.msra.mxu0 0
    %3120 = vmatprep.subr.bf16.mxu0 0
    %3121 = vmatpush1.bf16.msra.mxu0 0
    %3122 = vmatprep.subr.bf16.mxu0 0
    %3123 = vmatpush1.bf16.msra.mxu0 0
    %3124 = vmatprep.mubr.bf16.mxu0 0
    %3125 = vmatmul.mubr.bf16.gmra.mrb[0].mxu0 %v3081
    %v3126 = vpop.f32.mrb[0].mxu0
    %v3127 = vadd.f32 0.0, %v3126
    %v3128 = vpop.f32.mrb[0].mxu0
    %v3129 = vpop.f32.mrb[0].mxu0
    %v3130 = vadd.f32 0.0, %v3129
    %v3131 = vpop.f32.mrb[0].mxu0
    %3132 = vmatprep.mubr.bf16.mxu0 0
    %3133 = vmatmul.mubr.bf16.gmra.mrb[0].mxu0 %v3084
    %v3134 = vpop.f32.mrb[0].mxu0
    %v3135 = vadd.f32 0.0, %v3134
    %v3136 = vpop.f32.mrb[0].mxu0
    %v3137 = vpop.f32.mrb[0].mxu0
    %v3138 = vadd.f32 0.0, %v3137
    %v3139 = vpop.f32.mrb[0].mxu0
    %3140 = vmatprep.mubr.bf16.mxu0 0
    %3141 = vmatmul.mubr.bf16.gmra.mrb[0].mxu0 %v3087
    %v3142 = vpop.f32.mrb[0].mxu0
    %v3143 = vadd.f32 0.0, %v3142
    %v3144 = vpop.f32.mrb[0].mxu0
    %v3145 = vpop.f32.mrb[0].mxu0
    %v3146 = vadd.f32 0.0, %v3145
    %v3147 = vpop.f32.mrb[0].mxu0
    %3148 = vmatprep.mubr.bf16.mxu0 0
    %3149 = vmatmul.mubr.bf16.gmra.mrb[0].mxu0 %v3090
    %v3150 = vpop.f32.mrb[0].mxu0
    %v3151 = vadd.f32 0.0, %v3150
    %v3152 = vpop.f32.mrb[0].mxu0
    %v3153 = vpop.f32.mrb[0].mxu0
    %v3154 = vpop.f32.mrb[0].mxu0
    %3155 = vdwg.mxu0
    %v3156 = vld [vmem:[#allocation8 + $0x358] sm:$0xf]
    %v3157 = vld [vmem:[#allocation8 + $0x35c] sm:$0xf]
    %v3158 = vld [vmem:[#allocation8 + $0x360] sm:$0xf]
    %v3159 = vld [vmem:[#allocation8 + $0x364] sm:$0xf]
    %v3160 = vld [vmem:[#allocation8 + $0x368] sm:$0xf]
    %v3161 = vld [vmem:[#allocation8 + $0x36c] sm:$0xf]
    %v3162 = vld [vmem:[#allocation8 + $0x370] sm:$0xf]
    %v3170 = vunpack.c.l.b16 %v3156
    %v3171 = vunpack.c.l.b16 %v3157
    %v3172 = vunpack.c.l.b16 %v3158
    %v3173 = vunpack.c.l.b16 %v3159
    %v3174 = vunpack.c.l.b16 %v3160
    %v3175 = vunpack.c.l.b16 %v3161
    %v3176 = vunpack.c.l.b16 %v3162
    %v3177 = vpack.c.b16 %v3171, %v3170
    %v3178 = vpack.c.b16 %v3173, %v3172
    %v3179 = vpack.c.b16 %v3175, %v3174
    %v3180 = vpack.c.b16 %v3176, %v3176
    %v3182 = vsel %vm2975, %v3177, 0
    %v3185 = vsel %vm2975, %v3178, 0
    %v3188 = vsel %vm2975, %v3179, 0
    %v3191 = vsel %vm2975, %v3180, 0
    %3193 = vmatprep.subr.bf16.mxu0 0
    %3194 = vmatpush1.bf16.msra.mxu0 %v2948
    %3195 = vmatprep.subr.bf16.mxu0 0
    %3196 = vmatpush1.bf16.msra.mxu0 %v2989
    %3197 = vmatprep.subr.bf16.mxu0 0
    %3198 = vmatpush1.bf16.msra.mxu0 0
    %3199 = vmatprep.subr.bf16.mxu0 0
    %3200 = vmatpush1.bf16.msra.mxu0 0
    %3201 = vmatprep.subr.bf16.mxu0 0
    %3202 = vmatpush1.bf16.msra.mxu0 0
    %3203 = vmatprep.subr.bf16.mxu0 0
    %3204 = vmatpush1.bf16.msra.mxu0 0
    %3205 = vmatprep.subr.bf16.mxu0 0
    %3206 = vmatpush1.bf16.msra.mxu0 0
    %3207 = vmatprep.subr.bf16.mxu0 0
    %3208 = vmatpush1.bf16.msra.mxu0 0
    %3209 = vmatprep.subr.bf16.mxu0 0
    %3210 = vmatpush1.bf16.msra.mxu0 0
    %3211 = vmatprep.subr.bf16.mxu0 0
    %3212 = vmatpush1.bf16.msra.mxu0 0
    %3213 = vmatprep.subr.bf16.mxu0 0
    %3214 = vmatpush1.bf16.msra.mxu0 0
    %3215 = vmatprep.subr.bf16.mxu0 0
    %3216 = vmatpush1.bf16.msra.mxu0 0
    %3217 = vmatprep.subr.bf16.mxu0 0
    %3218 = vmatpush1.bf16.msra.mxu0 0
    %3219 = vmatprep.subr.bf16.mxu0 0
    %3220 = vmatpush1.bf16.msra.mxu0 0
    %3221 = vmatprep.subr.bf16.mxu0 0
    %3222 = vmatpush1.bf16.msra.mxu0 0
    %3223 = vmatprep.subr.bf16.mxu0 0
    %3224 = vmatpush1.bf16.msra.mxu0 0
    %3225 = vmatprep.mubr.bf16.mxu0 0
    %3226 = vmatmul.mubr.bf16.gmra.mrb[0].mxu0 %v3182
    %v3227 = vpop.f32.mrb[0].mxu0
    %v3228 = vadd.f32 0.0, %v3227
    %v3229 = vpop.f32.mrb[0].mxu0
    %v3230 = vpop.f32.mrb[0].mxu0
    %v3231 = vadd.f32 0.0, %v3230
    %v3232 = vpop.f32.mrb[0].mxu0
    %3233 = vmatprep.mubr.bf16.mxu0 0
    %3234 = vmatmul.mubr.bf16.gmra.mrb[0].mxu0 %v3185
    %v3235 = vpop.f32.mrb[0].mxu0
    %v3236 = vadd.f32 0.0, %v3235
    %v3237 = vpop.f32.mrb[0].mxu0
    %v3238 = vpop.f32.mrb[0].mxu0
    %v3239 = vadd.f32 0.0, %v3238
    %v3240 = vpop.f32.mrb[0].mxu0
    %3241 = vmatprep.mubr.bf16.mxu0 0
    %3242 = vmatmul.mubr.bf16.gmra.mrb[0].mxu0 %v3188
    %v3243 = vpop.f32.mrb[0].mxu0
    %v3244 = vadd.f32 0.0, %v3243
    %v3245 = vpop.f32.mrb[0].mxu0
    %v3246 = vpop.f32.mrb[0].mxu0
    %v3247 = vadd.f32 0.0, %v3246
    %v3248 = vpop.f32.mrb[0].mxu0
    %3249 = vmatprep.mubr.bf16.mxu0 0
    %3250 = vmatmul.mubr.bf16.gmra.mrb[0].mxu0 %v3191
    %v3251 = vpop.f32.mrb[0].mxu0
    %v3252 = vadd.f32 0.0, %v3251
    %v3253 = vpop.f32.mrb[0].mxu0
    %v3254 = vpop.f32.mrb[0].mxu0
    %v3255 = vpop.f32.mrb[0].mxu0
    %3256 = vdwg.mxu0
    %v3257 = vld [vmem:[#allocation8 + $0x374] sm:$0xf]
    %v3258 = vld [vmem:[#allocation8 + $0x378] sm:$0xf]
    %v3259 = vld [vmem:[#allocation8 + $0x37c] sm:$0xf]
    %v3260 = vld [vmem:[#allocation8 + $0x380] sm:$0xf]
    %v3261 = vld [vmem:[#allocation8 + $0x384] sm:$0xf]
    %v3262 = vld [vmem:[#allocation8 + $0x388] sm:$0xf]
    %v3263 = vld [vmem:[#allocation8 + $0x38c] sm:$0xf]
    %v3271 = vunpack.c.l.b16 %v3257
    %v3272 = vunpack.c.l.b16 %v3258
    %v3273 = vunpack.c.l.b16 %v3259
    %v3274 = vunpack.c.l.b16 %v3260
    %v3275 = vunpack.c.l.b16 %v3261
    %v3276 = vunpack.c.l.b16 %v3262
    %v3277 = vunpack.c.l.b16 %v3263
    %v3278 = vpack.c.b16 %v3272, %v3271
    %v3279 = vpack.c.b16 %v3274, %v3273
    %v3280 = vpack.c.b16 %v3276, %v3275
    %v3281 = vpack.c.b16 %v3277, %v3277
    %v3283 = vsel %vm2975, %v3278, 0
    %v3286 = vsel %vm2975, %v3279, 0
    %v3289 = vsel %vm2975, %v3280, 0
    %v3292 = vsel %vm2975, %v3281, 0
    %3294 = vmatprep.subr.bf16.mxu0 0
    %3295 = vmatpush1.bf16.msra.mxu0 %v2948
    %3296 = vmatprep.subr.bf16.mxu0 0
    %3297 = vmatpush1.bf16.msra.mxu0 %v2989
    %3298 = vmatprep.subr.bf16.mxu0 0
    %3299 = vmatpush1.bf16.msra.mxu0 0
    %3300 = vmatprep.subr.bf16.mxu0 0
    %3301 = vmatpush1.bf16.msra.mxu0 0
    %3302 = vmatprep.subr.bf16.mxu0 0
    %3303 = vmatpush1.bf16.msra.mxu0 0
    %3304 = vmatprep.subr.bf16.mxu0 0
    %3305 = vmatpush1.bf16.msra.mxu0 0
    %3306 = vmatprep.subr.bf16.mxu0 0
    %3307 = vmatpush1.bf16.msra.mxu0 0
    %3308 = vmatprep.subr.bf16.mxu0 0
    %3309 = vmatpush1.bf16.msra.mxu0 0
    %3310 = vmatprep.subr.bf16.mxu0 0
    %3311 = vmatpush1.bf16.msra.mxu0 0
    %3312 = vmatprep.subr.bf16.mxu0 0
    %3313 = vmatpush1.bf16.msra.mxu0 0
    %3314 = vmatprep.subr.bf16.mxu0 0
    %3315 = vmatpush1.bf16.msra.mxu0 0
    %3316 = vmatprep.subr.bf16.mxu0 0
    %3317 = vmatpush1.bf16.msra.mxu0 0
    %3318 = vmatprep.subr.bf16.mxu0 0
    %3319 = vmatpush1.bf16.msra.mxu0 0
    %3320 = vmatprep.subr.bf16.mxu0 0
    %3321 = vmatpush1.bf16.msra.mxu0 0
    %3322 = vmatprep.subr.bf16.mxu0 0
    %3323 = vmatpush1.bf16.msra.mxu0 0
    %3324 = vmatprep.subr.bf16.mxu0 0
    %3325 = vmatpush1.bf16.msra.mxu0 0
    %3326 = vmatprep.mubr.bf16.mxu0 0
    %3327 = vmatmul.mubr.bf16.gmra.mrb[0].mxu0 %v3283
    %v3328 = vpop.f32.mrb[0].mxu0
    %v3329 = vadd.f32 0.0, %v3328
    %v3330 = vpop.f32.mrb[0].mxu0
    %v3331 = vpop.f32.mrb[0].mxu0
    %v3332 = vadd.f32 0.0, %v3331
    %v3333 = vpop.f32.mrb[0].mxu0
    %3334 = vmatprep.mubr.bf16.mxu0 0
    %3335 = vmatmul.mubr.bf16.gmra.mrb[0].mxu0 %v3286
    %v3336 = vpop.f32.mrb[0].mxu0
    %v3337 = vadd.f32 0.0, %v3336
    %v3338 = vpop.f32.mrb[0].mxu0
    %v3339 = vpop.f32.mrb[0].mxu0
    %v3340 = vadd.f32 0.0, %v3339
    %v3341 = vpop.f32.mrb[0].mxu0
    %3342 = vmatprep.mubr.bf16.mxu0 0
    %3343 = vmatmul.mubr.bf16.gmra.mrb[0].mxu0 %v3289
    %v3344 = vpop.f32.mrb[0].mxu0
    %v3345 = vadd.f32 0.0, %v3344
    %v3346 = vpop.f32.mrb[0].mxu0
    %v3347 = vpop.f32.mrb[0].mxu0
    %v3348 = vadd.f32 0.0, %v3347
    %v3349 = vpop.f32.mrb[0].mxu0
    %3350 = vmatprep.mubr.bf16.mxu0 0
    %3351 = vmatmul.mubr.bf16.gmra.mrb[0].mxu0 %v3292
    %v3352 = vpop.f32.mrb[0].mxu0
    %v3353 = vadd.f32 0.0, %v3352
    %v3354 = vpop.f32.mrb[0].mxu0
    %v3355 = vpop.f32.mrb[0].mxu0
    %v3356 = vpop.f32.mrb[0].mxu0
    %3357 = vdwg.mxu0
    %v3358 = vpack.c.bf16 %v3029, %v3026
    %v3359 = vpack.c.bf16 %v3130, %v3127
    %v3360 = vpack.c.bf16 %v3231, %v3228
    %v3361 = vpack.c.bf16 %v3332, %v3329
    %v3362 = vpack.c.bf16 %v3037, %v3034
    %v3363 = vpack.c.bf16 %v3138, %v3135
    %v3364 = vpack.c.bf16 %v3239, %v3236
    %v3365 = vpack.c.bf16 %v3340, %v3337
    %v3366 = vpack.c.bf16 %v3045, %v3042
    %v3367 = vpack.c.bf16 %v3146, %v3143
    %v3368 = vpack.c.bf16 %v3247, %v3244
    %v3369 = vpack.c.bf16 %v3348, %v3345
    %v3370 = vpack.c.bf16 %v3050, %v3050
    %v3371 = vpack.c.bf16 %v3151, %v3151
    %v3372 = vpack.c.bf16 %v3252, %v3252
    %v3373 = vpack.c.bf16 %v3353, %v3353
    %v3374 = vld [vmem:[#allocation8 + $0x1c8] sm:$0xf]
    %v3375 = vld [vmem:[#allocation8 + $0x1cc] sm:$0xf]
    %v3376 = vld [vmem:[#allocation8 + $0x1d0] sm:$0xf]
    %v3377 = vld [vmem:[#allocation8 + $0x1d4] sm:$0xf]
    %v3378 = vld [vmem:[#allocation8 + $0x1d8] sm:$0xf]
    %v3379 = vld [vmem:[#allocation8 + $0x1dc] sm:$0xf]
    %v3380 = vld [vmem:[#allocation8 + $0x1e0] sm:$0xf]
    %v3381 = vld [vmem:[#allocation8 + $0x1e4] sm:$0xf]
    %v3382 = vld [vmem:[#allocation8 + $0x1e8] sm:$0xf]
    %v3383 = vld [vmem:[#allocation8 + $0x1ec] sm:$0xf]
    %v3384 = vld [vmem:[#allocation8 + $0x1f0] sm:$0xf]
    %v3385 = vld [vmem:[#allocation8 + $0x1f4] sm:$0xf]
    %v3386 = vld [vmem:[#allocation8 + $0x1f8] sm:$0xf]
    %v3387 = vld [vmem:[#allocation8 + $0x1fc] sm:$0xf]
    %v3388 = vld [vmem:[#allocation8 + $0x200] sm:$0xf]
    %v3389 = vld [vmem:[#allocation8 + $0x204] sm:$0xf]
    %v3390 = vld [vmem:[#allocation8 + $0x208] sm:$0xf]
    %v3391 = vld [vmem:[#allocation8 + $0x20c] sm:$0xf]
    %v3392 = vld [vmem:[#allocation8 + $0x210] sm:$0xf]
    %v3393 = vld [vmem:[#allocation8 + $0x214] sm:$0xf]
    %v3394 = vld [vmem:[#allocation8 + $0x218] sm:$0xf]
    %v3395 = vld [vmem:[#allocation8 + $0x21c] sm:$0xf]
    %v3396 = vld [vmem:[#allocation8 + $0x220] sm:$0xf]
    %v3397 = vld [vmem:[#allocation8 + $0x224] sm:$0xf]
    %v3398 = vld [vmem:[#allocation8 + $0x228] sm:$0xf]
    %v3399 = vld [vmem:[#allocation8 + $0x22c] sm:$0xf]
    %v3400 = vld [vmem:[#allocation8 + $0x230] sm:$0xf]
    %v3401 = vld [vmem:[#allocation8 + $0x234] sm:$0xf]
    %v3402 = vld [vmem:[#allocation8 + $0x238] sm:$0xf]
    %v3403 = vld [vmem:[#allocation8 + $0x23c] sm:$0xf]
    %v3404 = vld [vmem:[#allocation8 + $0x240] sm:$0xf]
    %v3405 = vld [vmem:[#allocation8 + $0x244] sm:$0xf]
    %v3406 = vld [vmem:[#allocation8 + $0x248] sm:$0xf]
    %v3407 = vld [vmem:[#allocation8 + $0x24c] sm:$0xf]
    %v3408 = vld [vmem:[#allocation8 + $0x250] sm:$0xf]
    %v3409 = vld [vmem:[#allocation8 + $0x254] sm:$0xf]
    %v3410 = vld [vmem:[#allocation8 + $0x258] sm:$0xf]
    %v3411 = vld [vmem:[#allocation8 + $0x25c] sm:$0xf]
    %v3412 = vld [vmem:[#allocation8 + $0x260] sm:$0xf]
    %v3413 = vld [vmem:[#allocation8 + $0x264] sm:$0xf]
    %v3414 = vld [vmem:[#allocation8 + $0x268] sm:$0xf]
    %v3415 = vld [vmem:[#allocation8 + $0x26c] sm:$0xf]
    %v3416 = vld [vmem:[#allocation8 + $0x270] sm:$0xf]
    %v3417 = vld [vmem:[#allocation8 + $0x274] sm:$0xf]
    %v3418 = vld [vmem:[#allocation8 + $0x278] sm:$0xf]
    %v3419 = vld [vmem:[#allocation8 + $0x27c] sm:$0xf]
    %v3420 = vld [vmem:[#allocation8 + $0x280] sm:$0xf]
    %v3421 = vld [vmem:[#allocation8 + $0x284] sm:$0xf]
    %v3422 = vld [vmem:[#allocation8 + $0x288] sm:$0xf]
    %v3423 = vld [vmem:[#allocation8 + $0x28c] sm:$0xf]
    %v3424 = vld [vmem:[#allocation8 + $0x290] sm:$0xf]
    %v3425 = vld [vmem:[#allocation8 + $0x294] sm:$0xf]
    %v3426 = vld [vmem:[#allocation8 + $0x298] sm:$0xf]
    %v3427 = vld [vmem:[#allocation8 + $0x29c] sm:$0xf]
    %v3428 = vld [vmem:[#allocation8 + $0x2a0] sm:$0xf]
    %v3429 = vld [vmem:[#allocation8 + $0x2a4] sm:$0xf]
    %v3430 = vld [vmem:[#allocation8 + $0x2a8] sm:$0xf]
    %v3431 = vld [vmem:[#allocation8 + $0x2ac] sm:$0xf]
    %v3432 = vld [vmem:[#allocation8 + $0x2b0] sm:$0xf]
    %v3433 = vld [vmem:[#allocation8 + $0x2b4] sm:$0xf]
    %v3434 = vld [vmem:[#allocation8 + $0x2b8] sm:$0xf]
    %v3435 = vld [vmem:[#allocation8 + $0x2bc] sm:$0xf]
    %v3436 = vld [vmem:[#allocation8 + $0x2c0] sm:$0xf]
    %v3437 = vld [vmem:[#allocation8 + $0x2c4] sm:$0xf]
    %v3502 = vunpack.c.l.b16 %v3374
    %v3503 = vunpack.c.l.b16 %v3375
    %v3504 = vunpack.c.l.b16 %v3376
    %v3505 = vunpack.c.l.b16 %v3377
    %v3506 = vunpack.c.l.b16 %v3378
    %v3507 = vunpack.c.l.b16 %v3379
    %v3508 = vunpack.c.l.b16 %v3380
    %v3509 = vunpack.c.l.b16 %v3381
    %v3510 = vunpack.c.l.b16 %v3382
    %v3511 = vunpack.c.l.b16 %v3383
    %v3512 = vunpack.c.l.b16 %v3384
    %v3513 = vunpack.c.l.b16 %v3385
    %v3514 = vunpack.c.l.b16 %v3386
    %v3515 = vunpack.c.l.b16 %v3387
    %v3516 = vunpack.c.l.b16 %v3388
    %v3517 = vunpack.c.l.b16 %v3389
    %v3518 = vunpack.c.l.b16 %v3390
    %v3519 = vunpack.c.l.b16 %v3391
    %v3520 = vunpack.c.l.b16 %v3392
    %v3521 = vunpack.c.l.b16 %v3393
    %v3522 = vunpack.c.l.b16 %v3394
    %v3523 = vunpack.c.l.b16 %v3395
    %v3524 = vunpack.c.l.b16 %v3396
    %v3525 = vunpack.c.l.b16 %v3397
    %v3526 = vunpack.c.l.b16 %v3398
    %v3527 = vunpack.c.l.b16 %v3399
    %v3528 = vunpack.c.l.b16 %v3400
    %v3529 = vunpack.c.l.b16 %v3401
    %v3530 = vunpack.c.l.b16 %v3402
    %v3531 = vunpack.c.l.b16 %v3403
    %v3532 = vunpack.c.l.b16 %v3404
    %v3533 = vunpack.c.l.b16 %v3405
    %v3534 = vunpack.c.l.b16 %v3406
    %v3535 = vunpack.c.l.b16 %v3407
    %v3536 = vunpack.c.l.b16 %v3408
    %v3537 = vunpack.c.l.b16 %v3409
    %v3538 = vunpack.c.l.b16 %v3410
    %v3539 = vunpack.c.l.b16 %v3411
    %v3540 = vunpack.c.l.b16 %v3412
    %v3541 = vunpack.c.l.b16 %v3413
    %v3542 = vunpack.c.l.b16 %v3414
    %v3543 = vunpack.c.l.b16 %v3415
    %v3544 = vunpack.c.l.b16 %v3416
    %v3545 = vunpack.c.l.b16 %v3417
    %v3546 = vunpack.c.l.b16 %v3418
    %v3547 = vunpack.c.l.b16 %v3419
    %v3548 = vunpack.c.l.b16 %v3420
    %v3549 = vunpack.c.l.b16 %v3421
    %v3550 = vunpack.c.l.b16 %v3422
    %v3551 = vunpack.c.l.b16 %v3423
    %v3552 = vunpack.c.l.b16 %v3424
    %v3553 = vunpack.c.l.b16 %v3425
    %v3554 = vunpack.c.l.b16 %v3426
    %v3555 = vunpack.c.l.b16 %v3427
    %v3556 = vunpack.c.l.b16 %v3428
    %v3557 = vunpack.c.l.b16 %v3429
    %v3558 = vunpack.c.l.b16 %v3430
    %v3559 = vunpack.c.l.b16 %v3431
    %v3560 = vunpack.c.l.b16 %v3432
    %v3561 = vunpack.c.l.b16 %v3433
    %v3562 = vunpack.c.l.b16 %v3434
    %v3563 = vunpack.c.l.b16 %v3435
    %v3564 = vunpack.c.l.b16 %v3436
    %v3565 = vunpack.c.l.b16 %v3437
    %v3566 = vpack.c.b16 %v3503, %v3502
    %v3567 = vpack.c.b16 %v3505, %v3504
    %v3568 = vpack.c.b16 %v3507, %v3506
    %v3569 = vpack.c.b16 %v3509, %v3508
    %v3570 = vpack.c.b16 %v3511, %v3510
    %v3571 = vpack.c.b16 %v3513, %v3512
    %v3572 = vpack.c.b16 %v3515, %v3514
    %v3573 = vpack.c.b16 %v3517, %v3516
    %v3574 = vpack.c.b16 %v3519, %v3518
    %v3575 = vpack.c.b16 %v3521, %v3520
    %v3576 = vpack.c.b16 %v3523, %v3522
    %v3577 = vpack.c.b16 %v3525, %v3524
    %v3578 = vpack.c.b16 %v3527, %v3526
    %v3579 = vpack.c.b16 %v3529, %v3528
    %v3580 = vpack.c.b16 %v3531, %v3530
    %v3581 = vpack.c.b16 %v3533, %v3532
    %v3582 = vpack.c.b16 %v3535, %v3534
    %v3583 = vpack.c.b16 %v3537, %v3536
    %v3584 = vpack.c.b16 %v3539, %v3538
    %v3585 = vpack.c.b16 %v3541, %v3540
    %v3586 = vpack.c.b16 %v3543, %v3542
    %v3587 = vpack.c.b16 %v3545, %v3544
    %v3588 = vpack.c.b16 %v3547, %v3546
    %v3589 = vpack.c.b16 %v3549, %v3548
    %v3590 = vpack.c.b16 %v3551, %v3550
    %v3591 = vpack.c.b16 %v3553, %v3552
    %v3592 = vpack.c.b16 %v3555, %v3554
    %v3593 = vpack.c.b16 %v3557, %v3556
    %v3594 = vpack.c.b16 %v3559, %v3558
    %v3595 = vpack.c.b16 %v3561, %v3560
    %v3596 = vpack.c.b16 %v3563, %v3562
    %v3597 = vpack.c.b16 %v3565, %v3564
    %3630 = vmatprep.subr.bf16.mxu0 0
    %3631 = vmatpush1.bf16.msra.mxu0 %v3566
    %3632 = vmatprep.subr.bf16.mxu0 0
    %3633 = vmatpush1.bf16.msra.mxu0 %v3567
    %3634 = vmatprep.subr.bf16.mxu0 0
    %3635 = vmatpush1.bf16.msra.mxu0 %v3568
    %3636 = vmatprep.subr.bf16.mxu0 0
    %3637 = vmatpush1.bf16.msra.mxu0 %v3569
    %3638 = vmatprep.subr.bf16.mxu0 0
    %3639 = vmatpush1.bf16.msra.mxu0 %v3570
    %3640 = vmatprep.subr.bf16.mxu0 0
    %3641 = vmatpush1.bf16.msra.mxu0 %v3571
    %3642 = vmatprep.subr.bf16.mxu0 0
    %3643 = vmatpush1.bf16.msra.mxu0 %v3572
    %3644 = vmatprep.subr.bf16.mxu0 0
    %3645 = vmatpush1.bf16.msra.mxu0 %v3573
    %3646 = vmatprep.subr.bf16.mxu0 0
    %3647 = vmatpush1.bf16.msra.mxu0 %v3574
    %3648 = vmatprep.subr.bf16.mxu0 0
    %3649 = vmatpush1.bf16.msra.mxu0 %v3575
    %3650 = vmatprep.subr.bf16.mxu0 0
    %3651 = vmatpush1.bf16.msra.mxu0 %v3576
    %3652 = vmatprep.subr.bf16.mxu0 0
    %3653 = vmatpush1.bf16.msra.mxu0 %v3577
    %3654 = vmatprep.subr.bf16.mxu0 0
    %3655 = vmatpush1.bf16.msra.mxu0 %v3578
    %3656 = vmatprep.subr.bf16.mxu0 0
    %3657 = vmatpush1.bf16.msra.mxu0 %v3579
    %3658 = vmatprep.subr.bf16.mxu0 0
    %3659 = vmatpush1.bf16.msra.mxu0 %v3580
    %3660 = vmatprep.subr.bf16.mxu0 0
    %3661 = vmatpush1.bf16.msra.mxu0 %v3581
    %3662 = vmatprep.mubr.bf16.mxu0 %v3359
    %3663 = vmatmul.mubr.bf16.gmra.mrb[0].mxu0 %v3358
    %v3664 = vpop.f32.mrb[0].mxu0
    %v3665 = vadd.f32 0.0, %v3664
    %v3666 = vpop.f32.mrb[0].mxu0
    %v3667 = vpop.f32.mrb[0].mxu0
    %v3668 = vadd.f32 0.0, %v3667
    %v3669 = vpop.f32.mrb[0].mxu0
    %3670 = vmatprep.mubr.bf16.mxu0 %v3363
    %3671 = vmatmul.mubr.bf16.gmra.mrb[0].mxu0 %v3362
    %v3672 = vpop.f32.mrb[0].mxu0
    %v3673 = vadd.f32 0.0, %v3672
    %v3674 = vpop.f32.mrb[0].mxu0
    %v3675 = vpop.f32.mrb[0].mxu0
    %v3676 = vadd.f32 0.0, %v3675
    %v3677 = vpop.f32.mrb[0].mxu0
    %3678 = vmatprep.mubr.bf16.mxu0 %v3367
    %3679 = vmatmul.mubr.bf16.gmra.mrb[0].mxu0 %v3366
    %v3680 = vpop.f32.mrb[0].mxu0
    %v3681 = vadd.f32 0.0, %v3680
    %v3682 = vpop.f32.mrb[0].mxu0
    %v3683 = vpop.f32.mrb[0].mxu0
    %v3684 = vadd.f32 0.0, %v3683
    %v3685 = vpop.f32.mrb[0].mxu0
    %3686 = vmatprep.mubr.bf16.mxu0 %v3371
    %3687 = vmatmul.mubr.bf16.gmra.mrb[0].mxu0 %v3370
    %v3688 = vpop.f32.mrb[0].mxu0
    %v3689 = vadd.f32 0.0, %v3688
    %v3690 = vpop.f32.mrb[0].mxu0
    %v3691 = vpop.f32.mrb[0].mxu0
    %v3692 = vpop.f32.mrb[0].mxu0
    %3693 = vdwg.mxu0
    %3694 = vmatprep.subr.bf16.mxu0 0
    %3695 = vmatpush1.bf16.msra.mxu0 %v3582
    %3696 = vmatprep.subr.bf16.mxu0 0
    %3697 = vmatpush1.bf16.msra.mxu0 %v3583
    %3698 = vmatprep.subr.bf16.mxu0 0
    %3699 = vmatpush1.bf16.msra.mxu0 %v3584
    %3700 = vmatprep.subr.bf16.mxu0 0
    %3701 = vmatpush1.bf16.msra.mxu0 %v3585
    %3702 = vmatprep.subr.bf16.mxu0 0
    %3703 = vmatpush1.bf16.msra.mxu0 %v3586
    %3704 = vmatprep.subr.bf16.mxu0 0
    %3705 = vmatpush1.bf16.msra.mxu0 %v3587
    %3706 = vmatprep.subr.bf16.mxu0 0
    %3707 = vmatpush1.bf16.msra.mxu0 %v3588
    %3708 = vmatprep.subr.bf16.mxu0 0
    %3709 = vmatpush1.bf16.msra.mxu0 %v3589
    %3710 = vmatprep.subr.bf16.mxu0 0
    %3711 = vmatpush1.bf16.msra.mxu0 %v3590
    %3712 = vmatprep.subr.bf16.mxu0 0
    %3713 = vmatpush1.bf16.msra.mxu0 %v3591
    %3714 = vmatprep.subr.bf16.mxu0 0
    %3715 = vmatpush1.bf16.msra.mxu0 %v3592
    %3716 = vmatprep.subr.bf16.mxu0 0
    %3717 = vmatpush1.bf16.msra.mxu0 %v3593
    %3718 = vmatprep.subr.bf16.mxu0 0
    %3719 = vmatpush1.bf16.msra.mxu0 %v3594
    %3720 = vmatprep.subr.bf16.mxu0 0
    %3721 = vmatpush1.bf16.msra.mxu0 %v3595
    %3722 = vmatprep.subr.bf16.mxu0 0
    %3723 = vmatpush1.bf16.msra.mxu0 %v3596
    %3724 = vmatprep.subr.bf16.mxu0 0
    %3725 = vmatpush1.bf16.msra.mxu0 %v3597
    %3726 = vmatprep.mubr.bf16.mxu0 %v3361
    %3727 = vmatmul.mubr.bf16.gmra.mrb[0].mxu0 %v3360
    %v3728 = vpop.f32.mrb[0].mxu0
    %v3729 = vadd.f32 %v3665, %v3728
    %v3730 = vpop.f32.mrb[0].mxu0
    %v3731 = vpop.f32.mrb[0].mxu0
    %v3732 = vadd.f32 %v3668, %v3731
    %v3733 = vpop.f32.mrb[0].mxu0
    %3734 = vmatprep.mubr.bf16.mxu0 %v3365
    %3735 = vmatmul.mubr.bf16.gmra.mrb[0].mxu0 %v3364
    %v3736 = vpop.f32.mrb[0].mxu0
    %v3737 = vadd.f32 %v3673, %v3736
    %v3738 = vpop.f32.mrb[0].mxu0
    %v3739 = vpop.f32.mrb[0].mxu0
    %v3740 = vadd.f32 %v3676, %v3739
    %v3741 = vpop.f32.mrb[0].mxu0
    %3742 = vmatprep.mubr.bf16.mxu0 %v3369
    %3743 = vmatmul.mubr.bf16.gmra.mrb[0].mxu0 %v3368
    %v3744 = vpop.f32.mrb[0].mxu0
    %v3745 = vadd.f32 %v3681, %v3744
    %v3746 = vpop.f32.mrb[0].mxu0
    %v3747 = vpop.f32.mrb[0].mxu0
    %v3748 = vadd.f32 %v3684, %v3747
    %v3749 = vpop.f32.mrb[0].mxu0
    %3750 = vmatprep.mubr.bf16.mxu0 %v3373
    %3751 = vmatmul.mubr.bf16.gmra.mrb[0].mxu0 %v3372
    %v3752 = vpop.f32.mrb[0].mxu0
    %v3753 = vadd.f32 %v3689, %v3752
    %v3754 = vpop.f32.mrb[0].mxu0
    %v3755 = vpop.f32.mrb[0].mxu0
    %v3756 = vpop.f32.mrb[0].mxu0
    %3757 = vdwg.mxu0
    %v3758 = vlaneseq
    %v3759 = vshrl.u32 %v3758, 7
    %v3760 = vsub.s32 0, %v3759
    %v3761 = vrot.slane %v79, %v3760
    %v3762 = vadd.f32 %v3729, %v3761
    %v3763 = vadd.f32 %v3732, %v3761
    %v3764 = vadd.f32 %v3737, %v3761
    %v3765 = vadd.f32 %v3740, %v3761
    %v3766 = vadd.f32 %v3745, %v3761
    %v3767 = vadd.f32 %v3748, %v3761
    %v3768 = vadd.f32 %v3753, %v3761
    %3769 = vst.msk [vmem:[#allocation10] sm:$0xff] %vm2975, %v3762
    %3770 = vst.msk [vmem:[#allocation10 + $0x8] sm:$0xff] %vm2975, %v3763
    %3771 = vst.msk [vmem:[#allocation10 + $0x10] sm:$0xff] %vm2975, %v3764
    %3772 = vst.msk [vmem:[#allocation10 + $0x18] sm:$0xff] %vm2975, %v3765
    %3773 = vst.msk [vmem:[#allocation10 + $0x20] sm:$0xff] %vm2975, %v3766
    %3774 = vst.msk [vmem:[#allocation10 + $0x28] sm:$0xff] %vm2975, %v3767
    %3775 = vst.msk [vmem:[#allocation10 + $0x30] sm:$0xff] %vm2975, %v3768
    // Predicated region
    $region34: #{decoder_forward.1} parent=1 // pred_check
      _
    $region35: #{decoder_forward.1} parent=1 // pred_check_branch
      %3777 = sbr.rel (0) target = $region37
    $region36: #{decoder_forward.1} parent=1 // pred_region
      %s3779 = ssub.s32 896, 896
      %3780 = vsyncadd [#allocation4], %s3779
      %s3781 = sshll.u32 [#allocation10], 4
      %s3782 = int_to_ptr.vmem [resolvable:$true] %s3781
      %3787 = dma.vmem_to_hbm [thread:$0]  %s3782, 896, %s4, [#allocation4], 128, 128, 8
    $region37: #{decoder_forward.1} parent=1 // pred_fallthru
      _
    // Predicated region
    $region38: #{decoder_forward.1} parent=1 // pred_check
      _
    $region39: #{decoder_forward.1} parent=1 // pred_check_branch
      %3789 = sbr.rel (0) target = $region41
    $region40: #{decoder_forward.1} parent=1 // pred_region
      %3790 = dma.done [#allocation4], 896
    $region41: #{decoder_forward.1} parent=1 // pred_fallthru
      _
    %3791 = vsyncpa [#allocation3], 1
    %3792 = vsyncpa [#allocation6], 1
    %3793 = vsyncpa [#allocation9], 1
    %3794 = vsyncpa [#allocation4], 1

</llo_original>
